<compile_context>
chip_gen: v6e
topology: v6e:2x2x1
jax: 0.10.0
libtpu: 0.0.40
codegen_flags: <defaults>
</compile_context>

<pallas_src>
import functools

import jax
import jax.numpy as jnp
import numpy as np
from jax.experimental import pallas as pl
from jax.experimental.pallas import tpu as pltpu


# ------------------------------- fused kernel ------------------------------- #

def _fused_ir_kernel(*refs, stride, th, wout, w_in, wp, slab, expand, use_res):
    """One grid step = (one batch element, one tile of `th` output rows).

    Everything stays in VMEM; only the final oup-channel tile is written to HBM:
      1) 1x1 expand (MXU, bf16 in / f32 acc) + folded-BN bias + ReLU6 + pad mask
         -> VMEM scratch ex_ref
      2) 3x3 depthwise (VPU, f32) + bias + ReLU6, row by row, reading shifted
         windows from ex_ref with pl.ds -> VMEM scratch dw_ref
      3) single 1x1 projection matmul over the whole tile (MXU, bf16/f32)
         + bias (+ residual) -> o_ref
    """
    if expand:
        (x_ref, mask_ref, w_e_ref, b1_ref,
         w_dw_ref, b2_ref, w_p_ref, b3_ref, o_ref, ex_ref, dw_ref) = refs
    else:
        (x_ref, w_dw_ref, b2_ref, w_p_ref, b3_ref, o_ref, ex_ref, dw_ref) = refs

    t = pl.program_id(1)
    step_flat = th * stride * wp               # flattened padded rows per tile
    flat0 = t * step_flat                      # first flattened row of this slab
    if step_flat % 8 == 0:
        flat0 = pl.multiple_of(flat0, 8)

    # ---- 1x1 expansion conv over the whole row slab needed by this tile ----
    x_slab = x_ref[pl.ds(flat0, slab), :]                       # (slab, Cin) bf16
    if expand:
        y = jnp.dot(x_slab, w_e_ref[...], preferred_element_type=jnp.float32)
        y = jnp.clip(y + b1_ref[...], 0.0, 6.0)
        # The reference pads AFTER the expansion, so relu6(bias) at padded
        # positions must be forced back to exactly zero for the dw conv.
        y = y * mask_ref[pl.ds(flat0, slab), :]
    else:
        y = x_slab.astype(jnp.float32)                          # already zero-padded
    ex_ref[...] = y                                             # (slab, hidden) f32

    hid = w_dw_ref.shape[-1]

    # ---- depthwise 3x3 + bias + ReLU6, one output row at a time ----
    for r in range(th):
        acc = jnp.zeros((wout, hid), jnp.float32)
        for di in range(3):
            row_base = (r * stride + di) * wp
            for dj in range(3):
                if stride == 1:
                    win = ex_ref[pl.ds(row_base + dj, wout), :]
                else:
                    win = ex_ref[pl.ds(row_base + dj, wout, stride), :]
                acc = acc + win * w_dw_ref[di, dj, :]
        dw_ref[pl.ds(r * wout, wout), :] = jnp.clip(acc + b2_ref[...], 0.0, 6.0)

    # ---- 1x1 projection: ONE matmul over all th*wout rows of this tile ----
    p = jnp.dot(dw_ref[...].astype(jnp.bfloat16), w_p_ref[...],
                preferred_element_type=jnp.float32)
    p = p + b3_ref[...]                                          # (th*wout, oup)

    for r in range(th):
        row = p[r * wout:(r + 1) * wout, :]
        if use_res:
            # Residual row comes from the already-loaded input slab (stride==1).
            beg = (r + 1) * wp + 1
            row = row + x_slab[beg:beg + w_in, :].astype(jnp.float32)
        o_ref[r, :, :] = row


# ------------------------------ parameters ---------------------------------- #

def _bn_params(key, c):
    k1, k2, k3, k4 = jax.random.split(key, 4)
    gamma = jax.random.uniform(k1, (c,), jnp.float32, 0.5, 1.5)
    beta = 0.1 * jax.random.normal(k2, (c,), jnp.float32)
    mean = 0.1 * jax.random.normal(k3, (c,), jnp.float32)
    var = jax.random.uniform(k4, (c,), jnp.float32, 0.5, 1.5)
    return gamma, beta, mean, var


def make_params(key, inp, oup, expand_ratio):
    """Raw weights + BatchNorm statistics (PyTorch-equivalent, eval mode)."""
    hidden = int(round(inp * expand_ratio))
    ks = jax.random.split(key, 6)
    p = {"hidden": hidden}
    if expand_ratio != 1:
        p["w_expand"] = 0.2 * jax.random.normal(ks[0], (inp, hidden), jnp.float32)
        p["bn1"] = _bn_params(ks[1], hidden)
    p["w_dw"] = 0.2 * jax.random.normal(ks[2], (3, 3, hidden), jnp.float32)
    p["bn2"] = _bn_params(ks[3], hidden)
    p["w_proj"] = 0.2 * jax.random.normal(ks[4], (hidden, oup), jnp.float32)
    p["bn3"] = _bn_params(ks[5], oup)
    return p


def _fold_bn(gamma, beta, mean, var, eps=1e-5):
    scale = gamma / jnp.sqrt(var + eps)
    return scale, beta - mean * scale


def _fold_params_for_kernel(params, expand):
    """Fold BN scale into the conv weights; cast MXU operands to bf16."""
    kp = {}
    if expand:
        s1, b1 = _fold_bn(*params["bn1"])
        kp["w_expand"] = (params["w_expand"] * s1[None, :]).astype(jnp.bfloat16)
        kp["b1"] = b1[None, :].astype(jnp.float32)
    s2, b2 = _fold_bn(*params["bn2"])
    kp["w_dw"] = (params["w_dw"] * s2[None, None, :]).astype(jnp.float32)
    kp["b2"] = b2[None, :].astype(jnp.float32)
    s3, b3 = _fold_bn(*params["bn3"])
    kp["w_proj"] = (params["w_proj"] * s3[None, :]).astype(jnp.bfloat16)
    kp["b3"] = b3[None, :].astype(jnp.float32)
    return kp


def _pick_row_tile(hout):
    for cand in (8, 4, 2, 1):
        if hout % cand == 0:
            return cand
    return 1


# --------------------------------- wrapper ----------------------------------- #

def inverted_residual(x_nchw, params, *, inp, oup, stride, expand_ratio):
    """Forward pass of InvertedResidual. Input/output are NCHW like PyTorch."""
    assert stride in (1, 2)
    hidden = params["hidden"]
    expand = expand_ratio != 1
    use_res = (stride == 1) and (inp == oup)

    n, c, h, w = x_nchw.shape
    assert c == inp
    if not expand:
        assert hidden == inp

    hout = (h + 2 - 3) // stride + 1
    wout = (w + 2 - 3) // stride + 1
    hp, wp = h + 2, w + 2

    kp = _fold_params_for_kernel(params, expand)

    # NCHW -> NHWC, zero-pad H/W by 1 (halo for the 3x3 dw conv), flatten the
    # padded spatial dims, cast activations to bf16 for DMA / MXU.
    x = jnp.transpose(x_nchw, (0, 2, 3, 1)).astype(jnp.float32)
    x_pad = jnp.pad(x, ((0, 0), (1, 1), (1, 1), (0, 0)))
    x_flat = x_pad.reshape(n, hp * wp, inp)

    th = _pick_row_tile(hout)                      # output rows per grid step
    slab = (stride * (th - 1) + 3) * wp            # padded-input rows * wp per step
    slab_r = -(-slab // 8) * 8                     # round read size up to 8 rows
    pad_tail = slab_r - slab
    flat_len = hp * wp + pad_tail

    x_flat = jnp.pad(x_flat, ((0, 0), (0, pad_tail), (0, 0))).astype(jnp.bfloat16)

    kern = functools.partial(
        _fused_ir_kernel, stride=stride, th=th, wout=wout, w_in=w, wp=wp,
        slab=slab_r, expand=expand, use_res=use_res)

    const2 = lambda i, j: (0, 0)
    const3 = lambda i, j: (0, 0, 0)

    in_specs = [pl.BlockSpec((None, flat_len, inp), lambda i, j: (i, 0, 0))]
    args = [x_flat]
    if expand:
        # Validity mask: 1 inside the image, 0 on the zero-padding ring.
        rr = jnp.arange(hp)
        cc = jnp.arange(wp)
        valid = ((rr >= 1) & (rr <= h))[:, None] & ((cc >= 1) & (cc <= w))[None, :]
        mask = valid.astype(jnp.float32).reshape(hp * wp, 1)
        mask = jnp.pad(mask, ((0, pad_tail), (0, 0)))
        in_specs += [pl.BlockSpec((flat_len, 1), const2),
                     pl.BlockSpec((inp, hidden), const2),
                     pl.BlockSpec((1, hidden), const2)]
        args += [mask, kp["w_expand"], kp["b1"]]
    in_specs += [pl.BlockSpec((3, 3, hidden), const3),
                 pl.BlockSpec((1, hidden), const2),
                 pl.BlockSpec((hidden, oup), const2),
                 pl.BlockSpec((1, oup), const2)]
    args += [kp["w_dw"], kp["b2"], kp["w_proj"], kp["b3"]]

    out_nhwc = pl.pallas_call(
        kern,
        out_shape=jax.ShapeDtypeStruct((n, hout, wout, oup), jnp.float32),
        grid=(n, hout // th),
        in_specs=in_specs,
        out_specs=pl.BlockSpec((None, th, wout, oup), lambda i, j: (i, j, 0, 0)),
        scratch_shapes=[pltpu.VMEM((slab_r, hidden), jnp.float32),
                        pltpu.VMEM((th * wout, hidden), jnp.float32)],
        compiler_params=pltpu.CompilerParams(
            dimension_semantics=("parallel", "parallel")),
    )(*args)

    return jnp.transpose(out_nhwc, (0, 3, 1, 2))                 # back to NCHW


# ----------------------------- pure-JAX reference ---------------------------- #

def _ref_inverted_residual(x_nchw, params, *, inp, oup, stride, expand_ratio):
    eps = 1e-5

    def bn(y, p):
        g, b, m, v = p
        return (y - m) * (g / jnp.sqrt(v + eps)) + b

    n, c, h, w = x_nchw.shape
    x = jnp.transpose(x_nchw, (0, 2, 3, 1)).astype(jnp.float32)

    if expand_ratio != 1:
        feat = jnp.clip(bn(jnp.einsum("nhwc,ck->nhwk", x, params["w_expand"]),
                           params["bn1"]), 0.0, 6.0)
    else:
        feat = x

    hout = (h - 1) // stride + 1
    wout = (w - 1) // stride + 1
    xp = jnp.pad(feat, ((0, 0), (1, 1), (1, 1), (0, 0)))
    acc = jnp.zeros((n, hout, wout, feat.shape[-1]), jnp.float32)
    for di in range(3):
        for dj in range(3):
            acc = acc + xp[:, di:di + stride * (hout - 1) + 1:stride,
                              dj:dj + stride * (wout - 1) + 1:stride, :] \
                        * params["w_dw"][di, dj]
    feat = jnp.clip(bn(acc, params["bn2"]), 0.0, 6.0)

    out = bn(jnp.einsum("nhwk,ko->nhwo", feat, params["w_proj"]), params["bn3"])
    if stride == 1 and inp == oup:
        out = out + x
    return jnp.transpose(out, (0, 3, 1, 2))


# ------------------------------------ main ------------------------------------ #

if __name__ == "__main__":
    N, H, W = 2, 16, 16
    configs = [
        dict(inp=4, oup=4, stride=1, expand_ratio=6),   # expansion + residual path
        dict(inp=8, oup=4, stride=1, expand_ratio=1),   # no expansion, no residual
    ]

    key = jax.random.PRNGKey(0)
    for cfg in configs:
        key, k_x, k_p = jax.random.split(key, 3)
        x = jax.random.normal(k_x, (N, cfg["inp"], H, W), jnp.float32)   # NCHW
        params = make_params(k_p, cfg["inp"], cfg["oup"], cfg["expand_ratio"])

        out = inverted_residual(x, params, **cfg)
        out = jax.block_until_ready(out)

        ref = _ref_inverted_residual(x, params, **cfg)
        # bf16 MXU operands + bf16 residual -> compare with a bf16-level tolerance.
        np.testing.assert_allclose(np.asarray(out), np.asarray(ref),
                                   rtol=5e-2, atol=5e-2)
        hout = (H - 1) // cfg["stride"] + 1
        assert out.shape == (N, cfg["oup"], hout, hout)

    print("KERNEL_OK")
</pallas_src>

<mosaic_0001>
module attributes {stable_mosaic.version = 11 : i64} {
  func.func @_fused_ir_kernel(%arg0: i32, %arg1: i32, %arg2: memref<1x328x4xbf16, #tpu.memory_space<vmem>>, %arg3: memref<328x1xf32, #tpu.memory_space<vmem>>, %arg4: memref<4x24xbf16, #tpu.memory_space<vmem>>, %arg5: memref<1x24xf32, #tpu.memory_space<vmem>>, %arg6: memref<3x3x24xf32, #tpu.memory_space<vmem>>, %arg7: memref<1x24xf32, #tpu.memory_space<vmem>>, %arg8: memref<24x4xbf16, #tpu.memory_space<vmem>>, %arg9: memref<1x4xf32, #tpu.memory_space<vmem>>, %arg10: memref<1x8x16x4xf32, #tpu.memory_space<vmem>>, %arg11: memref<184x24xf32, #tpu.memory_space<vmem>>, %arg12: memref<128x24xf32, #tpu.memory_space<vmem>>) attributes {dimension_semantics = [#tpu.dimension_semantics<parallel>, #tpu.dimension_semantics<parallel>], iteration_bounds = array<i64: 2, 2>, scalar_prefetch = 0 : i64, scratch_operands = 2 : i64, tpu.core_type = #tpu.core_type<tc>, window_params = [{transform_indices = @transform_0, window_bounds = array<i64: 1, 328, 4>}, {pipeline_mode = #tpu.pipeline_mode<synchronous>, transform_indices = @transform_1, window_bounds = array<i64: 328, 1>}, {pipeline_mode = #tpu.pipeline_mode<synchronous>, transform_indices = @transform_2, window_bounds = array<i64: 4, 24>}, {pipeline_mode = #tpu.pipeline_mode<synchronous>, transform_indices = @transform_3, window_bounds = array<i64: 1, 24>}, {pipeline_mode = #tpu.pipeline_mode<synchronous>, transform_indices = @transform_4, window_bounds = array<i64: 3, 3, 24>}, {pipeline_mode = #tpu.pipeline_mode<synchronous>, transform_indices = @transform_5, window_bounds = array<i64: 1, 24>}, {pipeline_mode = #tpu.pipeline_mode<synchronous>, transform_indices = @transform_6, window_bounds = array<i64: 24, 4>}, {pipeline_mode = #tpu.pipeline_mode<synchronous>, transform_indices = @transform_7, window_bounds = array<i64: 1, 4>}, {transform_indices = @transform_8, window_bounds = array<i64: 1, 8, 16, 4>}]} {
    %c144_i32 = arith.constant 144 : i32
    %0 = arith.muli %arg1, %c144_i32 : i32
    %1 = tpu.assume_multiple %0, 8 : i32
    %c0 = arith.constant 0 : index
    %2 = arith.index_cast %1 : i32 to index
    %c0_0 = arith.constant 0 : index
    %3 = vector.load %arg2[%c0, %2, %c0_0] : memref<1x328x4xbf16, #tpu.memory_space<vmem>>, vector<1x184x4xbf16>
    %4 = vector.shape_cast %3 : vector<1x184x4xbf16> to vector<184x4xbf16>
    %c0_1 = arith.constant 0 : index
    %c0_2 = arith.constant 0 : index
    %5 = vector.load %arg4[%c0_1, %c0_2] : memref<4x24xbf16, #tpu.memory_space<vmem>>, vector<4x24xbf16>
    %cst = arith.constant dense<0.000000e+00> : vector<184x24xf32>
    %6 = tpu.matmul %4, %5, %cst {dimension_numbers = #tpu.dot_dimension_numbers<[1], [0], [0], [1], [0, 0, 1, 1], [], []>} : vector<184x4xbf16>, vector<4x24xbf16>, vector<184x24xf32> -> vector<184x24xf32>
    %c0_3 = arith.constant 0 : index
    %c0_4 = arith.constant 0 : index
    %7 = vector.load %arg5[%c0_3, %c0_4] : memref<1x24xf32, #tpu.memory_space<vmem>>, vector<1x24xf32>
    %8 = vector.broadcast %7 : vector<1x24xf32> to vector<184x24xf32>
    %9 = arith.addf %6, %8 : vector<184x24xf32>
    %cst_5 = arith.constant 0.000000e+00 : f32
    %cst_6 = arith.constant 6.000000e+00 : f32
    %10 = vector.broadcast %cst_5 : f32 to vector<184x24xf32>
    %11 = arith.maximumf %10, %9 : vector<184x24xf32>
    %12 = vector.broadcast %cst_6 : f32 to vector<184x24xf32>
    %13 = arith.minimumf %12, %11 : vector<184x24xf32>
    %14 = arith.index_cast %1 : i32 to index
    %c0_7 = arith.constant 0 : index
    %15 = vector.load %arg3[%14, %c0_7] : memref<328x1xf32, #tpu.memory_space<vmem>>, vector<184x1xf32>
    %16 = vector.broadcast %15 : vector<184x1xf32> to vector<184x24xf32>
    %17 = arith.mulf %13, %16 : vector<184x24xf32>
    %c0_8 = arith.constant 0 : index
    %c0_9 = arith.constant 0 : index
    %18 = vector.load %arg11[%c0_8, %c0_9] : memref<184x24xf32, #tpu.memory_space<vmem>>, vector<184x24xf32>
    tpu.vector_store %arg11[%c0_8, %c0_9], %17 {strides = array<i32>} : memref<184x24xf32, #tpu.memory_space<vmem>>, vector<184x24xf32>,
    %cst_10 = arith.constant 0.000000e+00 : f32
    %19 = vector.broadcast %cst_10 : f32 to vector<16x24xf32>
    %c0_11 = arith.constant 0 : index
    %c0_12 = arith.constant 0 : index
    %20 = vector.load %arg11[%c0_11, %c0_12] : memref<184x24xf32, #tpu.memory_space<vmem>>, vector<16x24xf32>
    %c0_13 = arith.constant 0 : index
    %c0_14 = arith.constant 0 : index
    %c0_15 = arith.constant 0 : index
    %21 = vector.load %arg6[%c0_13, %c0_14, %c0_15] : memref<3x3x24xf32, #tpu.memory_space<vmem>>, vector<1x1x24xf32>
    %22 = vector.shape_cast %21 : vector<1x1x24xf32> to vector<24xf32>
    %23 = vector.shape_cast %22 : vector<24xf32> to vector<1x24xf32>
    %24 = vector.broadcast %23 : vector<1x24xf32> to vector<16x24xf32>
    %25 = arith.mulf %20, %24 : vector<16x24xf32>
    %26 = arith.addf %19, %25 : vector<16x24xf32>
    %c1 = arith.constant 1 : index
    %c0_16 = arith.constant 0 : index
    %27 = vector.load %arg11[%c1, %c0_16] : memref<184x24xf32, #tpu.memory_space<vmem>>, vector<16x24xf32>
    %c0_17 = arith.constant 0 : index
    %c1_18 = arith.constant 1 : index
    %c0_19 = arith.constant 0 : index
    %28 = vector.load %arg6[%c0_17, %c1_18, %c0_19] : memref<3x3x24xf32, #tpu.memory_space<vmem>>, vector<1x1x24xf32>
    %29 = vector.shape_cast %28 : vector<1x1x24xf32> to vector<24xf32>
    %30 = vector.shape_cast %29 : vector<24xf32> to vector<1x24xf32>
    %31 = vector.broadcast %30 : vector<1x24xf32> to vector<16x24xf32>
    %32 = arith.mulf %27, %31 : vector<16x24xf32>
    %33 = arith.addf %26, %32 : vector<16x24xf32>
    %c2 = arith.constant 2 : index
    %c0_20 = arith.constant 0 : index
    %34 = vector.load %arg11[%c2, %c0_20] : memref<184x24xf32, #tpu.memory_space<vmem>>, vector<16x24xf32>
    %c0_21 = arith.constant 0 : index
    %c2_22 = arith.constant 2 : index
    %c0_23 = arith.constant 0 : index
    %35 = vector.load %arg6[%c0_21, %c2_22, %c0_23] : memref<3x3x24xf32, #tpu.memory_space<vmem>>, vector<1x1x24xf32>
    %36 = vector.shape_cast %35 : vector<1x1x24xf32> to vector<24xf32>
    %37 = vector.shape_cast %36 : vector<24xf32> to vector<1x24xf32>
    %38 = vector.broadcast %37 : vector<1x24xf32> to vector<16x24xf32>
    %39 = arith.mulf %34, %38 : vector<16x24xf32>
    %40 = arith.addf %33, %39 : vector<16x24xf32>
    %c18 = arith.constant 18 : index
    %c0_24 = arith.constant 0 : index
    %41 = vector.load %arg11[%c18, %c0_24] : memref<184x24xf32, #tpu.memory_space<vmem>>, vector<16x24xf32>
    %c1_25 = arith.constant 1 : index
    %c0_26 = arith.constant 0 : index
    %c0_27 = arith.constant 0 : index
    %42 = vector.load %arg6[%c1_25, %c0_26, %c0_27] : memref<3x3x24xf32, #tpu.memory_space<vmem>>, vector<1x1x24xf32>
    %43 = vector.shape_cast %42 : vector<1x1x24xf32> to vector<24xf32>
    %44 = vector.shape_cast %43 : vector<24xf32> to vector<1x24xf32>
    %45 = vector.broadcast %44 : vector<1x24xf32> to vector<16x24xf32>
    %46 = arith.mulf %41, %45 : vector<16x24xf32>
    %47 = arith.addf %40, %46 : vector<16x24xf32>
    %c19 = arith.constant 19 : index
    %c0_28 = arith.constant 0 : index
    %48 = vector.load %arg11[%c19, %c0_28] : memref<184x24xf32, #tpu.memory_space<vmem>>, vector<16x24xf32>
    %c1_29 = arith.constant 1 : index
    %c1_30 = arith.constant 1 : index
    %c0_31 = arith.constant 0 : index
    %49 = vector.load %arg6[%c1_29, %c1_30, %c0_31] : memref<3x3x24xf32, #tpu.memory_space<vmem>>, vector<1x1x24xf32>
    %50 = vector.shape_cast %49 : vector<1x1x24xf32> to vector<24xf32>
    %51 = vector.shape_cast %50 : vector<24xf32> to vector<1x24xf32>
    %52 = vector.broadcast %51 : vector<1x24xf32> to vector<16x24xf32>
    %53 = arith.mulf %48, %52 : vector<16x24xf32>
    %54 = arith.addf %47, %53 : vector<16x24xf32>
    %c20 = arith.constant 20 : index
    %c0_32 = arith.constant 0 : index
    %55 = vector.load %arg11[%c20, %c0_32] : memref<184x24xf32, #tpu.memory_space<vmem>>, vector<16x24xf32>
    %c1_33 = arith.constant 1 : index
    %c2_34 = arith.constant 2 : index
    %c0_35 = arith.constant 0 : index
    %56 = vector.load %arg6[%c1_33, %c2_34, %c0_35] : memref<3x3x24xf32, #tpu.memory_space<vmem>>, vector<1x1x24xf32>
    %57 = vector.shape_cast %56 : vector<1x1x24xf32> to vector<24xf32>
    %58 = vector.shape_cast %57 : vector<24xf32> to vector<1x24xf32>
    %59 = vector.broadcast %58 : vector<1x24xf32> to vector<16x24xf32>
    %60 = arith.mulf %55, %59 : vector<16x24xf32>
    %61 = arith.addf %54, %60 : vector<16x24xf32>
    %c36 = arith.constant 36 : index
    %c0_36 = arith.constant 0 : index
    %62 = vector.load %arg11[%c36, %c0_36] : memref<184x24xf32, #tpu.memory_space<vmem>>, vector<16x24xf32>
    %c2_37 = arith.constant 2 : index
    %c0_38 = arith.constant 0 : index
    %c0_39 = arith.constant 0 : index
    %63 = vector.load %arg6[%c2_37, %c0_38, %c0_39] : memref<3x3x24xf32, #tpu.memory_space<vmem>>, vector<1x1x24xf32>
    %64 = vector.shape_cast %63 : vector<1x1x24xf32> to vector<24xf32>
    %65 = vector.shape_cast %64 : vector<24xf32> to vector<1x24xf32>
    %66 = vector.broadcast %65 : vector<1x24xf32> to vector<16x24xf32>
    %67 = arith.mulf %62, %66 : vector<16x24xf32>
    %68 = arith.addf %61, %67 : vector<16x24xf32>
    %c37 = arith.constant 37 : index
    %c0_40 = arith.constant 0 : index
    %69 = vector.load %arg11[%c37, %c0_40] : memref<184x24xf32, #tpu.memory_space<vmem>>, vector<16x24xf32>
    %c2_41 = arith.constant 2 : index
    %c1_42 = arith.constant 1 : index
    %c0_43 = arith.constant 0 : index
    %70 = vector.load %arg6[%c2_41, %c1_42, %c0_43] : memref<3x3x24xf32, #tpu.memory_space<vmem>>, vector<1x1x24xf32>
    %71 = vector.shape_cast %70 : vector<1x1x24xf32> to vector<24xf32>
    %72 = vector.shape_cast %71 : vector<24xf32> to vector<1x24xf32>
    %73 = vector.broadcast %72 : vector<1x24xf32> to vector<16x24xf32>
    %74 = arith.mulf %69, %73 : vector<16x24xf32>
    %75 = arith.addf %68, %74 : vector<16x24xf32>
    %c38 = arith.constant 38 : index
    %c0_44 = arith.constant 0 : index
    %76 = vector.load %arg11[%c38, %c0_44] : memref<184x24xf32, #tpu.memory_space<vmem>>, vector<16x24xf32>
    %c2_45 = arith.constant 2 : index
    %c2_46 = arith.constant 2 : index
    %c0_47 = arith.constant 0 : index
    %77 = vector.load %arg6[%c2_45, %c2_46, %c0_47] : memref<3x3x24xf32, #tpu.memory_space<vmem>>, vector<1x1x24xf32>
    %78 = vector.shape_cast %77 : vector<1x1x24xf32> to vector<24xf32>
    %79 = vector.shape_cast %78 : vector<24xf32> to vector<1x24xf32>
    %80 = vector.broadcast %79 : vector<1x24xf32> to vector<16x24xf32>
    %81 = arith.mulf %76, %80 : vector<16x24xf32>
    %82 = arith.addf %75, %81 : vector<16x24xf32>
    %c0_48 = arith.constant 0 : index
    %c0_49 = arith.constant 0 : index
    %83 = vector.load %arg7[%c0_48, %c0_49] : memref<1x24xf32, #tpu.memory_space<vmem>>, vector<1x24xf32>
    %84 = vector.broadcast %83 : vector<1x24xf32> to vector<16x24xf32>
    %85 = arith.addf %82, %84 : vector<16x24xf32>
    %cst_50 = arith.constant 0.000000e+00 : f32
    %cst_51 = arith.constant 6.000000e+00 : f32
    %86 = vector.broadcast %cst_50 : f32 to vector<16x24xf32>
    %87 = arith.maximumf %86, %85 : vector<16x24xf32>
    %88 = vector.broadcast %cst_51 : f32 to vector<16x24xf32>
    %89 = arith.minimumf %88, %87 : vector<16x24xf32>
    %c0_52 = arith.constant 0 : index
    %c0_53 = arith.constant 0 : index
    %90 = vector.load %arg12[%c0_52, %c0_53] : memref<128x24xf32, #tpu.memory_space<vmem>>, vector<16x24xf32>
    tpu.vector_store %arg12[%c0_52, %c0_53], %89 {strides = array<i32>} : memref<128x24xf32, #tpu.memory_space<vmem>>, vector<16x24xf32>,
    %cst_54 = arith.constant 0.000000e+00 : f32
    %91 = vector.broadcast %cst_54 : f32 to vector<16x24xf32>
    %c18_55 = arith.constant 18 : index
    %c0_56 = arith.constant 0 : index
    %92 = vector.load %arg11[%c18_55, %c0_56] : memref<184x24xf32, #tpu.memory_space<vmem>>, vector<16x24xf32>
    %c0_57 = arith.constant 0 : index
    %c0_58 = arith.constant 0 : index
    %c0_59 = arith.constant 0 : index
    %93 = vector.load %arg6[%c0_57, %c0_58, %c0_59] : memref<3x3x24xf32, #tpu.memory_space<vmem>>, vector<1x1x24xf32>
    %94 = vector.shape_cast %93 : vector<1x1x24xf32> to vector<24xf32>
    %95 = vector.shape_cast %94 : vector<24xf32> to vector<1x24xf32>
    %96 = vector.broadcast %95 : vector<1x24xf32> to vector<16x24xf32>
    %97 = arith.mulf %92, %96 : vector<16x24xf32>
    %98 = arith.addf %91, %97 : vector<16x24xf32>
    %c19_60 = arith.constant 19 : index
    %c0_61 = arith.constant 0 : index
    %99 = vector.load %arg11[%c19_60, %c0_61] : memref<184x24xf32, #tpu.memory_space<vmem>>, vector<16x24xf32>
    %c0_62 = arith.constant 0 : index
    %c1_63 = arith.constant 1 : index
    %c0_64 = arith.constant 0 : index
    %100 = vector.load %arg6[%c0_62, %c1_63, %c0_64] : memref<3x3x24xf32, #tpu.memory_space<vmem>>, vector<1x1x24xf32>
    %101 = vector.shape_cast %100 : vector<1x1x24xf32> to vector<24xf32>
    %102 = vector.shape_cast %101 : vector<24xf32> to vector<1x24xf32>
    %103 = vector.broadcast %102 : vector<1x24xf32> to vector<16x24xf32>
    %104 = arith.mulf %99, %103 : vector<16x24xf32>
    %105 = arith.addf %98, %104 : vector<16x24xf32>
    %c20_65 = arith.constant 20 : index
    %c0_66 = arith.constant 0 : index
    %106 = vector.load %arg11[%c20_65, %c0_66] : memref<184x24xf32, #tpu.memory_space<vmem>>, vector<16x24xf32>
    %c0_67 = arith.constant 0 : index
    %c2_68 = arith.constant 2 : index
    %c0_69 = arith.constant 0 : index
    %107 = vector.load %arg6[%c0_67, %c2_68, %c0_69] : memref<3x3x24xf32, #tpu.memory_space<vmem>>, vector<1x1x24xf32>
    %108 = vector.shape_cast %107 : vector<1x1x24xf32> to vector<24xf32>
    %109 = vector.shape_cast %108 : vector<24xf32> to vector<1x24xf32>
    %110 = vector.broadcast %109 : vector<1x24xf32> to vector<16x24xf32>
    %111 = arith.mulf %106, %110 : vector<16x24xf32>
    %112 = arith.addf %105, %111 : vector<16x24xf32>
    %c36_70 = arith.constant 36 : index
    %c0_71 = arith.constant 0 : index
    %113 = vector.load %arg11[%c36_70, %c0_71] : memref<184x24xf32, #tpu.memory_space<vmem>>, vector<16x24xf32>
    %c1_72 = arith.constant 1 : index
    %c0_73 = arith.constant 0 : index
    %c0_74 = arith.constant 0 : index
    %114 = vector.load %arg6[%c1_72, %c0_73, %c0_74] : memref<3x3x24xf32, #tpu.memory_space<vmem>>, vector<1x1x24xf32>
    %115 = vector.shape_cast %114 : vector<1x1x24xf32> to vector<24xf32>
    %116 = vector.shape_cast %115 : vector<24xf32> to vector<1x24xf32>
    %117 = vector.broadcast %116 : vector<1x24xf32> to vector<16x24xf32>
    %118 = arith.mulf %113, %117 : vector<16x24xf32>
    %119 = arith.addf %112, %118 : vector<16x24xf32>
    %c37_75 = arith.constant 37 : index
    %c0_76 = arith.constant 0 : index
    %120 = vector.load %arg11[%c37_75, %c0_76] : memref<184x24xf32, #tpu.memory_space<vmem>>, vector<16x24xf32>
    %c1_77 = arith.constant 1 : index
    %c1_78 = arith.constant 1 : index
    %c0_79 = arith.constant 0 : index
    %121 = vector.load %arg6[%c1_77, %c1_78, %c0_79] : memref<3x3x24xf32, #tpu.memory_space<vmem>>, vector<1x1x24xf32>
    %122 = vector.shape_cast %121 : vector<1x1x24xf32> to vector<24xf32>
    %123 = vector.shape_cast %122 : vector<24xf32> to vector<1x24xf32>
    %124 = vector.broadcast %123 : vector<1x24xf32> to vector<16x24xf32>
    %125 = arith.mulf %120, %124 : vector<16x24xf32>
    %126 = arith.addf %119, %125 : vector<16x24xf32>
    %c38_80 = arith.constant 38 : index
    %c0_81 = arith.constant 0 : index
    %127 = vector.load %arg11[%c38_80, %c0_81] : memref<184x24xf32, #tpu.memory_space<vmem>>, vector<16x24xf32>
    %c1_82 = arith.constant 1 : index
    %c2_83 = arith.constant 2 : index
    %c0_84 = arith.constant 0 : index
    %128 = vector.load %arg6[%c1_82, %c2_83, %c0_84] : memref<3x3x24xf32, #tpu.memory_space<vmem>>, vector<1x1x24xf32>
    %129 = vector.shape_cast %128 : vector<1x1x24xf32> to vector<24xf32>
    %130 = vector.shape_cast %129 : vector<24xf32> to vector<1x24xf32>
    %131 = vector.broadcast %130 : vector<1x24xf32> to vector<16x24xf32>
    %132 = arith.mulf %127, %131 : vector<16x24xf32>
    %133 = arith.addf %126, %132 : vector<16x24xf32>
    %c54 = arith.constant 54 : index
    %c0_85 = arith.constant 0 : index
    %134 = vector.load %arg11[%c54, %c0_85] : memref<184x24xf32, #tpu.memory_space<vmem>>, vector<16x24xf32>
    %c2_86 = arith.constant 2 : index
    %c0_87 = arith.constant 0 : index
    %c0_88 = arith.constant 0 : index
    %135 = vector.load %arg6[%c2_86, %c0_87, %c0_88] : memref<3x3x24xf32, #tpu.memory_space<vmem>>, vector<1x1x24xf32>
    %136 = vector.shape_cast %135 : vector<1x1x24xf32> to vector<24xf32>
    %137 = vector.shape_cast %136 : vector<24xf32> to vector<1x24xf32>
    %138 = vector.broadcast %137 : vector<1x24xf32> to vector<16x24xf32>
    %139 = arith.mulf %134, %138 : vector<16x24xf32>
    %140 = arith.addf %133, %139 : vector<16x24xf32>
    %c55 = arith.constant 55 : index
    %c0_89 = arith.constant 0 : index
    %141 = vector.load %arg11[%c55, %c0_89] : memref<184x24xf32, #tpu.memory_space<vmem>>, vector<16x24xf32>
    %c2_90 = arith.constant 2 : index
    %c1_91 = arith.constant 1 : index
    %c0_92 = arith.constant 0 : index
    %142 = vector.load %arg6[%c2_90, %c1_91, %c0_92] : memref<3x3x24xf32, #tpu.memory_space<vmem>>, vector<1x1x24xf32>
    %143 = vector.shape_cast %142 : vector<1x1x24xf32> to vector<24xf32>
    %144 = vector.shape_cast %143 : vector<24xf32> to vector<1x24xf32>
    %145 = vector.broadcast %144 : vector<1x24xf32> to vector<16x24xf32>
    %146 = arith.mulf %141, %145 : vector<16x24xf32>
    %147 = arith.addf %140, %146 : vector<16x24xf32>
    %c56 = arith.constant 56 : index
    %c0_93 = arith.constant 0 : index
    %148 = vector.load %arg11[%c56, %c0_93] : memref<184x24xf32, #tpu.memory_space<vmem>>, vector<16x24xf32>
    %c2_94 = arith.constant 2 : index
    %c2_95 = arith.constant 2 : index
    %c0_96 = arith.constant 0 : index
    %149 = vector.load %arg6[%c2_94, %c2_95, %c0_96] : memref<3x3x24xf32, #tpu.memory_space<vmem>>, vector<1x1x24xf32>
    %150 = vector.shape_cast %149 : vector<1x1x24xf32> to vector<24xf32>
    %151 = vector.shape_cast %150 : vector<24xf32> to vector<1x24xf32>
    %152 = vector.broadcast %151 : vector<1x24xf32> to vector<16x24xf32>
    %153 = arith.mulf %148, %152 : vector<16x24xf32>
    %154 = arith.addf %147, %153 : vector<16x24xf32>
    %c0_97 = arith.constant 0 : index
    %c0_98 = arith.constant 0 : index
    %155 = vector.load %arg7[%c0_97, %c0_98] : memref<1x24xf32, #tpu.memory_space<vmem>>, vector<1x24xf32>
    %156 = vector.broadcast %155 : vector<1x24xf32> to vector<16x24xf32>
    %157 = arith.addf %154, %156 : vector<16x24xf32>
    %cst_99 = arith.constant 0.000000e+00 : f32
    %cst_100 = arith.constant 6.000000e+00 : f32
    %158 = vector.broadcast %cst_99 : f32 to vector<16x24xf32>
    %159 = arith.maximumf %158, %157 : vector<16x24xf32>
    %160 = vector.broadcast %cst_100 : f32 to vector<16x24xf32>
    %161 = arith.minimumf %160, %159 : vector<16x24xf32>
    %c16 = arith.constant 16 : index
    %c0_101 = arith.constant 0 : index
    %162 = vector.load %arg12[%c16, %c0_101] : memref<128x24xf32, #tpu.memory_space<vmem>>, vector<16x24xf32>
    tpu.vector_store %arg12[%c16, %c0_101], %161 {strides = array<i32>} : memref<128x24xf32, #tpu.memory_space<vmem>>, vector<16x24xf32>,
    %cst_102 = arith.constant 0.000000e+00 : f32
    %163 = vector.broadcast %cst_102 : f32 to vector<16x24xf32>
    %c36_103 = arith.constant 36 : index
    %c0_104 = arith.constant 0 : index
    %164 = vector.load %arg11[%c36_103, %c0_104] : memref<184x24xf32, #tpu.memory_space<vmem>>, vector<16x24xf32>
    %c0_105 = arith.constant 0 : index
    %c0_106 = arith.constant 0 : index
    %c0_107 = arith.constant 0 : index
    %165 = vector.load %arg6[%c0_105, %c0_106, %c0_107] : memref<3x3x24xf32, #tpu.memory_space<vmem>>, vector<1x1x24xf32>
    %166 = vector.shape_cast %165 : vector<1x1x24xf32> to vector<24xf32>
    %167 = vector.shape_cast %166 : vector<24xf32> to vector<1x24xf32>
    %168 = vector.broadcast %167 : vector<1x24xf32> to vector<16x24xf32>
    %169 = arith.mulf %164, %168 : vector<16x24xf32>
    %170 = arith.addf %163, %169 : vector<16x24xf32>
    %c37_108 = arith.constant 37 : index
    %c0_109 = arith.constant 0 : index
    %171 = vector.load %arg11[%c37_108, %c0_109] : memref<184x24xf32, #tpu.memory_space<vmem>>, vector<16x24xf32>
    %c0_110 = arith.constant 0 : index
    %c1_111 = arith.constant 1 : index
    %c0_112 = arith.constant 0 : index
    %172 = vector.load %arg6[%c0_110, %c1_111, %c0_112] : memref<3x3x24xf32, #tpu.memory_space<vmem>>, vector<1x1x24xf32>
    %173 = vector.shape_cast %172 : vector<1x1x24xf32> to vector<24xf32>
    %174 = vector.shape_cast %173 : vector<24xf32> to vector<1x24xf32>
    %175 = vector.broadcast %174 : vector<1x24xf32> to vector<16x24xf32>
    %176 = arith.mulf %171, %175 : vector<16x24xf32>
    %177 = arith.addf %170, %176 : vector<16x24xf32>
    %c38_113 = arith.constant 38 : index
    %c0_114 = arith.constant 0 : index
    %178 = vector.load %arg11[%c38_113, %c0_114] : memref<184x24xf32, #tpu.memory_space<vmem>>, vector<16x24xf32>
    %c0_115 = arith.constant 0 : index
    %c2_116 = arith.constant 2 : index
    %c0_117 = arith.constant 0 : index
    %179 = vector.load %arg6[%c0_115, %c2_116, %c0_117] : memref<3x3x24xf32, #tpu.memory_space<vmem>>, vector<1x1x24xf32>
    %180 = vector.shape_cast %179 : vector<1x1x24xf32> to vector<24xf32>
    %181 = vector.shape_cast %180 : vector<24xf32> to vector<1x24xf32>
    %182 = vector.broadcast %181 : vector<1x24xf32> to vector<16x24xf32>
    %183 = arith.mulf %178, %182 : vector<16x24xf32>
    %184 = arith.addf %177, %183 : vector<16x24xf32>
    %c54_118 = arith.constant 54 : index
    %c0_119 = arith.constant 0 : index
    %185 = vector.load %arg11[%c54_118, %c0_119] : memref<184x24xf32, #tpu.memory_space<vmem>>, vector<16x24xf32>
    %c1_120 = arith.constant 1 : index
    %c0_121 = arith.constant 0 : index
    %c0_122 = arith.constant 0 : index
    %186 = vector.load %arg6[%c1_120, %c0_121, %c0_122] : memref<3x3x24xf32, #tpu.memory_space<vmem>>, vector<1x1x24xf32>
    %187 = vector.shape_cast %186 : vector<1x1x24xf32> to vector<24xf32>
    %188 = vector.shape_cast %187 : vector<24xf32> to vector<1x24xf32>
    %189 = vector.broadcast %188 : vector<1x24xf32> to vector<16x24xf32>
    %190 = arith.mulf %185, %189 : vector<16x24xf32>
    %191 = arith.addf %184, %190 : vector<16x24xf32>
    %c55_123 = arith.constant 55 : index
    %c0_124 = arith.constant 0 : index
    %192 = vector.load %arg11[%c55_123, %c0_124] : memref<184x24xf32, #tpu.memory_space<vmem>>, vector<16x24xf32>
    %c1_125 = arith.constant 1 : index
    %c1_126 = arith.constant 1 : index
    %c0_127 = arith.constant 0 : index
    %193 = vector.load %arg6[%c1_125, %c1_126, %c0_127] : memref<3x3x24xf32, #tpu.memory_space<vmem>>, vector<1x1x24xf32>
    %194 = vector.shape_cast %193 : vector<1x1x24xf32> to vector<24xf32>
    %195 = vector.shape_cast %194 : vector<24xf32> to vector<1x24xf32>
    %196 = vector.broadcast %195 : vector<1x24xf32> to vector<16x24xf32>
    %197 = arith.mulf %192, %196 : vector<16x24xf32>
    %198 = arith.addf %191, %197 : vector<16x24xf32>
    %c56_128 = arith.constant 56 : index
    %c0_129 = arith.constant 0 : index
    %199 = vector.load %arg11[%c56_128, %c0_129] : memref<184x24xf32, #tpu.memory_space<vmem>>, vector<16x24xf32>
    %c1_130 = arith.constant 1 : index
    %c2_131 = arith.constant 2 : index
    %c0_132 = arith.constant 0 : index
    %200 = vector.load %arg6[%c1_130, %c2_131, %c0_132] : memref<3x3x24xf32, #tpu.memory_space<vmem>>, vector<1x1x24xf32>
    %201 = vector.shape_cast %200 : vector<1x1x24xf32> to vector<24xf32>
    %202 = vector.shape_cast %201 : vector<24xf32> to vector<1x24xf32>
    %203 = vector.broadcast %202 : vector<1x24xf32> to vector<16x24xf32>
    %204 = arith.mulf %199, %203 : vector<16x24xf32>
    %205 = arith.addf %198, %204 : vector<16x24xf32>
    %c72 = arith.constant 72 : index
    %c0_133 = arith.constant 0 : index
    %206 = vector.load %arg11[%c72, %c0_133] : memref<184x24xf32, #tpu.memory_space<vmem>>, vector<16x24xf32>
    %c2_134 = arith.constant 2 : index
    %c0_135 = arith.constant 0 : index
    %c0_136 = arith.constant 0 : index
    %207 = vector.load %arg6[%c2_134, %c0_135, %c0_136] : memref<3x3x24xf32, #tpu.memory_space<vmem>>, vector<1x1x24xf32>
    %208 = vector.shape_cast %207 : vector<1x1x24xf32> to vector<24xf32>
    %209 = vector.shape_cast %208 : vector<24xf32> to vector<1x24xf32>
    %210 = vector.broadcast %209 : vector<1x24xf32> to vector<16x24xf32>
    %211 = arith.mulf %206, %210 : vector<16x24xf32>
    %212 = arith.addf %205, %211 : vector<16x24xf32>
    %c73 = arith.constant 73 : index
    %c0_137 = arith.constant 0 : index
    %213 = vector.load %arg11[%c73, %c0_137] : memref<184x24xf32, #tpu.memory_space<vmem>>, vector<16x24xf32>
    %c2_138 = arith.constant 2 : index
    %c1_139 = arith.constant 1 : index
    %c0_140 = arith.constant 0 : index
    %214 = vector.load %arg6[%c2_138, %c1_139, %c0_140] : memref<3x3x24xf32, #tpu.memory_space<vmem>>, vector<1x1x24xf32>
    %215 = vector.shape_cast %214 : vector<1x1x24xf32> to vector<24xf32>
    %216 = vector.shape_cast %215 : vector<24xf32> to vector<1x24xf32>
    %217 = vector.broadcast %216 : vector<1x24xf32> to vector<16x24xf32>
    %218 = arith.mulf %213, %217 : vector<16x24xf32>
    %219 = arith.addf %212, %218 : vector<16x24xf32>
    %c74 = arith.constant 74 : index
    %c0_141 = arith.constant 0 : index
    %220 = vector.load %arg11[%c74, %c0_141] : memref<184x24xf32, #tpu.memory_space<vmem>>, vector<16x24xf32>
    %c2_142 = arith.constant 2 : index
    %c2_143 = arith.constant 2 : index
    %c0_144 = arith.constant 0 : index
    %221 = vector.load %arg6[%c2_142, %c2_143, %c0_144] : memref<3x3x24xf32, #tpu.memory_space<vmem>>, vector<1x1x24xf32>
    %222 = vector.shape_cast %221 : vector<1x1x24xf32> to vector<24xf32>
    %223 = vector.shape_cast %222 : vector<24xf32> to vector<1x24xf32>
    %224 = vector.broadcast %223 : vector<1x24xf32> to vector<16x24xf32>
    %225 = arith.mulf %220, %224 : vector<16x24xf32>
    %226 = arith.addf %219, %225 : vector<16x24xf32>
    %c0_145 = arith.constant 0 : index
    %c0_146 = arith.constant 0 : index
    %227 = vector.load %arg7[%c0_145, %c0_146] : memref<1x24xf32, #tpu.memory_space<vmem>>, vector<1x24xf32>
    %228 = vector.broadcast %227 : vector<1x24xf32> to vector<16x24xf32>
    %229 = arith.addf %226, %228 : vector<16x24xf32>
    %cst_147 = arith.constant 0.000000e+00 : f32
    %cst_148 = arith.constant 6.000000e+00 : f32
    %230 = vector.broadcast %cst_147 : f32 to vector<16x24xf32>
    %231 = arith.maximumf %230, %229 : vector<16x24xf32>
    %232 = vector.broadcast %cst_148 : f32 to vector<16x24xf32>
    %233 = arith.minimumf %232, %231 : vector<16x24xf32>
    %c32 = arith.constant 32 : index
    %c0_149 = arith.constant 0 : index
    %234 = vector.load %arg12[%c32, %c0_149] : memref<128x24xf32, #tpu.memory_space<vmem>>, vector<16x24xf32>
    tpu.vector_store %arg12[%c32, %c0_149], %233 {strides = array<i32>} : memref<128x24xf32, #tpu.memory_space<vmem>>, vector<16x24xf32>,
    %cst_150 = arith.constant 0.000000e+00 : f32
    %235 = vector.broadcast %cst_150 : f32 to vector<16x24xf32>
    %c54_151 = arith.constant 54 : index
    %c0_152 = arith.constant 0 : index
    %236 = vector.load %arg11[%c54_151, %c0_152] : memref<184x24xf32, #tpu.memory_space<vmem>>, vector<16x24xf32>
    %c0_153 = arith.constant 0 : index
    %c0_154 = arith.constant 0 : index
    %c0_155 = arith.constant 0 : index
    %237 = vector.load %arg6[%c0_153, %c0_154, %c0_155] : memref<3x3x24xf32, #tpu.memory_space<vmem>>, vector<1x1x24xf32>
    %238 = vector.shape_cast %237 : vector<1x1x24xf32> to vector<24xf32>
    %239 = vector.shape_cast %238 : vector<24xf32> to vector<1x24xf32>
    %240 = vector.broadcast %239 : vector<1x24xf32> to vector<16x24xf32>
    %241 = arith.mulf %236, %240 : vector<16x24xf32>
    %242 = arith.addf %235, %241 : vector<16x24xf32>
    %c55_156 = arith.constant 55 : index
    %c0_157 = arith.constant 0 : index
    %243 = vector.load %arg11[%c55_156, %c0_157] : memref<184x24xf32, #tpu.memory_space<vmem>>, vector<16x24xf32>
    %c0_158 = arith.constant 0 : index
    %c1_159 = arith.constant 1 : index
    %c0_160 = arith.constant 0 : index
    %244 = vector.load %arg6[%c0_158, %c1_159, %c0_160] : memref<3x3x24xf32, #tpu.memory_space<vmem>>, vector<1x1x24xf32>
    %245 = vector.shape_cast %244 : vector<1x1x24xf32> to vector<24xf32>
    %246 = vector.shape_cast %245 : vector<24xf32> to vector<1x24xf32>
    %247 = vector.broadcast %246 : vector<1x24xf32> to vector<16x24xf32>
    %248 = arith.mulf %243, %247 : vector<16x24xf32>
    %249 = arith.addf %242, %248 : vector<16x24xf32>
    %c56_161 = arith.constant 56 : index
    %c0_162 = arith.constant 0 : index
    %250 = vector.load %arg11[%c56_161, %c0_162] : memref<184x24xf32, #tpu.memory_space<vmem>>, vector<16x24xf32>
    %c0_163 = arith.constant 0 : index
    %c2_164 = arith.constant 2 : index
    %c0_165 = arith.constant 0 : index
    %251 = vector.load %arg6[%c0_163, %c2_164, %c0_165] : memref<3x3x24xf32, #tpu.memory_space<vmem>>, vector<1x1x24xf32>
    %252 = vector.shape_cast %251 : vector<1x1x24xf32> to vector<24xf32>
    %253 = vector.shape_cast %252 : vector<24xf32> to vector<1x24xf32>
    %254 = vector.broadcast %253 : vector<1x24xf32> to vector<16x24xf32>
    %255 = arith.mulf %250, %254 : vector<16x24xf32>
    %256 = arith.addf %249, %255 : vector<16x24xf32>
    %c72_166 = arith.constant 72 : index
    %c0_167 = arith.constant 0 : index
    %257 = vector.load %arg11[%c72_166, %c0_167] : memref<184x24xf32, #tpu.memory_space<vmem>>, vector<16x24xf32>
    %c1_168 = arith.constant 1 : index
    %c0_169 = arith.constant 0 : index
    %c0_170 = arith.constant 0 : index
    %258 = vector.load %arg6[%c1_168, %c0_169, %c0_170] : memref<3x3x24xf32, #tpu.memory_space<vmem>>, vector<1x1x24xf32>
    %259 = vector.shape_cast %258 : vector<1x1x24xf32> to vector<24xf32>
    %260 = vector.shape_cast %259 : vector<24xf32> to vector<1x24xf32>
    %261 = vector.broadcast %260 : vector<1x24xf32> to vector<16x24xf32>
    %262 = arith.mulf %257, %261 : vector<16x24xf32>
    %263 = arith.addf %256, %262 : vector<16x24xf32>
    %c73_171 = arith.constant 73 : index
    %c0_172 = arith.constant 0 : index
    %264 = vector.load %arg11[%c73_171, %c0_172] : memref<184x24xf32, #tpu.memory_space<vmem>>, vector<16x24xf32>
    %c1_173 = arith.constant 1 : index
    %c1_174 = arith.constant 1 : index
    %c0_175 = arith.constant 0 : index
    %265 = vector.load %arg6[%c1_173, %c1_174, %c0_175] : memref<3x3x24xf32, #tpu.memory_space<vmem>>, vector<1x1x24xf32>
    %266 = vector.shape_cast %265 : vector<1x1x24xf32> to vector<24xf32>
    %267 = vector.shape_cast %266 : vector<24xf32> to vector<1x24xf32>
    %268 = vector.broadcast %267 : vector<1x24xf32> to vector<16x24xf32>
    %269 = arith.mulf %264, %268 : vector<16x24xf32>
    %270 = arith.addf %263, %269 : vector<16x24xf32>
    %c74_176 = arith.constant 74 : index
    %c0_177 = arith.constant 0 : index
    %271 = vector.load %arg11[%c74_176, %c0_177] : memref<184x24xf32, #tpu.memory_space<vmem>>, vector<16x24xf32>
    %c1_178 = arith.constant 1 : index
    %c2_179 = arith.constant 2 : index
    %c0_180 = arith.constant 0 : index
    %272 = vector.load %arg6[%c1_178, %c2_179, %c0_180] : memref<3x3x24xf32, #tpu.memory_space<vmem>>, vector<1x1x24xf32>
    %273 = vector.shape_cast %272 : vector<1x1x24xf32> to vector<24xf32>
    %274 = vector.shape_cast %273 : vector<24xf32> to vector<1x24xf32>
    %275 = vector.broadcast %274 : vector<1x24xf32> to vector<16x24xf32>
    %276 = arith.mulf %271, %275 : vector<16x24xf32>
    %277 = arith.addf %270, %276 : vector<16x24xf32>
    %c90 = arith.constant 90 : index
    %c0_181 = arith.constant 0 : index
    %278 = vector.load %arg11[%c90, %c0_181] : memref<184x24xf32, #tpu.memory_space<vmem>>, vector<16x24xf32>
    %c2_182 = arith.constant 2 : index
    %c0_183 = arith.constant 0 : index
    %c0_184 = arith.constant 0 : index
    %279 = vector.load %arg6[%c2_182, %c0_183, %c0_184] : memref<3x3x24xf32, #tpu.memory_space<vmem>>, vector<1x1x24xf32>
    %280 = vector.shape_cast %279 : vector<1x1x24xf32> to vector<24xf32>
    %281 = vector.shape_cast %280 : vector<24xf32> to vector<1x24xf32>
    %282 = vector.broadcast %281 : vector<1x24xf32> to vector<16x24xf32>
    %283 = arith.mulf %278, %282 : vector<16x24xf32>
    %284 = arith.addf %277, %283 : vector<16x24xf32>
    %c91 = arith.constant 91 : index
    %c0_185 = arith.constant 0 : index
    %285 = vector.load %arg11[%c91, %c0_185] : memref<184x24xf32, #tpu.memory_space<vmem>>, vector<16x24xf32>
    %c2_186 = arith.constant 2 : index
    %c1_187 = arith.constant 1 : index
    %c0_188 = arith.constant 0 : index
    %286 = vector.load %arg6[%c2_186, %c1_187, %c0_188] : memref<3x3x24xf32, #tpu.memory_space<vmem>>, vector<1x1x24xf32>
    %287 = vector.shape_cast %286 : vector<1x1x24xf32> to vector<24xf32>
    %288 = vector.shape_cast %287 : vector<24xf32> to vector<1x24xf32>
    %289 = vector.broadcast %288 : vector<1x24xf32> to vector<16x24xf32>
    %290 = arith.mulf %285, %289 : vector<16x24xf32>
    %291 = arith.addf %284, %290 : vector<16x24xf32>
    %c92 = arith.constant 92 : index
    %c0_189 = arith.constant 0 : index
    %292 = vector.load %arg11[%c92, %c0_189] : memref<184x24xf32, #tpu.memory_space<vmem>>, vector<16x24xf32>
    %c2_190 = arith.constant 2 : index
    %c2_191 = arith.constant 2 : index
    %c0_192 = arith.constant 0 : index
    %293 = vector.load %arg6[%c2_190, %c2_191, %c0_192] : memref<3x3x24xf32, #tpu.memory_space<vmem>>, vector<1x1x24xf32>
    %294 = vector.shape_cast %293 : vector<1x1x24xf32> to vector<24xf32>
    %295 = vector.shape_cast %294 : vector<24xf32> to vector<1x24xf32>
    %296 = vector.broadcast %295 : vector<1x24xf32> to vector<16x24xf32>
    %297 = arith.mulf %292, %296 : vector<16x24xf32>
    %298 = arith.addf %291, %297 : vector<16x24xf32>
    %c0_193 = arith.constant 0 : index
    %c0_194 = arith.constant 0 : index
    %299 = vector.load %arg7[%c0_193, %c0_194] : memref<1x24xf32, #tpu.memory_space<vmem>>, vector<1x24xf32>
    %300 = vector.broadcast %299 : vector<1x24xf32> to vector<16x24xf32>
    %301 = arith.addf %298, %300 : vector<16x24xf32>
    %cst_195 = arith.constant 0.000000e+00 : f32
    %cst_196 = arith.constant 6.000000e+00 : f32
    %302 = vector.broadcast %cst_195 : f32 to vector<16x24xf32>
    %303 = arith.maximumf %302, %301 : vector<16x24xf32>
    %304 = vector.broadcast %cst_196 : f32 to vector<16x24xf32>
    %305 = arith.minimumf %304, %303 : vector<16x24xf32>
    %c48 = arith.constant 48 : index
    %c0_197 = arith.constant 0 : index
    %306 = vector.load %arg12[%c48, %c0_197] : memref<128x24xf32, #tpu.memory_space<vmem>>, vector<16x24xf32>
    tpu.vector_store %arg12[%c48, %c0_197], %305 {strides = array<i32>} : memref<128x24xf32, #tpu.memory_space<vmem>>, vector<16x24xf32>,
    %cst_198 = arith.constant 0.000000e+00 : f32
    %307 = vector.broadcast %cst_198 : f32 to vector<16x24xf32>
    %c72_199 = arith.constant 72 : index
    %c0_200 = arith.constant 0 : index
    %308 = vector.load %arg11[%c72_199, %c0_200] : memref<184x24xf32, #tpu.memory_space<vmem>>, vector<16x24xf32>
    %c0_201 = arith.constant 0 : index
    %c0_202 = arith.constant 0 : index
    %c0_203 = arith.constant 0 : index
    %309 = vector.load %arg6[%c0_201, %c0_202, %c0_203] : memref<3x3x24xf32, #tpu.memory_space<vmem>>, vector<1x1x24xf32>
    %310 = vector.shape_cast %309 : vector<1x1x24xf32> to vector<24xf32>
    %311 = vector.shape_cast %310 : vector<24xf32> to vector<1x24xf32>
    %312 = vector.broadcast %311 : vector<1x24xf32> to vector<16x24xf32>
    %313 = arith.mulf %308, %312 : vector<16x24xf32>
    %314 = arith.addf %307, %313 : vector<16x24xf32>
    %c73_204 = arith.constant 73 : index
    %c0_205 = arith.constant 0 : index
    %315 = vector.load %arg11[%c73_204, %c0_205] : memref<184x24xf32, #tpu.memory_space<vmem>>, vector<16x24xf32>
    %c0_206 = arith.constant 0 : index
    %c1_207 = arith.constant 1 : index
    %c0_208 = arith.constant 0 : index
    %316 = vector.load %arg6[%c0_206, %c1_207, %c0_208] : memref<3x3x24xf32, #tpu.memory_space<vmem>>, vector<1x1x24xf32>
    %317 = vector.shape_cast %316 : vector<1x1x24xf32> to vector<24xf32>
    %318 = vector.shape_cast %317 : vector<24xf32> to vector<1x24xf32>
    %319 = vector.broadcast %318 : vector<1x24xf32> to vector<16x24xf32>
    %320 = arith.mulf %315, %319 : vector<16x24xf32>
    %321 = arith.addf %314, %320 : vector<16x24xf32>
    %c74_209 = arith.constant 74 : index
    %c0_210 = arith.constant 0 : index
    %322 = vector.load %arg11[%c74_209, %c0_210] : memref<184x24xf32, #tpu.memory_space<vmem>>, vector<16x24xf32>
    %c0_211 = arith.constant 0 : index
    %c2_212 = arith.constant 2 : index
    %c0_213 = arith.constant 0 : index
    %323 = vector.load %arg6[%c0_211, %c2_212, %c0_213] : memref<3x3x24xf32, #tpu.memory_space<vmem>>, vector<1x1x24xf32>
    %324 = vector.shape_cast %323 : vector<1x1x24xf32> to vector<24xf32>
    %325 = vector.shape_cast %324 : vector<24xf32> to vector<1x24xf32>
    %326 = vector.broadcast %325 : vector<1x24xf32> to vector<16x24xf32>
    %327 = arith.mulf %322, %326 : vector<16x24xf32>
    %328 = arith.addf %321, %327 : vector<16x24xf32>
    %c90_214 = arith.constant 90 : index
    %c0_215 = arith.constant 0 : index
    %329 = vector.load %arg11[%c90_214, %c0_215] : memref<184x24xf32, #tpu.memory_space<vmem>>, vector<16x24xf32>
    %c1_216 = arith.constant 1 : index
    %c0_217 = arith.constant 0 : index
    %c0_218 = arith.constant 0 : index
    %330 = vector.load %arg6[%c1_216, %c0_217, %c0_218] : memref<3x3x24xf32, #tpu.memory_space<vmem>>, vector<1x1x24xf32>
    %331 = vector.shape_cast %330 : vector<1x1x24xf32> to vector<24xf32>
    %332 = vector.shape_cast %331 : vector<24xf32> to vector<1x24xf32>
    %333 = vector.broadcast %332 : vector<1x24xf32> to vector<16x24xf32>
    %334 = arith.mulf %329, %333 : vector<16x24xf32>
    %335 = arith.addf %328, %334 : vector<16x24xf32>
    %c91_219 = arith.constant 91 : index
    %c0_220 = arith.constant 0 : index
    %336 = vector.load %arg11[%c91_219, %c0_220] : memref<184x24xf32, #tpu.memory_space<vmem>>, vector<16x24xf32>
    %c1_221 = arith.constant 1 : index
    %c1_222 = arith.constant 1 : index
    %c0_223 = arith.constant 0 : index
    %337 = vector.load %arg6[%c1_221, %c1_222, %c0_223] : memref<3x3x24xf32, #tpu.memory_space<vmem>>, vector<1x1x24xf32>
    %338 = vector.shape_cast %337 : vector<1x1x24xf32> to vector<24xf32>
    %339 = vector.shape_cast %338 : vector<24xf32> to vector<1x24xf32>
    %340 = vector.broadcast %339 : vector<1x24xf32> to vector<16x24xf32>
    %341 = arith.mulf %336, %340 : vector<16x24xf32>
    %342 = arith.addf %335, %341 : vector<16x24xf32>
    %c92_224 = arith.constant 92 : index
    %c0_225 = arith.constant 0 : index
    %343 = vector.load %arg11[%c92_224, %c0_225] : memref<184x24xf32, #tpu.memory_space<vmem>>, vector<16x24xf32>
    %c1_226 = arith.constant 1 : index
    %c2_227 = arith.constant 2 : index
    %c0_228 = arith.constant 0 : index
    %344 = vector.load %arg6[%c1_226, %c2_227, %c0_228] : memref<3x3x24xf32, #tpu.memory_space<vmem>>, vector<1x1x24xf32>
    %345 = vector.shape_cast %344 : vector<1x1x24xf32> to vector<24xf32>
    %346 = vector.shape_cast %345 : vector<24xf32> to vector<1x24xf32>
    %347 = vector.broadcast %346 : vector<1x24xf32> to vector<16x24xf32>
    %348 = arith.mulf %343, %347 : vector<16x24xf32>
    %349 = arith.addf %342, %348 : vector<16x24xf32>
    %c108 = arith.constant 108 : index
    %c0_229 = arith.constant 0 : index
    %350 = vector.load %arg11[%c108, %c0_229] : memref<184x24xf32, #tpu.memory_space<vmem>>, vector<16x24xf32>
    %c2_230 = arith.constant 2 : index
    %c0_231 = arith.constant 0 : index
    %c0_232 = arith.constant 0 : index
    %351 = vector.load %arg6[%c2_230, %c0_231, %c0_232] : memref<3x3x24xf32, #tpu.memory_space<vmem>>, vector<1x1x24xf32>
    %352 = vector.shape_cast %351 : vector<1x1x24xf32> to vector<24xf32>
    %353 = vector.shape_cast %352 : vector<24xf32> to vector<1x24xf32>
    %354 = vector.broadcast %353 : vector<1x24xf32> to vector<16x24xf32>
    %355 = arith.mulf %350, %354 : vector<16x24xf32>
    %356 = arith.addf %349, %355 : vector<16x24xf32>
    %c109 = arith.constant 109 : index
    %c0_233 = arith.constant 0 : index
    %357 = vector.load %arg11[%c109, %c0_233] : memref<184x24xf32, #tpu.memory_space<vmem>>, vector<16x24xf32>
    %c2_234 = arith.constant 2 : index
    %c1_235 = arith.constant 1 : index
    %c0_236 = arith.constant 0 : index
    %358 = vector.load %arg6[%c2_234, %c1_235, %c0_236] : memref<3x3x24xf32, #tpu.memory_space<vmem>>, vector<1x1x24xf32>
    %359 = vector.shape_cast %358 : vector<1x1x24xf32> to vector<24xf32>
    %360 = vector.shape_cast %359 : vector<24xf32> to vector<1x24xf32>
    %361 = vector.broadcast %360 : vector<1x24xf32> to vector<16x24xf32>
    %362 = arith.mulf %357, %361 : vector<16x24xf32>
    %363 = arith.addf %356, %362 : vector<16x24xf32>
    %c110 = arith.constant 110 : index
    %c0_237 = arith.constant 0 : index
    %364 = vector.load %arg11[%c110, %c0_237] : memref<184x24xf32, #tpu.memory_space<vmem>>, vector<16x24xf32>
    %c2_238 = arith.constant 2 : index
    %c2_239 = arith.constant 2 : index
    %c0_240 = arith.constant 0 : index
    %365 = vector.load %arg6[%c2_238, %c2_239, %c0_240] : memref<3x3x24xf32, #tpu.memory_space<vmem>>, vector<1x1x24xf32>
    %366 = vector.shape_cast %365 : vector<1x1x24xf32> to vector<24xf32>
    %367 = vector.shape_cast %366 : vector<24xf32> to vector<1x24xf32>
    %368 = vector.broadcast %367 : vector<1x24xf32> to vector<16x24xf32>
    %369 = arith.mulf %364, %368 : vector<16x24xf32>
    %370 = arith.addf %363, %369 : vector<16x24xf32>
    %c0_241 = arith.constant 0 : index
    %c0_242 = arith.constant 0 : index
    %371 = vector.load %arg7[%c0_241, %c0_242] : memref<1x24xf32, #tpu.memory_space<vmem>>, vector<1x24xf32>
    %372 = vector.broadcast %371 : vector<1x24xf32> to vector<16x24xf32>
    %373 = arith.addf %370, %372 : vector<16x24xf32>
    %cst_243 = arith.constant 0.000000e+00 : f32
    %cst_244 = arith.constant 6.000000e+00 : f32
    %374 = vector.broadcast %cst_243 : f32 to vector<16x24xf32>
    %375 = arith.maximumf %374, %373 : vector<16x24xf32>
    %376 = vector.broadcast %cst_244 : f32 to vector<16x24xf32>
    %377 = arith.minimumf %376, %375 : vector<16x24xf32>
    %c64 = arith.constant 64 : index
    %c0_245 = arith.constant 0 : index
    %378 = vector.load %arg12[%c64, %c0_245] : memref<128x24xf32, #tpu.memory_space<vmem>>, vector<16x24xf32>
    tpu.vector_store %arg12[%c64, %c0_245], %377 {strides = array<i32>} : memref<128x24xf32, #tpu.memory_space<vmem>>, vector<16x24xf32>,
    %cst_246 = arith.constant 0.000000e+00 : f32
    %379 = vector.broadcast %cst_246 : f32 to vector<16x24xf32>
    %c90_247 = arith.constant 90 : index
    %c0_248 = arith.constant 0 : index
    %380 = vector.load %arg11[%c90_247, %c0_248] : memref<184x24xf32, #tpu.memory_space<vmem>>, vector<16x24xf32>
    %c0_249 = arith.constant 0 : index
    %c0_250 = arith.constant 0 : index
    %c0_251 = arith.constant 0 : index
    %381 = vector.load %arg6[%c0_249, %c0_250, %c0_251] : memref<3x3x24xf32, #tpu.memory_space<vmem>>, vector<1x1x24xf32>
    %382 = vector.shape_cast %381 : vector<1x1x24xf32> to vector<24xf32>
    %383 = vector.shape_cast %382 : vector<24xf32> to vector<1x24xf32>
    %384 = vector.broadcast %383 : vector<1x24xf32> to vector<16x24xf32>
    %385 = arith.mulf %380, %384 : vector<16x24xf32>
    %386 = arith.addf %379, %385 : vector<16x24xf32>
    %c91_252 = arith.constant 91 : index
    %c0_253 = arith.constant 0 : index
    %387 = vector.load %arg11[%c91_252, %c0_253] : memref<184x24xf32, #tpu.memory_space<vmem>>, vector<16x24xf32>
    %c0_254 = arith.constant 0 : index
    %c1_255 = arith.constant 1 : index
    %c0_256 = arith.constant 0 : index
    %388 = vector.load %arg6[%c0_254, %c1_255, %c0_256] : memref<3x3x24xf32, #tpu.memory_space<vmem>>, vector<1x1x24xf32>
    %389 = vector.shape_cast %388 : vector<1x1x24xf32> to vector<24xf32>
    %390 = vector.shape_cast %389 : vector<24xf32> to vector<1x24xf32>
    %391 = vector.broadcast %390 : vector<1x24xf32> to vector<16x24xf32>
    %392 = arith.mulf %387, %391 : vector<16x24xf32>
    %393 = arith.addf %386, %392 : vector<16x24xf32>
    %c92_257 = arith.constant 92 : index
    %c0_258 = arith.constant 0 : index
    %394 = vector.load %arg11[%c92_257, %c0_258] : memref<184x24xf32, #tpu.memory_space<vmem>>, vector<16x24xf32>
    %c0_259 = arith.constant 0 : index
    %c2_260 = arith.constant 2 : index
    %c0_261 = arith.constant 0 : index
    %395 = vector.load %arg6[%c0_259, %c2_260, %c0_261] : memref<3x3x24xf32, #tpu.memory_space<vmem>>, vector<1x1x24xf32>
    %396 = vector.shape_cast %395 : vector<1x1x24xf32> to vector<24xf32>
    %397 = vector.shape_cast %396 : vector<24xf32> to vector<1x24xf32>
    %398 = vector.broadcast %397 : vector<1x24xf32> to vector<16x24xf32>
    %399 = arith.mulf %394, %398 : vector<16x24xf32>
    %400 = arith.addf %393, %399 : vector<16x24xf32>
    %c108_262 = arith.constant 108 : index
    %c0_263 = arith.constant 0 : index
    %401 = vector.load %arg11[%c108_262, %c0_263] : memref<184x24xf32, #tpu.memory_space<vmem>>, vector<16x24xf32>
    %c1_264 = arith.constant 1 : index
    %c0_265 = arith.constant 0 : index
    %c0_266 = arith.constant 0 : index
    %402 = vector.load %arg6[%c1_264, %c0_265, %c0_266] : memref<3x3x24xf32, #tpu.memory_space<vmem>>, vector<1x1x24xf32>
    %403 = vector.shape_cast %402 : vector<1x1x24xf32> to vector<24xf32>
    %404 = vector.shape_cast %403 : vector<24xf32> to vector<1x24xf32>
    %405 = vector.broadcast %404 : vector<1x24xf32> to vector<16x24xf32>
    %406 = arith.mulf %401, %405 : vector<16x24xf32>
    %407 = arith.addf %400, %406 : vector<16x24xf32>
    %c109_267 = arith.constant 109 : index
    %c0_268 = arith.constant 0 : index
    %408 = vector.load %arg11[%c109_267, %c0_268] : memref<184x24xf32, #tpu.memory_space<vmem>>, vector<16x24xf32>
    %c1_269 = arith.constant 1 : index
    %c1_270 = arith.constant 1 : index
    %c0_271 = arith.constant 0 : index
    %409 = vector.load %arg6[%c1_269, %c1_270, %c0_271] : memref<3x3x24xf32, #tpu.memory_space<vmem>>, vector<1x1x24xf32>
    %410 = vector.shape_cast %409 : vector<1x1x24xf32> to vector<24xf32>
    %411 = vector.shape_cast %410 : vector<24xf32> to vector<1x24xf32>
    %412 = vector.broadcast %411 : vector<1x24xf32> to vector<16x24xf32>
    %413 = arith.mulf %408, %412 : vector<16x24xf32>
    %414 = arith.addf %407, %413 : vector<16x24xf32>
    %c110_272 = arith.constant 110 : index
    %c0_273 = arith.constant 0 : index
    %415 = vector.load %arg11[%c110_272, %c0_273] : memref<184x24xf32, #tpu.memory_space<vmem>>, vector<16x24xf32>
    %c1_274 = arith.constant 1 : index
    %c2_275 = arith.constant 2 : index
    %c0_276 = arith.constant 0 : index
    %416 = vector.load %arg6[%c1_274, %c2_275, %c0_276] : memref<3x3x24xf32, #tpu.memory_space<vmem>>, vector<1x1x24xf32>
    %417 = vector.shape_cast %416 : vector<1x1x24xf32> to vector<24xf32>
    %418 = vector.shape_cast %417 : vector<24xf32> to vector<1x24xf32>
    %419 = vector.broadcast %418 : vector<1x24xf32> to vector<16x24xf32>
    %420 = arith.mulf %415, %419 : vector<16x24xf32>
    %421 = arith.addf %414, %420 : vector<16x24xf32>
    %c126 = arith.constant 126 : index
    %c0_277 = arith.constant 0 : index
    %422 = vector.load %arg11[%c126, %c0_277] : memref<184x24xf32, #tpu.memory_space<vmem>>, vector<16x24xf32>
    %c2_278 = arith.constant 2 : index
    %c0_279 = arith.constant 0 : index
    %c0_280 = arith.constant 0 : index
    %423 = vector.load %arg6[%c2_278, %c0_279, %c0_280] : memref<3x3x24xf32, #tpu.memory_space<vmem>>, vector<1x1x24xf32>
    %424 = vector.shape_cast %423 : vector<1x1x24xf32> to vector<24xf32>
    %425 = vector.shape_cast %424 : vector<24xf32> to vector<1x24xf32>
    %426 = vector.broadcast %425 : vector<1x24xf32> to vector<16x24xf32>
    %427 = arith.mulf %422, %426 : vector<16x24xf32>
    %428 = arith.addf %421, %427 : vector<16x24xf32>
    %c127 = arith.constant 127 : index
    %c0_281 = arith.constant 0 : index
    %429 = vector.load %arg11[%c127, %c0_281] : memref<184x24xf32, #tpu.memory_space<vmem>>, vector<16x24xf32>
    %c2_282 = arith.constant 2 : index
    %c1_283 = arith.constant 1 : index
    %c0_284 = arith.constant 0 : index
    %430 = vector.load %arg6[%c2_282, %c1_283, %c0_284] : memref<3x3x24xf32, #tpu.memory_space<vmem>>, vector<1x1x24xf32>
    %431 = vector.shape_cast %430 : vector<1x1x24xf32> to vector<24xf32>
    %432 = vector.shape_cast %431 : vector<24xf32> to vector<1x24xf32>
    %433 = vector.broadcast %432 : vector<1x24xf32> to vector<16x24xf32>
    %434 = arith.mulf %429, %433 : vector<16x24xf32>
    %435 = arith.addf %428, %434 : vector<16x24xf32>
    %c128 = arith.constant 128 : index
    %c0_285 = arith.constant 0 : index
    %436 = vector.load %arg11[%c128, %c0_285] : memref<184x24xf32, #tpu.memory_space<vmem>>, vector<16x24xf32>
    %c2_286 = arith.constant 2 : index
    %c2_287 = arith.constant 2 : index
    %c0_288 = arith.constant 0 : index
    %437 = vector.load %arg6[%c2_286, %c2_287, %c0_288] : memref<3x3x24xf32, #tpu.memory_space<vmem>>, vector<1x1x24xf32>
    %438 = vector.shape_cast %437 : vector<1x1x24xf32> to vector<24xf32>
    %439 = vector.shape_cast %438 : vector<24xf32> to vector<1x24xf32>
    %440 = vector.broadcast %439 : vector<1x24xf32> to vector<16x24xf32>
    %441 = arith.mulf %436, %440 : vector<16x24xf32>
    %442 = arith.addf %435, %441 : vector<16x24xf32>
    %c0_289 = arith.constant 0 : index
    %c0_290 = arith.constant 0 : index
    %443 = vector.load %arg7[%c0_289, %c0_290] : memref<1x24xf32, #tpu.memory_space<vmem>>, vector<1x24xf32>
    %444 = vector.broadcast %443 : vector<1x24xf32> to vector<16x24xf32>
    %445 = arith.addf %442, %444 : vector<16x24xf32>
    %cst_291 = arith.constant 0.000000e+00 : f32
    %cst_292 = arith.constant 6.000000e+00 : f32
    %446 = vector.broadcast %cst_291 : f32 to vector<16x24xf32>
    %447 = arith.maximumf %446, %445 : vector<16x24xf32>
    %448 = vector.broadcast %cst_292 : f32 to vector<16x24xf32>
    %449 = arith.minimumf %448, %447 : vector<16x24xf32>
    %c80 = arith.constant 80 : index
    %c0_293 = arith.constant 0 : index
    %450 = vector.load %arg12[%c80, %c0_293] : memref<128x24xf32, #tpu.memory_space<vmem>>, vector<16x24xf32>
    tpu.vector_store %arg12[%c80, %c0_293], %449 {strides = array<i32>} : memref<128x24xf32, #tpu.memory_space<vmem>>, vector<16x24xf32>,
    %cst_294 = arith.constant 0.000000e+00 : f32
    %451 = vector.broadcast %cst_294 : f32 to vector<16x24xf32>
    %c108_295 = arith.constant 108 : index
    %c0_296 = arith.constant 0 : index
    %452 = vector.load %arg11[%c108_295, %c0_296] : memref<184x24xf32, #tpu.memory_space<vmem>>, vector<16x24xf32>
    %c0_297 = arith.constant 0 : index
    %c0_298 = arith.constant 0 : index
    %c0_299 = arith.constant 0 : index
    %453 = vector.load %arg6[%c0_297, %c0_298, %c0_299] : memref<3x3x24xf32, #tpu.memory_space<vmem>>, vector<1x1x24xf32>
    %454 = vector.shape_cast %453 : vector<1x1x24xf32> to vector<24xf32>
    %455 = vector.shape_cast %454 : vector<24xf32> to vector<1x24xf32>
    %456 = vector.broadcast %455 : vector<1x24xf32> to vector<16x24xf32>
    %457 = arith.mulf %452, %456 : vector<16x24xf32>
    %458 = arith.addf %451, %457 : vector<16x24xf32>
    %c109_300 = arith.constant 109 : index
    %c0_301 = arith.constant 0 : index
    %459 = vector.load %arg11[%c109_300, %c0_301] : memref<184x24xf32, #tpu.memory_space<vmem>>, vector<16x24xf32>
    %c0_302 = arith.constant 0 : index
    %c1_303 = arith.constant 1 : index
    %c0_304 = arith.constant 0 : index
    %460 = vector.load %arg6[%c0_302, %c1_303, %c0_304] : memref<3x3x24xf32, #tpu.memory_space<vmem>>, vector<1x1x24xf32>
    %461 = vector.shape_cast %460 : vector<1x1x24xf32> to vector<24xf32>
    %462 = vector.shape_cast %461 : vector<24xf32> to vector<1x24xf32>
    %463 = vector.broadcast %462 : vector<1x24xf32> to vector<16x24xf32>
    %464 = arith.mulf %459, %463 : vector<16x24xf32>
    %465 = arith.addf %458, %464 : vector<16x24xf32>
    %c110_305 = arith.constant 110 : index
    %c0_306 = arith.constant 0 : index
    %466 = vector.load %arg11[%c110_305, %c0_306] : memref<184x24xf32, #tpu.memory_space<vmem>>, vector<16x24xf32>
    %c0_307 = arith.constant 0 : index
    %c2_308 = arith.constant 2 : index
    %c0_309 = arith.constant 0 : index
    %467 = vector.load %arg6[%c0_307, %c2_308, %c0_309] : memref<3x3x24xf32, #tpu.memory_space<vmem>>, vector<1x1x24xf32>
    %468 = vector.shape_cast %467 : vector<1x1x24xf32> to vector<24xf32>
    %469 = vector.shape_cast %468 : vector<24xf32> to vector<1x24xf32>
    %470 = vector.broadcast %469 : vector<1x24xf32> to vector<16x24xf32>
    %471 = arith.mulf %466, %470 : vector<16x24xf32>
    %472 = arith.addf %465, %471 : vector<16x24xf32>
    %c126_310 = arith.constant 126 : index
    %c0_311 = arith.constant 0 : index
    %473 = vector.load %arg11[%c126_310, %c0_311] : memref<184x24xf32, #tpu.memory_space<vmem>>, vector<16x24xf32>
    %c1_312 = arith.constant 1 : index
    %c0_313 = arith.constant 0 : index
    %c0_314 = arith.constant 0 : index
    %474 = vector.load %arg6[%c1_312, %c0_313, %c0_314] : memref<3x3x24xf32, #tpu.memory_space<vmem>>, vector<1x1x24xf32>
    %475 = vector.shape_cast %474 : vector<1x1x24xf32> to vector<24xf32>
    %476 = vector.shape_cast %475 : vector<24xf32> to vector<1x24xf32>
    %477 = vector.broadcast %476 : vector<1x24xf32> to vector<16x24xf32>
    %478 = arith.mulf %473, %477 : vector<16x24xf32>
    %479 = arith.addf %472, %478 : vector<16x24xf32>
    %c127_315 = arith.constant 127 : index
    %c0_316 = arith.constant 0 : index
    %480 = vector.load %arg11[%c127_315, %c0_316] : memref<184x24xf32, #tpu.memory_space<vmem>>, vector<16x24xf32>
    %c1_317 = arith.constant 1 : index
    %c1_318 = arith.constant 1 : index
    %c0_319 = arith.constant 0 : index
    %481 = vector.load %arg6[%c1_317, %c1_318, %c0_319] : memref<3x3x24xf32, #tpu.memory_space<vmem>>, vector<1x1x24xf32>
    %482 = vector.shape_cast %481 : vector<1x1x24xf32> to vector<24xf32>
    %483 = vector.shape_cast %482 : vector<24xf32> to vector<1x24xf32>
    %484 = vector.broadcast %483 : vector<1x24xf32> to vector<16x24xf32>
    %485 = arith.mulf %480, %484 : vector<16x24xf32>
    %486 = arith.addf %479, %485 : vector<16x24xf32>
    %c128_320 = arith.constant 128 : index
    %c0_321 = arith.constant 0 : index
    %487 = vector.load %arg11[%c128_320, %c0_321] : memref<184x24xf32, #tpu.memory_space<vmem>>, vector<16x24xf32>
    %c1_322 = arith.constant 1 : index
    %c2_323 = arith.constant 2 : index
    %c0_324 = arith.constant 0 : index
    %488 = vector.load %arg6[%c1_322, %c2_323, %c0_324] : memref<3x3x24xf32, #tpu.memory_space<vmem>>, vector<1x1x24xf32>
    %489 = vector.shape_cast %488 : vector<1x1x24xf32> to vector<24xf32>
    %490 = vector.shape_cast %489 : vector<24xf32> to vector<1x24xf32>
    %491 = vector.broadcast %490 : vector<1x24xf32> to vector<16x24xf32>
    %492 = arith.mulf %487, %491 : vector<16x24xf32>
    %493 = arith.addf %486, %492 : vector<16x24xf32>
    %c144 = arith.constant 144 : index
    %c0_325 = arith.constant 0 : index
    %494 = vector.load %arg11[%c144, %c0_325] : memref<184x24xf32, #tpu.memory_space<vmem>>, vector<16x24xf32>
    %c2_326 = arith.constant 2 : index
    %c0_327 = arith.constant 0 : index
    %c0_328 = arith.constant 0 : index
    %495 = vector.load %arg6[%c2_326, %c0_327, %c0_328] : memref<3x3x24xf32, #tpu.memory_space<vmem>>, vector<1x1x24xf32>
    %496 = vector.shape_cast %495 : vector<1x1x24xf32> to vector<24xf32>
    %497 = vector.shape_cast %496 : vector<24xf32> to vector<1x24xf32>
    %498 = vector.broadcast %497 : vector<1x24xf32> to vector<16x24xf32>
    %499 = arith.mulf %494, %498 : vector<16x24xf32>
    %500 = arith.addf %493, %499 : vector<16x24xf32>
    %c145 = arith.constant 145 : index
    %c0_329 = arith.constant 0 : index
    %501 = vector.load %arg11[%c145, %c0_329] : memref<184x24xf32, #tpu.memory_space<vmem>>, vector<16x24xf32>
    %c2_330 = arith.constant 2 : index
    %c1_331 = arith.constant 1 : index
    %c0_332 = arith.constant 0 : index
    %502 = vector.load %arg6[%c2_330, %c1_331, %c0_332] : memref<3x3x24xf32, #tpu.memory_space<vmem>>, vector<1x1x24xf32>
    %503 = vector.shape_cast %502 : vector<1x1x24xf32> to vector<24xf32>
    %504 = vector.shape_cast %503 : vector<24xf32> to vector<1x24xf32>
    %505 = vector.broadcast %504 : vector<1x24xf32> to vector<16x24xf32>
    %506 = arith.mulf %501, %505 : vector<16x24xf32>
    %507 = arith.addf %500, %506 : vector<16x24xf32>
    %c146 = arith.constant 146 : index
    %c0_333 = arith.constant 0 : index
    %508 = vector.load %arg11[%c146, %c0_333] : memref<184x24xf32, #tpu.memory_space<vmem>>, vector<16x24xf32>
    %c2_334 = arith.constant 2 : index
    %c2_335 = arith.constant 2 : index
    %c0_336 = arith.constant 0 : index
    %509 = vector.load %arg6[%c2_334, %c2_335, %c0_336] : memref<3x3x24xf32, #tpu.memory_space<vmem>>, vector<1x1x24xf32>
    %510 = vector.shape_cast %509 : vector<1x1x24xf32> to vector<24xf32>
    %511 = vector.shape_cast %510 : vector<24xf32> to vector<1x24xf32>
    %512 = vector.broadcast %511 : vector<1x24xf32> to vector<16x24xf32>
    %513 = arith.mulf %508, %512 : vector<16x24xf32>
    %514 = arith.addf %507, %513 : vector<16x24xf32>
    %c0_337 = arith.constant 0 : index
    %c0_338 = arith.constant 0 : index
    %515 = vector.load %arg7[%c0_337, %c0_338] : memref<1x24xf32, #tpu.memory_space<vmem>>, vector<1x24xf32>
    %516 = vector.broadcast %515 : vector<1x24xf32> to vector<16x24xf32>
    %517 = arith.addf %514, %516 : vector<16x24xf32>
    %cst_339 = arith.constant 0.000000e+00 : f32
    %cst_340 = arith.constant 6.000000e+00 : f32
    %518 = vector.broadcast %cst_339 : f32 to vector<16x24xf32>
    %519 = arith.maximumf %518, %517 : vector<16x24xf32>
    %520 = vector.broadcast %cst_340 : f32 to vector<16x24xf32>
    %521 = arith.minimumf %520, %519 : vector<16x24xf32>
    %c96 = arith.constant 96 : index
    %c0_341 = arith.constant 0 : index
    %522 = vector.load %arg12[%c96, %c0_341] : memref<128x24xf32, #tpu.memory_space<vmem>>, vector<16x24xf32>
    tpu.vector_store %arg12[%c96, %c0_341], %521 {strides = array<i32>} : memref<128x24xf32, #tpu.memory_space<vmem>>, vector<16x24xf32>,
    %cst_342 = arith.constant 0.000000e+00 : f32
    %523 = vector.broadcast %cst_342 : f32 to vector<16x24xf32>
    %c126_343 = arith.constant 126 : index
    %c0_344 = arith.constant 0 : index
    %524 = vector.load %arg11[%c126_343, %c0_344] : memref<184x24xf32, #tpu.memory_space<vmem>>, vector<16x24xf32>
    %c0_345 = arith.constant 0 : index
    %c0_346 = arith.constant 0 : index
    %c0_347 = arith.constant 0 : index
    %525 = vector.load %arg6[%c0_345, %c0_346, %c0_347] : memref<3x3x24xf32, #tpu.memory_space<vmem>>, vector<1x1x24xf32>
    %526 = vector.shape_cast %525 : vector<1x1x24xf32> to vector<24xf32>
    %527 = vector.shape_cast %526 : vector<24xf32> to vector<1x24xf32>
    %528 = vector.broadcast %527 : vector<1x24xf32> to vector<16x24xf32>
    %529 = arith.mulf %524, %528 : vector<16x24xf32>
    %530 = arith.addf %523, %529 : vector<16x24xf32>
    %c127_348 = arith.constant 127 : index
    %c0_349 = arith.constant 0 : index
    %531 = vector.load %arg11[%c127_348, %c0_349] : memref<184x24xf32, #tpu.memory_space<vmem>>, vector<16x24xf32>
    %c0_350 = arith.constant 0 : index
    %c1_351 = arith.constant 1 : index
    %c0_352 = arith.constant 0 : index
    %532 = vector.load %arg6[%c0_350, %c1_351, %c0_352] : memref<3x3x24xf32, #tpu.memory_space<vmem>>, vector<1x1x24xf32>
    %533 = vector.shape_cast %532 : vector<1x1x24xf32> to vector<24xf32>
    %534 = vector.shape_cast %533 : vector<24xf32> to vector<1x24xf32>
    %535 = vector.broadcast %534 : vector<1x24xf32> to vector<16x24xf32>
    %536 = arith.mulf %531, %535 : vector<16x24xf32>
    %537 = arith.addf %530, %536 : vector<16x24xf32>
    %c128_353 = arith.constant 128 : index
    %c0_354 = arith.constant 0 : index
    %538 = vector.load %arg11[%c128_353, %c0_354] : memref<184x24xf32, #tpu.memory_space<vmem>>, vector<16x24xf32>
    %c0_355 = arith.constant 0 : index
    %c2_356 = arith.constant 2 : index
    %c0_357 = arith.constant 0 : index
    %539 = vector.load %arg6[%c0_355, %c2_356, %c0_357] : memref<3x3x24xf32, #tpu.memory_space<vmem>>, vector<1x1x24xf32>
    %540 = vector.shape_cast %539 : vector<1x1x24xf32> to vector<24xf32>
    %541 = vector.shape_cast %540 : vector<24xf32> to vector<1x24xf32>
    %542 = vector.broadcast %541 : vector<1x24xf32> to vector<16x24xf32>
    %543 = arith.mulf %538, %542 : vector<16x24xf32>
    %544 = arith.addf %537, %543 : vector<16x24xf32>
    %c144_358 = arith.constant 144 : index
    %c0_359 = arith.constant 0 : index
    %545 = vector.load %arg11[%c144_358, %c0_359] : memref<184x24xf32, #tpu.memory_space<vmem>>, vector<16x24xf32>
    %c1_360 = arith.constant 1 : index
    %c0_361 = arith.constant 0 : index
    %c0_362 = arith.constant 0 : index
    %546 = vector.load %arg6[%c1_360, %c0_361, %c0_362] : memref<3x3x24xf32, #tpu.memory_space<vmem>>, vector<1x1x24xf32>
    %547 = vector.shape_cast %546 : vector<1x1x24xf32> to vector<24xf32>
    %548 = vector.shape_cast %547 : vector<24xf32> to vector<1x24xf32>
    %549 = vector.broadcast %548 : vector<1x24xf32> to vector<16x24xf32>
    %550 = arith.mulf %545, %549 : vector<16x24xf32>
    %551 = arith.addf %544, %550 : vector<16x24xf32>
    %c145_363 = arith.constant 145 : index
    %c0_364 = arith.constant 0 : index
    %552 = vector.load %arg11[%c145_363, %c0_364] : memref<184x24xf32, #tpu.memory_space<vmem>>, vector<16x24xf32>
    %c1_365 = arith.constant 1 : index
    %c1_366 = arith.constant 1 : index
    %c0_367 = arith.constant 0 : index
    %553 = vector.load %arg6[%c1_365, %c1_366, %c0_367] : memref<3x3x24xf32, #tpu.memory_space<vmem>>, vector<1x1x24xf32>
    %554 = vector.shape_cast %553 : vector<1x1x24xf32> to vector<24xf32>
    %555 = vector.shape_cast %554 : vector<24xf32> to vector<1x24xf32>
    %556 = vector.broadcast %555 : vector<1x24xf32> to vector<16x24xf32>
    %557 = arith.mulf %552, %556 : vector<16x24xf32>
    %558 = arith.addf %551, %557 : vector<16x24xf32>
    %c146_368 = arith.constant 146 : index
    %c0_369 = arith.constant 0 : index
    %559 = vector.load %arg11[%c146_368, %c0_369] : memref<184x24xf32, #tpu.memory_space<vmem>>, vector<16x24xf32>
    %c1_370 = arith.constant 1 : index
    %c2_371 = arith.constant 2 : index
    %c0_372 = arith.constant 0 : index
    %560 = vector.load %arg6[%c1_370, %c2_371, %c0_372] : memref<3x3x24xf32, #tpu.memory_space<vmem>>, vector<1x1x24xf32>
    %561 = vector.shape_cast %560 : vector<1x1x24xf32> to vector<24xf32>
    %562 = vector.shape_cast %561 : vector<24xf32> to vector<1x24xf32>
    %563 = vector.broadcast %562 : vector<1x24xf32> to vector<16x24xf32>
    %564 = arith.mulf %559, %563 : vector<16x24xf32>
    %565 = arith.addf %558, %564 : vector<16x24xf32>
    %c162 = arith.constant 162 : index
    %c0_373 = arith.constant 0 : index
    %566 = vector.load %arg11[%c162, %c0_373] : memref<184x24xf32, #tpu.memory_space<vmem>>, vector<16x24xf32>
    %c2_374 = arith.constant 2 : index
    %c0_375 = arith.constant 0 : index
    %c0_376 = arith.constant 0 : index
    %567 = vector.load %arg6[%c2_374, %c0_375, %c0_376] : memref<3x3x24xf32, #tpu.memory_space<vmem>>, vector<1x1x24xf32>
    %568 = vector.shape_cast %567 : vector<1x1x24xf32> to vector<24xf32>
    %569 = vector.shape_cast %568 : vector<24xf32> to vector<1x24xf32>
    %570 = vector.broadcast %569 : vector<1x24xf32> to vector<16x24xf32>
    %571 = arith.mulf %566, %570 : vector<16x24xf32>
    %572 = arith.addf %565, %571 : vector<16x24xf32>
    %c163 = arith.constant 163 : index
    %c0_377 = arith.constant 0 : index
    %573 = vector.load %arg11[%c163, %c0_377] : memref<184x24xf32, #tpu.memory_space<vmem>>, vector<16x24xf32>
    %c2_378 = arith.constant 2 : index
    %c1_379 = arith.constant 1 : index
    %c0_380 = arith.constant 0 : index
    %574 = vector.load %arg6[%c2_378, %c1_379, %c0_380] : memref<3x3x24xf32, #tpu.memory_space<vmem>>, vector<1x1x24xf32>
    %575 = vector.shape_cast %574 : vector<1x1x24xf32> to vector<24xf32>
    %576 = vector.shape_cast %575 : vector<24xf32> to vector<1x24xf32>
    %577 = vector.broadcast %576 : vector<1x24xf32> to vector<16x24xf32>
    %578 = arith.mulf %573, %577 : vector<16x24xf32>
    %579 = arith.addf %572, %578 : vector<16x24xf32>
    %c164 = arith.constant 164 : index
    %c0_381 = arith.constant 0 : index
    %580 = vector.load %arg11[%c164, %c0_381] : memref<184x24xf32, #tpu.memory_space<vmem>>, vector<16x24xf32>
    %c2_382 = arith.constant 2 : index
    %c2_383 = arith.constant 2 : index
    %c0_384 = arith.constant 0 : index
    %581 = vector.load %arg6[%c2_382, %c2_383, %c0_384] : memref<3x3x24xf32, #tpu.memory_space<vmem>>, vector<1x1x24xf32>
    %582 = vector.shape_cast %581 : vector<1x1x24xf32> to vector<24xf32>
    %583 = vector.shape_cast %582 : vector<24xf32> to vector<1x24xf32>
    %584 = vector.broadcast %583 : vector<1x24xf32> to vector<16x24xf32>
    %585 = arith.mulf %580, %584 : vector<16x24xf32>
    %586 = arith.addf %579, %585 : vector<16x24xf32>
    %c0_385 = arith.constant 0 : index
    %c0_386 = arith.constant 0 : index
    %587 = vector.load %arg7[%c0_385, %c0_386] : memref<1x24xf32, #tpu.memory_space<vmem>>, vector<1x24xf32>
    %588 = vector.broadcast %587 : vector<1x24xf32> to vector<16x24xf32>
    %589 = arith.addf %586, %588 : vector<16x24xf32>
    %cst_387 = arith.constant 0.000000e+00 : f32
    %cst_388 = arith.constant 6.000000e+00 : f32
    %590 = vector.broadcast %cst_387 : f32 to vector<16x24xf32>
    %591 = arith.maximumf %590, %589 : vector<16x24xf32>
    %592 = vector.broadcast %cst_388 : f32 to vector<16x24xf32>
    %593 = arith.minimumf %592, %591 : vector<16x24xf32>
    %c112 = arith.constant 112 : index
    %c0_389 = arith.constant 0 : index
    %594 = vector.load %arg12[%c112, %c0_389] : memref<128x24xf32, #tpu.memory_space<vmem>>, vector<16x24xf32>
    tpu.vector_store %arg12[%c112, %c0_389], %593 {strides = array<i32>} : memref<128x24xf32, #tpu.memory_space<vmem>>, vector<16x24xf32>,
    %c0_390 = arith.constant 0 : index
    %c0_391 = arith.constant 0 : index
    %595 = vector.load %arg12[%c0_390, %c0_391] : memref<128x24xf32, #tpu.memory_space<vmem>>, vector<128x24xf32>
    %596 = arith.truncf %595 : vector<128x24xf32> to vector<128x24xbf16>
    %c0_392 = arith.constant 0 : index
    %c0_393 = arith.constant 0 : index
    %597 = vector.load %arg8[%c0_392, %c0_393] : memref<24x4xbf16, #tpu.memory_space<vmem>>, vector<24x4xbf16>
    %cst_394 = arith.constant dense<0.000000e+00> : vector<128x4xf32>
    %598 = tpu.matmul %596, %597, %cst_394 {dimension_numbers = #tpu.dot_dimension_numbers<[1], [0], [0], [1], [0, 0, 1, 1], [], []>} : vector<128x24xbf16>, vector<24x4xbf16>, vector<128x4xf32> -> vector<128x4xf32>
    %c0_395 = arith.constant 0 : index
    %c0_396 = arith.constant 0 : index
    %599 = vector.load %arg9[%c0_395, %c0_396] : memref<1x4xf32, #tpu.memory_space<vmem>>, vector<1x4xf32>
    %600 = vector.broadcast %599 : vector<1x4xf32> to vector<128x4xf32>
    %601 = arith.addf %598, %600 : vector<128x4xf32>
    %602 = vector.extract_strided_slice %601 {offsets = [0, 0], sizes = [16, 4], strides = [1, 1]} : vector<128x4xf32> to vector<16x4xf32>
    %603 = vector.extract_strided_slice %4 {offsets = [19, 0], sizes = [16, 4], strides = [1, 1]} : vector<184x4xbf16> to vector<16x4xbf16>
    %604 = arith.extf %603 : vector<16x4xbf16> to vector<16x4xf32>
    %605 = arith.addf %602, %604 : vector<16x4xf32>
    %c0_397 = arith.constant 0 : index
    %c0_398 = arith.constant 0 : index
    %c0_399 = arith.constant 0 : index
    %c0_400 = arith.constant 0 : index
    %606 = vector.load %arg10[%c0_397, %c0_398, %c0_399, %c0_400] : memref<1x8x16x4xf32, #tpu.memory_space<vmem>>, vector<1x1x16x4xf32>
    %607 = vector.shape_cast %606 : vector<1x1x16x4xf32> to vector<16x4xf32>
    %608 = vector.shape_cast %605 : vector<16x4xf32> to vector<1x1x16x4xf32>
    tpu.vector_store %arg10[%c0_397, %c0_398, %c0_399, %c0_400], %608 {strides = array<i32>} : memref<1x8x16x4xf32, #tpu.memory_space<vmem>>, vector<1x1x16x4xf32>,
    %609 = vector.extract_strided_slice %601 {offsets = [16, 0], sizes = [16, 4], strides = [1, 1]} : vector<128x4xf32> to vector<16x4xf32>
    %610 = vector.extract_strided_slice %4 {offsets = [37, 0], sizes = [16, 4], strides = [1, 1]} : vector<184x4xbf16> to vector<16x4xbf16>
    %611 = arith.extf %610 : vector<16x4xbf16> to vector<16x4xf32>
    %612 = arith.addf %609, %611 : vector<16x4xf32>
    %c0_401 = arith.constant 0 : index
    %c1_402 = arith.constant 1 : index
    %c0_403 = arith.constant 0 : index
    %c0_404 = arith.constant 0 : index
    %613 = vector.load %arg10[%c0_401, %c1_402, %c0_403, %c0_404] : memref<1x8x16x4xf32, #tpu.memory_space<vmem>>, vector<1x1x16x4xf32>
    %614 = vector.shape_cast %613 : vector<1x1x16x4xf32> to vector<16x4xf32>
    %615 = vector.shape_cast %612 : vector<16x4xf32> to vector<1x1x16x4xf32>
    tpu.vector_store %arg10[%c0_401, %c1_402, %c0_403, %c0_404], %615 {strides = array<i32>} : memref<1x8x16x4xf32, #tpu.memory_space<vmem>>, vector<1x1x16x4xf32>,
    %616 = vector.extract_strided_slice %601 {offsets = [32, 0], sizes = [16, 4], strides = [1, 1]} : vector<128x4xf32> to vector<16x4xf32>
    %617 = vector.extract_strided_slice %4 {offsets = [55, 0], sizes = [16, 4], strides = [1, 1]} : vector<184x4xbf16> to vector<16x4xbf16>
    %618 = arith.extf %617 : vector<16x4xbf16> to vector<16x4xf32>
    %619 = arith.addf %616, %618 : vector<16x4xf32>
    %c0_405 = arith.constant 0 : index
    %c2_406 = arith.constant 2 : index
    %c0_407 = arith.constant 0 : index
    %c0_408 = arith.constant 0 : index
    %620 = vector.load %arg10[%c0_405, %c2_406, %c0_407, %c0_408] : memref<1x8x16x4xf32, #tpu.memory_space<vmem>>, vector<1x1x16x4xf32>
    %621 = vector.shape_cast %620 : vector<1x1x16x4xf32> to vector<16x4xf32>
    %622 = vector.shape_cast %619 : vector<16x4xf32> to vector<1x1x16x4xf32>
    tpu.vector_store %arg10[%c0_405, %c2_406, %c0_407, %c0_408], %622 {strides = array<i32>} : memref<1x8x16x4xf32, #tpu.memory_space<vmem>>, vector<1x1x16x4xf32>,
    %623 = vector.extract_strided_slice %601 {offsets = [48, 0], sizes = [16, 4], strides = [1, 1]} : vector<128x4xf32> to vector<16x4xf32>
    %624 = vector.extract_strided_slice %4 {offsets = [73, 0], sizes = [16, 4], strides = [1, 1]} : vector<184x4xbf16> to vector<16x4xbf16>
    %625 = arith.extf %624 : vector<16x4xbf16> to vector<16x4xf32>
    %626 = arith.addf %623, %625 : vector<16x4xf32>
    %c0_409 = arith.constant 0 : index
    %c3 = arith.constant 3 : index
    %c0_410 = arith.constant 0 : index
    %c0_411 = arith.constant 0 : index
    %627 = vector.load %arg10[%c0_409, %c3, %c0_410, %c0_411] : memref<1x8x16x4xf32, #tpu.memory_space<vmem>>, vector<1x1x16x4xf32>
    %628 = vector.shape_cast %627 : vector<1x1x16x4xf32> to vector<16x4xf32>
    %629 = vector.shape_cast %626 : vector<16x4xf32> to vector<1x1x16x4xf32>
    tpu.vector_store %arg10[%c0_409, %c3, %c0_410, %c0_411], %629 {strides = array<i32>} : memref<1x8x16x4xf32, #tpu.memory_space<vmem>>, vector<1x1x16x4xf32>,
    %630 = vector.extract_strided_slice %601 {offsets = [64, 0], sizes = [16, 4], strides = [1, 1]} : vector<128x4xf32> to vector<16x4xf32>
    %631 = vector.extract_strided_slice %4 {offsets = [91, 0], sizes = [16, 4], strides = [1, 1]} : vector<184x4xbf16> to vector<16x4xbf16>
    %632 = arith.extf %631 : vector<16x4xbf16> to vector<16x4xf32>
    %633 = arith.addf %630, %632 : vector<16x4xf32>
    %c0_412 = arith.constant 0 : index
    %c4 = arith.constant 4 : index
    %c0_413 = arith.constant 0 : index
    %c0_414 = arith.constant 0 : index
    %634 = vector.load %arg10[%c0_412, %c4, %c0_413, %c0_414] : memref<1x8x16x4xf32, #tpu.memory_space<vmem>>, vector<1x1x16x4xf32>
    %635 = vector.shape_cast %634 : vector<1x1x16x4xf32> to vector<16x4xf32>
    %636 = vector.shape_cast %633 : vector<16x4xf32> to vector<1x1x16x4xf32>
    tpu.vector_store %arg10[%c0_412, %c4, %c0_413, %c0_414], %636 {strides = array<i32>} : memref<1x8x16x4xf32, #tpu.memory_space<vmem>>, vector<1x1x16x4xf32>,
    %637 = vector.extract_strided_slice %601 {offsets = [80, 0], sizes = [16, 4], strides = [1, 1]} : vector<128x4xf32> to vector<16x4xf32>
    %638 = vector.extract_strided_slice %4 {offsets = [109, 0], sizes = [16, 4], strides = [1, 1]} : vector<184x4xbf16> to vector<16x4xbf16>
    %639 = arith.extf %638 : vector<16x4xbf16> to vector<16x4xf32>
    %640 = arith.addf %637, %639 : vector<16x4xf32>
    %c0_415 = arith.constant 0 : index
    %c5 = arith.constant 5 : index
    %c0_416 = arith.constant 0 : index
    %c0_417 = arith.constant 0 : index
    %641 = vector.load %arg10[%c0_415, %c5, %c0_416, %c0_417] : memref<1x8x16x4xf32, #tpu.memory_space<vmem>>, vector<1x1x16x4xf32>
    %642 = vector.shape_cast %641 : vector<1x1x16x4xf32> to vector<16x4xf32>
    %643 = vector.shape_cast %640 : vector<16x4xf32> to vector<1x1x16x4xf32>
    tpu.vector_store %arg10[%c0_415, %c5, %c0_416, %c0_417], %643 {strides = array<i32>} : memref<1x8x16x4xf32, #tpu.memory_space<vmem>>, vector<1x1x16x4xf32>,
    %644 = vector.extract_strided_slice %601 {offsets = [96, 0], sizes = [16, 4], strides = [1, 1]} : vector<128x4xf32> to vector<16x4xf32>
    %645 = vector.extract_strided_slice %4 {offsets = [127, 0], sizes = [16, 4], strides = [1, 1]} : vector<184x4xbf16> to vector<16x4xbf16>
    %646 = arith.extf %645 : vector<16x4xbf16> to vector<16x4xf32>
    %647 = arith.addf %644, %646 : vector<16x4xf32>
    %c0_418 = arith.constant 0 : index
    %c6 = arith.constant 6 : index
    %c0_419 = arith.constant 0 : index
    %c0_420 = arith.constant 0 : index
    %648 = vector.load %arg10[%c0_418, %c6, %c0_419, %c0_420] : memref<1x8x16x4xf32, #tpu.memory_space<vmem>>, vector<1x1x16x4xf32>
    %649 = vector.shape_cast %648 : vector<1x1x16x4xf32> to vector<16x4xf32>
    %650 = vector.shape_cast %647 : vector<16x4xf32> to vector<1x1x16x4xf32>
    tpu.vector_store %arg10[%c0_418, %c6, %c0_419, %c0_420], %650 {strides = array<i32>} : memref<1x8x16x4xf32, #tpu.memory_space<vmem>>, vector<1x1x16x4xf32>,
    %651 = vector.extract_strided_slice %601 {offsets = [112, 0], sizes = [16, 4], strides = [1, 1]} : vector<128x4xf32> to vector<16x4xf32>
    %652 = vector.extract_strided_slice %4 {offsets = [145, 0], sizes = [16, 4], strides = [1, 1]} : vector<184x4xbf16> to vector<16x4xbf16>
    %653 = arith.extf %652 : vector<16x4xbf16> to vector<16x4xf32>
    %654 = arith.addf %651, %653 : vector<16x4xf32>
    %c0_421 = arith.constant 0 : index
    %c7 = arith.constant 7 : index
    %c0_422 = arith.constant 0 : index
    %c0_423 = arith.constant 0 : index
    %655 = vector.load %arg10[%c0_421, %c7, %c0_422, %c0_423] : memref<1x8x16x4xf32, #tpu.memory_space<vmem>>, vector<1x1x16x4xf32>
    %656 = vector.shape_cast %655 : vector<1x1x16x4xf32> to vector<16x4xf32>
    %657 = vector.shape_cast %654 : vector<16x4xf32> to vector<1x1x16x4xf32>
    tpu.vector_store %arg10[%c0_421, %c7, %c0_422, %c0_423], %657 {strides = array<i32>} : memref<1x8x16x4xf32, #tpu.memory_space<vmem>>, vector<1x1x16x4xf32>,
    return
  }
  func.func @transform_0(%arg0: i32, %arg1: i32) -> (i32, i32, i32) {
    %c0_i32 = arith.constant 0 : i32
    %c0_i32_0 = arith.constant 0 : i32
    %c0_i32_1 = arith.constant 0 : i32
    return %arg0, %c0_i32, %c0_i32_0 : i32, i32, i32
  }
  func.func @transform_1(%arg0: i32, %arg1: i32) -> (i32, i32) {
    %c0_i32 = arith.constant 0 : i32
    %c0_i32_0 = arith.constant 0 : i32
    %c0_i32_1 = arith.constant 0 : i32
    return %c0_i32, %c0_i32_0 : i32, i32
  }
  func.func @transform_2(%arg0: i32, %arg1: i32) -> (i32, i32) {
    %c0_i32 = arith.constant 0 : i32
    %c0_i32_0 = arith.constant 0 : i32
    %c0_i32_1 = arith.constant 0 : i32
    return %c0_i32, %c0_i32_0 : i32, i32
  }
  func.func @transform_3(%arg0: i32, %arg1: i32) -> (i32, i32) {
    %c0_i32 = arith.constant 0 : i32
    %c0_i32_0 = arith.constant 0 : i32
    %c0_i32_1 = arith.constant 0 : i32
    return %c0_i32, %c0_i32_0 : i32, i32
  }
  func.func @transform_4(%arg0: i32, %arg1: i32) -> (i32, i32, i32) {
    %c0_i32 = arith.constant 0 : i32
    %c0_i32_0 = arith.constant 0 : i32
    %c0_i32_1 = arith.constant 0 : i32
    %c0_i32_2 = arith.constant 0 : i32
    return %c0_i32, %c0_i32_0, %c0_i32_1 : i32, i32, i32
  }
  func.func @transform_5(%arg0: i32, %arg1: i32) -> (i32, i32) {
    %c0_i32 = arith.constant 0 : i32
    %c0_i32_0 = arith.constant 0 : i32
    %c0_i32_1 = arith.constant 0 : i32
    return %c0_i32, %c0_i32_0 : i32, i32
  }
  func.func @transform_6(%arg0: i32, %arg1: i32) -> (i32, i32) {
    %c0_i32 = arith.constant 0 : i32
    %c0_i32_0 = arith.constant 0 : i32
    %c0_i32_1 = arith.constant 0 : i32
    return %c0_i32, %c0_i32_0 : i32, i32
  }
  func.func @transform_7(%arg0: i32, %arg1: i32) -> (i32, i32) {
    %c0_i32 = arith.constant 0 : i32
    %c0_i32_0 = arith.constant 0 : i32
    %c0_i32_1 = arith.constant 0 : i32
    return %c0_i32, %c0_i32_0 : i32, i32
  }
  func.func @transform_8(%arg0: i32, %arg1: i32) -> (i32, i32, i32, i32) {
    %c0_i32 = arith.constant 0 : i32
    %c0_i32_0 = arith.constant 0 : i32
    %c0_i32_1 = arith.constant 0 : i32
    return %arg0, %arg1, %c0_i32, %c0_i32_0 : i32, i32, i32, i32
  }
}

</mosaic_0001>

<llo_original>
// kernel: tpu_custom_call.1
$region0: #{tpu_custom_call.1}
  #allocation0 [shape = 'u32[]', space=smem, size = 0x4, offset = 0x4, fixed_abs, tag = 'smem constant byte address 0x4 - core index']
  #allocation1 [shape = 'u32[144,128]{1,0:T(1,128)}', space=vmem, size = 0x12000, scoped, tag = 'internal scratch']
  #allocation2 [shape = 'f32[184,24]{1,0:T(8,128)}', space=vmem, size = 0x17000, scoped, tag = 'scratch operand']
  #allocation3 [shape = 'f32[128,24]{1,0:T(8,128)}', space=vmem, size = 0x10000, scoped, tag = 'scratch operand']
  %s0 = inlined_call_operand.vmem [shape: bf16[2,328,4], index: 0, kind: input, shape index: {}]
  %s1 = inlined_call_operand.vmem [shape: f32[328,1], index: 1, kind: input, shape index: {}]
  %s2 = inlined_call_operand.vmem [shape: bf16[4,24], index: 2, kind: input, shape index: {}]
  %s3 = inlined_call_operand.vmem [shape: f32[1,24], index: 3, kind: input, shape index: {}]
  %s4 = inlined_call_operand.vmem [shape: f32[3,3,24], index: 4, kind: input, shape index: {}]
  %s5 = inlined_call_operand.vmem [shape: f32[1,24], index: 5, kind: input, shape index: {}]
  %s6 = inlined_call_operand.vmem [shape: bf16[24,4], index: 6, kind: input, shape index: {}]
  %s7 = inlined_call_operand.vmem [shape: f32[1,4], index: 7, kind: input, shape index: {}]
  %s8 = inlined_call_operand.vmem [shape: f32[2,16,16,4], index: 8, kind: output, shape index: {}]
  %s9 = sld [smem:[#allocation0]]
  $region65: #{tpu_custom_call.1} parent=0
    _
  %s11 = ssub.s32 1, %s9
  %s12 = scalar_select 0, %s11, %s9
  loop: start=0, step=1, limit=6
  $region2: #{tpu_custom_call.1} parent=0 // loop_pre_header
    _
  $region3: #{tpu_custom_call.1} parent=0 // loop_header
    %s14 = sphi 0, %s18
    %p15 = scmp.ge.s32.totalorder %s14, 6
    %s21 = sphi 0, %s33
    %s22 = sphi 0, %s29
    %s23 = sphi 0, %s21
    %s24 = sphi 0, %s22
    %s25 = sphi 0, %s23
    %s26 = sphi 0, %s24
    %s36 = sphi 0, %s38
    %s39 = sphi 0, %s36
    %s40 = sphi 0, %s39
    %s56 = sphi 0, %s40
    %s60 = sphi 0, %s60
    %s62 = sphi 0, %s60
    %s63 = sphi 0, %s62
    %s77 = sphi 0, %s63
    %s81 = sphi 0, %s81
    %s83 = sphi 0, %s81
    %s84 = sphi 0, %s83
    %s98 = sphi 0, %s84
    %s102 = sphi 0, %s102
    %s104 = sphi 0, %s102
    %s105 = sphi 0, %s104
    %s119 = sphi 0, %s105
    %s123 = sphi 0, %s123
    %s125 = sphi 0, %s123
    %s126 = sphi 0, %s125
    %s140 = sphi 0, %s126
    %s144 = sphi 0, %s144
    %s146 = sphi 0, %s144
    %s147 = sphi 0, %s146
    %s161 = sphi 0, %s147
    %s165 = sphi 0, %s165
    %s167 = sphi 0, %s165
    %s168 = sphi 0, %s167
    %s182 = sphi 0, %s168
    %s186 = sphi 0, %s186
    %s188 = sphi 0, %s186
    %s189 = sphi 0, %s188
    %s203 = sphi 0, %s189
    %s211 = sphi 0, %s213
    %s214 = sphi 0, %s211
    %s215 = sphi 0, %s214
    %s231 = sphi 0, %s215
  $region4: #{tpu_custom_call.1} parent=0 // loop_header_branch
    %17 = sbr.rel (%p15) target = $region8
  $region5: #{tpu_custom_call.1} parent=0 // loop_body
    %s19 = ssub.s32 %s14, 1
    %s20 = ssub.s32 %s14, 2
    %s27 = sadd.s32 1, %s22
    %p28 = scmp.ge.s32.totalorder %s27, 2
    %s29 = scalar_select %p28, 0, %s27
    %s30 = sadd.s32 1, %s21
    %s31 = scalar_select %p28, %s30, %s21
    %p32 = scmp.ge.s32.totalorder %s31, 2
    %s33 = scalar_select %p32, 0, %s31
    %s34 = ssub.s32 %s21, %s33
    %p35 = scmp.eq.s32.totalorder %s34, 0
    %s37 = sadd.s32 %s36, 1
    %s38 = scalar_select %p35, %s36, %s37
    %p41 = pneg %p35
    %p42 = scmp.eq.s32.totalorder %s14, 3
    %p43 = por %p41, %p42
    %p44 = scmp.ne.s32.totalorder %s36, %s39
    %p45 = scmp.eq.s32.totalorder %s14, 0
    %p46 = por %p44, %p45
    %p47 = scmp.ne.s32.totalorder %s36, %s39
    %p48 = scmp.eq.s32.totalorder %s19, 3
    %p49 = por %p47, %p48
    %p50 = scmp.ne.s32.totalorder %s39, %s40
    %p51 = scmp.eq.s32.totalorder %s19, 0
    %p52 = por %p50, %p51
    %p53 = scmp.ne.s32.totalorder %s39, %s40
    %p54 = scmp.eq.s32.totalorder %s20, 3
    %p55 = por %p53, %p54
    %p57 = scmp.ne.s32.totalorder %s40, %s56
    %p58 = scmp.eq.s32.totalorder %s20, 0
    %p59 = por %p57, %p58
    %s61 = sadd.s32 %s60, 1
    %p64 = scmp.eq.s32.totalorder %s14, 3
    %p65 = scmp.ne.s32.totalorder %s60, %s62
    %p66 = scmp.eq.s32.totalorder %s14, 0
    %p67 = por %p65, %p66
    %p68 = scmp.ne.s32.totalorder %s60, %s62
    %p69 = scmp.eq.s32.totalorder %s19, 3
    %p70 = por %p68, %p69
    %p71 = scmp.ne.s32.totalorder %s62, %s63
    %p72 = scmp.eq.s32.totalorder %s19, 0
    %p73 = por %p71, %p72
    %p74 = scmp.ne.s32.totalorder %s62, %s63
    %p75 = scmp.eq.s32.totalorder %s20, 3
    %p76 = por %p74, %p75
    %p78 = scmp.ne.s32.totalorder %s63, %s77
    %p79 = scmp.eq.s32.totalorder %s20, 0
    %p80 = por %p78, %p79
    %s82 = sadd.s32 %s81, 1
    %p85 = scmp.eq.s32.totalorder %s14, 3
    %p86 = scmp.ne.s32.totalorder %s81, %s83
    %p87 = scmp.eq.s32.totalorder %s14, 0
    %p88 = por %p86, %p87
    %p89 = scmp.ne.s32.totalorder %s81, %s83
    %p90 = scmp.eq.s32.totalorder %s19, 3
    %p91 = por %p89, %p90
    %p92 = scmp.ne.s32.totalorder %s83, %s84
    %p93 = scmp.eq.s32.totalorder %s19, 0
    %p94 = por %p92, %p93
    %p95 = scmp.ne.s32.totalorder %s83, %s84
    %p96 = scmp.eq.s32.totalorder %s20, 3
    %p97 = por %p95, %p96
    %p99 = scmp.ne.s32.totalorder %s84, %s98
    %p100 = scmp.eq.s32.totalorder %s20, 0
    %p101 = por %p99, %p100
    %s103 = sadd.s32 %s102, 1
    %p106 = scmp.eq.s32.totalorder %s14, 3
    %p107 = scmp.ne.s32.totalorder %s102, %s104
    %p108 = scmp.eq.s32.totalorder %s14, 0
    %p109 = por %p107, %p108
    %p110 = scmp.ne.s32.totalorder %s102, %s104
    %p111 = scmp.eq.s32.totalorder %s19, 3
    %p112 = por %p110, %p111
    %p113 = scmp.ne.s32.totalorder %s104, %s105
    %p114 = scmp.eq.s32.totalorder %s19, 0
    %p115 = por %p113, %p114
    %p116 = scmp.ne.s32.totalorder %s104, %s105
    %p117 = scmp.eq.s32.totalorder %s20, 3
    %p118 = por %p116, %p117
    %p120 = scmp.ne.s32.totalorder %s105, %s119
    %p121 = scmp.eq.s32.totalorder %s20, 0
    %p122 = por %p120, %p121
    %s124 = sadd.s32 %s123, 1
    %p127 = scmp.eq.s32.totalorder %s14, 3
    %p128 = scmp.ne.s32.totalorder %s123, %s125
    %p129 = scmp.eq.s32.totalorder %s14, 0
    %p130 = por %p128, %p129
    %p131 = scmp.ne.s32.totalorder %s123, %s125
    %p132 = scmp.eq.s32.totalorder %s19, 3
    %p133 = por %p131, %p132
    %p134 = scmp.ne.s32.totalorder %s125, %s126
    %p135 = scmp.eq.s32.totalorder %s19, 0
    %p136 = por %p134, %p135
    %p137 = scmp.ne.s32.totalorder %s125, %s126
    %p138 = scmp.eq.s32.totalorder %s20, 3
    %p139 = por %p137, %p138
    %p141 = scmp.ne.s32.totalorder %s126, %s140
    %p142 = scmp.eq.s32.totalorder %s20, 0
    %p143 = por %p141, %p142
    %s145 = sadd.s32 %s144, 1
    %p148 = scmp.eq.s32.totalorder %s14, 3
    %p149 = scmp.ne.s32.totalorder %s144, %s146
    %p150 = scmp.eq.s32.totalorder %s14, 0
    %p151 = por %p149, %p150
    %p152 = scmp.ne.s32.totalorder %s144, %s146
    %p153 = scmp.eq.s32.totalorder %s19, 3
    %p154 = por %p152, %p153
    %p155 = scmp.ne.s32.totalorder %s146, %s147
    %p156 = scmp.eq.s32.totalorder %s19, 0
    %p157 = por %p155, %p156
    %p158 = scmp.ne.s32.totalorder %s146, %s147
    %p159 = scmp.eq.s32.totalorder %s20, 3
    %p160 = por %p158, %p159
    %p162 = scmp.ne.s32.totalorder %s147, %s161
    %p163 = scmp.eq.s32.totalorder %s20, 0
    %p164 = por %p162, %p163
    %s166 = sadd.s32 %s165, 1
    %p169 = scmp.eq.s32.totalorder %s14, 3
    %p170 = scmp.ne.s32.totalorder %s165, %s167
    %p171 = scmp.eq.s32.totalorder %s14, 0
    %p172 = por %p170, %p171
    %p173 = scmp.ne.s32.totalorder %s165, %s167
    %p174 = scmp.eq.s32.totalorder %s19, 3
    %p175 = por %p173, %p174
    %p176 = scmp.ne.s32.totalorder %s167, %s168
    %p177 = scmp.eq.s32.totalorder %s19, 0
    %p178 = por %p176, %p177
    %p179 = scmp.ne.s32.totalorder %s167, %s168
    %p180 = scmp.eq.s32.totalorder %s20, 3
    %p181 = por %p179, %p180
    %p183 = scmp.ne.s32.totalorder %s168, %s182
    %p184 = scmp.eq.s32.totalorder %s20, 0
    %p185 = por %p183, %p184
    %s187 = sadd.s32 %s186, 1
    %p190 = scmp.eq.s32.totalorder %s14, 3
    %p191 = scmp.ne.s32.totalorder %s186, %s188
    %p192 = scmp.eq.s32.totalorder %s14, 0
    %p193 = por %p191, %p192
    %p194 = scmp.ne.s32.totalorder %s186, %s188
    %p195 = scmp.eq.s32.totalorder %s19, 3
    %p196 = por %p194, %p195
    %p197 = scmp.ne.s32.totalorder %s188, %s189
    %p198 = scmp.eq.s32.totalorder %s19, 0
    %p199 = por %p197, %p198
    %p200 = scmp.ne.s32.totalorder %s188, %s189
    %p201 = scmp.eq.s32.totalorder %s20, 3
    %p202 = por %p200, %p201
    %p204 = scmp.ne.s32.totalorder %s189, %s203
    %p205 = scmp.eq.s32.totalorder %s20, 0
    %p206 = por %p204, %p205
    %s207 = ssub.s32 %s21, %s33
    %s208 = ssub.s32 %s22, %s29
    %s209 = sor.u32 %s207, %s208
    %p210 = scmp.eq.s32.totalorder %s209, 0
    %s212 = sadd.s32 %s211, 1
    %s213 = scalar_select %p210, %s211, %s212
    %p216 = pneg %p210
    %p217 = scmp.eq.s32.totalorder %s14, 3
    %p218 = por %p216, %p217
    %p219 = scmp.ne.s32.totalorder %s211, %s214
    %p220 = scmp.eq.s32.totalorder %s14, 0
    %p221 = por %p219, %p220
    %p222 = scmp.ne.s32.totalorder %s211, %s214
    %p223 = scmp.eq.s32.totalorder %s19, 3
    %p224 = por %p222, %p223
    %p225 = scmp.ne.s32.totalorder %s214, %s215
    %p226 = scmp.eq.s32.totalorder %s19, 0
    %p227 = por %p225, %p226
    %p228 = scmp.ne.s32.totalorder %s214, %s215
    %p229 = scmp.eq.s32.totalorder %s20, 3
    %p230 = por %p228, %p229
    %p232 = scmp.ne.s32.totalorder %s215, %s231
    %p233 = scmp.eq.s32.totalorder %s20, 0
    %p234 = por %p232, %p233
    %p235 = scmp.le.s32.totalorder 1, %s14
    %p236 = scmp.lt.s32.totalorder %s14, 5
    %p237 = pnand %p235, %p236
    %p238 = pneg %p237
    // Predicated region
    $region9: #{tpu_custom_call.1} parent=5 // pred_check
      _
    $region10: #{tpu_custom_call.1} parent=5 // pred_check_branch
      %240 = sbr.rel (%p237) target = $region12
    $region11: #{tpu_custom_call.1} parent=5 // pred_region
      %s241 = ssub.s32 %s14, 1
      // Predicated region
      $region13: #{tpu_custom_call.1} parent=11 // pred_check
        %p242 = pneg %p73
      $region14: #{tpu_custom_call.1} parent=11 // pred_check_branch
        %244 = sbr.rel (%p242) target = $region16
      $region15: #{tpu_custom_call.1} parent=11 // pred_region
        _
      $region16: #{tpu_custom_call.1} parent=11 // pred_fallthru
        _
      // Predicated region
      $region17: #{tpu_custom_call.1} parent=11 // pred_check
        %p245 = pneg %p94
      $region18: #{tpu_custom_call.1} parent=11 // pred_check_branch
        %247 = sbr.rel (%p245) target = $region20
      $region19: #{tpu_custom_call.1} parent=11 // pred_region
        _
      $region20: #{tpu_custom_call.1} parent=11 // pred_fallthru
        _
      // Predicated region
      $region21: #{tpu_custom_call.1} parent=11 // pred_check
        %p248 = pneg %p115
      $region22: #{tpu_custom_call.1} parent=11 // pred_check_branch
        %250 = sbr.rel (%p248) target = $region24
      $region23: #{tpu_custom_call.1} parent=11 // pred_region
        _
      $region24: #{tpu_custom_call.1} parent=11 // pred_fallthru
        _
      // Predicated region
      $region25: #{tpu_custom_call.1} parent=11 // pred_check
        %p251 = pneg %p136
      $region26: #{tpu_custom_call.1} parent=11 // pred_check_branch
        %253 = sbr.rel (%p251) target = $region28
      $region27: #{tpu_custom_call.1} parent=11 // pred_region
        _
      $region28: #{tpu_custom_call.1} parent=11 // pred_fallthru
        _
      // Predicated region
      $region29: #{tpu_custom_call.1} parent=11 // pred_check
        %p254 = pneg %p157
      $region30: #{tpu_custom_call.1} parent=11 // pred_check_branch
        %256 = sbr.rel (%p254) target = $region32
      $region31: #{tpu_custom_call.1} parent=11 // pred_region
        _
      $region32: #{tpu_custom_call.1} parent=11 // pred_fallthru
        _
      // Predicated region
      $region33: #{tpu_custom_call.1} parent=11 // pred_check
        %p257 = pneg %p178
      $region34: #{tpu_custom_call.1} parent=11 // pred_check_branch
        %259 = sbr.rel (%p257) target = $region36
      $region35: #{tpu_custom_call.1} parent=11 // pred_region
        _
      $region36: #{tpu_custom_call.1} parent=11 // pred_fallthru
        _
      // Predicated region
      $region37: #{tpu_custom_call.1} parent=11 // pred_check
        %p260 = pneg %p199
      $region38: #{tpu_custom_call.1} parent=11 // pred_check_branch
        %262 = sbr.rel (%p260) target = $region40
      $region39: #{tpu_custom_call.1} parent=11 // pred_region
        _
      $region40: #{tpu_custom_call.1} parent=11 // pred_fallthru
        _
    $region12: #{tpu_custom_call.1} parent=5 // pred_fallthru
      _
    %p263 = scmp.lt.s32.totalorder %s14, 4
    // Predicated region
    $region41: #{tpu_custom_call.1} parent=5 // pred_check
      %p264 = pneg %p263
    $region42: #{tpu_custom_call.1} parent=5 // pred_check_branch
      %266 = sbr.rel (%p264) target = $region44
    $region43: #{tpu_custom_call.1} parent=5 // pred_region
      // Predicated region
      $region45: #{tpu_custom_call.1} parent=43 // pred_check
        %p267 = pneg %p46
      $region46: #{tpu_custom_call.1} parent=43 // pred_check_branch
        %269 = sbr.rel (%p267) target = $region48
      $region47: #{tpu_custom_call.1} parent=43 // pred_region
        %p270 = scmp.lt.s32.totalorder %s21, 1
        %s271 = scalar_select %p270, %s21, 1
        %s272 = smul.addr %s271, 41
        %s273 = smul.addr %s272, 4
        %s274 = scalar_lea.vmem %s0, %s273
      $region48: #{tpu_custom_call.1} parent=43 // pred_fallthru
        _
    $region44: #{tpu_custom_call.1} parent=5 // pred_fallthru
      _
    %p275 = scmp.le.s32.totalorder 1, %s14
    %p276 = scmp.lt.s32.totalorder %s14, 5
    %p277 = pnand %p275, %p276
    %p278 = pneg %p277
    // Predicated region
    $region49: #{tpu_custom_call.1} parent=5 // pred_check
      _
    $region50: #{tpu_custom_call.1} parent=5 // pred_check_branch
      %280 = sbr.rel (%p277) target = $region52
    $region51: #{tpu_custom_call.1} parent=5 // pred_region
      %s281 = ssub.s32 %s14, 1
      %p282 = scmp.lt.s32.totalorder %s23, 1
      %s283 = scalar_select %p282, %s23, 1
      %s284 = smul.addr %s283, 41
      %s285 = smul.addr %s284, 4
      %s286 = scalar_lea.vmem %s0, %s285
      %p287 = pneg %p52
      %p288 = pneg %p49
      %p289 = pneg %p73
      %p290 = pneg %p70
      %p291 = pneg %p94
      %p292 = pneg %p91
      %p293 = pneg %p115
      %p294 = pneg %p112
      %p295 = pneg %p136
      %p296 = pneg %p133
      %p297 = pneg %p157
      %p298 = pneg %p154
      %p299 = pneg %p178
      %p300 = pneg %p175
      %p301 = pneg %p199
      %p302 = pneg %p196
      %p303 = pneg %p227
      %p304 = pneg %p224
      %s305 = smul.u32 8, %s24
      %p306 = scmp.lt.s32.totalorder %s23, 1
      %s307 = scalar_select %p306, %s23, 1
      %p308 = scmp.lt.s32.totalorder %s305, 15
      %s309 = scalar_select %p308, %s305, 15
      %s310 = smul.addr %s309, 2
      %s311 = smul.addr %s307, 32
      %s312 = sadd.s32 %s310, %s311
      %s313 = smul.addr %s312, 8
      %s314 = scalar_lea.vmem %s8, %s313
      %p315 = scmp.lt.s32.totalorder %s23, 1
      %s316 = scalar_select %p315, %s23, 1
      %s317 = smul.addr %s316, 41
      %s318 = smul.addr %s317, 4
      %s319 = scalar_lea.vmem %s0, %s318
      %s320 = smul.u32 8, %s24
      %p321 = scmp.lt.s32.totalorder %s23, 1
      %s322 = scalar_select %p321, %s23, 1
      %p323 = scmp.lt.s32.totalorder %s320, 15
      %s324 = scalar_select %p323, %s320, 15
      %s325 = smul.addr %s324, 2
      %s326 = smul.addr %s322, 32
      %s327 = sadd.s32 %s325, %s326
      %s328 = smul.addr %s327, 8
      %s329 = scalar_lea.vmem %s8, %s328
      %s330 = smul.u32 8, %s24
      %s332 = smul.u32 %s24, 144
      %s333 = sshra.s32 %s332, 3
      %s334 = sand.u32 %s332, 7
      %s335 = smul.addr %s333, 4
      %s336 = scalar_lea.vmem %s319, %s335
      %v337 = vld [vmem:[%s336] sm:$0xf]
      %v338 = vld [vmem:[%s336 + $0x4] sm:$0xf]
      %v339 = vld [vmem:[%s336 + $0x8] sm:$0xf]
      %v340 = vld [vmem:[%s336 + $0xc] sm:$0xf]
      %v341 = vld [vmem:[%s336 + $0x10] sm:$0xf]
      %v342 = vld [vmem:[%s336 + $0x14] sm:$0xf]
      %v343 = vld [vmem:[%s336 + $0x18] sm:$0xf]
      %v344 = vld [vmem:[%s336 + $0x1c] sm:$0xf]
      %v345 = vld [vmem:[%s336 + $0x20] sm:$0xf]
      %v346 = vld [vmem:[%s336 + $0x24] sm:$0xf]
      %v347 = vld [vmem:[%s336 + $0x28] sm:$0xf]
      %v348 = vld [vmem:[%s336 + $0x2c] sm:$0xf]
      %v349 = vld [vmem:[%s336 + $0x30] sm:$0xf]
      %v350 = vld [vmem:[%s336 + $0x34] sm:$0xf]
      %v351 = vld [vmem:[%s336 + $0x38] sm:$0xf]
      %v352 = vld [vmem:[%s336 + $0x3c] sm:$0xf]
      %v353 = vld [vmem:[%s336 + $0x40] sm:$0xf]
      %v354 = vld [vmem:[%s336 + $0x44] sm:$0xf]
      %v355 = vld [vmem:[%s336 + $0x48] sm:$0xf]
      %v356 = vld [vmem:[%s336 + $0x4c] sm:$0xf]
      %v357 = vld [vmem:[%s336 + $0x50] sm:$0xf]
      %v358 = vld [vmem:[%s336 + $0x54] sm:$0xf]
      %v359 = vld [vmem:[%s336 + $0x58] sm:$0xf]
      %v360 = vld [vmem:[%s2] sm:$0x3]
      %v361 = vld [vmem:[%s3] sm:$0x1]
      %v363 = vlaneseq
      %v364 = vshrl.u32 %v363, 7
      %v365 = vsub.s32 0, %v364
      %v366 = vrot.slane %v361, %v365
      %v391 = vunpack.c.l.b16 %v337
      %v392 = vunpack.c.l.b16 %v338
      %v393 = vunpack.c.l.b16 %v339
      %v394 = vunpack.c.l.b16 %v340
      %v395 = vunpack.c.l.b16 %v341
      %v396 = vunpack.c.l.b16 %v342
      %v397 = vunpack.c.l.b16 %v343
      %v398 = vunpack.c.l.b16 %v344
      %v399 = vunpack.c.l.b16 %v345
      %v400 = vunpack.c.l.b16 %v346
      %v401 = vunpack.c.l.b16 %v347
      %v402 = vunpack.c.l.b16 %v348
      %v403 = vunpack.c.l.b16 %v349
      %v404 = vunpack.c.l.b16 %v350
      %v405 = vunpack.c.l.b16 %v351
      %v406 = vunpack.c.l.b16 %v352
      %v407 = vunpack.c.l.b16 %v353
      %v408 = vunpack.c.l.b16 %v354
      %v409 = vunpack.c.l.b16 %v355
      %v410 = vunpack.c.l.b16 %v356
      %v411 = vunpack.c.l.b16 %v357
      %v412 = vunpack.c.l.b16 %v358
      %v413 = vunpack.c.l.b16 %v359
      %v414 = vpack.c.b16 %v392, %v391
      %v415 = vpack.c.b16 %v394, %v393
      %v416 = vpack.c.b16 %v396, %v395
      %v417 = vpack.c.b16 %v398, %v397
      %v418 = vpack.c.b16 %v400, %v399
      %v419 = vpack.c.b16 %v402, %v401
      %v420 = vpack.c.b16 %v404, %v403
      %v421 = vpack.c.b16 %v406, %v405
      %v422 = vpack.c.b16 %v408, %v407
      %v423 = vpack.c.b16 %v410, %v409
      %v424 = vpack.c.b16 %v412, %v411
      %v425 = vpack.c.b16 %v413, %v413
      %vm426 = vcmask 31744
      %v428 = vsel %vm426, %v414, 0
      %v431 = vsel %vm426, %v415, 0
      %v434 = vsel %vm426, %v416, 0
      %v437 = vsel %vm426, %v417, 0
      %v440 = vsel %vm426, %v418, 0
      %v443 = vsel %vm426, %v419, 0
      %v446 = vsel %vm426, %v420, 0
      %v449 = vsel %vm426, %v421, 0
      %v452 = vsel %vm426, %v422, 0
      %v455 = vsel %vm426, %v423, 0
      %v458 = vsel %vm426, %v424, 0
      %v461 = vsel %vm426, %v425, 0
      %vm463 = vcmask 1041408
      %v465 = vsel %vm463, %v360, 0
      %467 = vmatprep.subr.bf16.mxu0 0
      %468 = vmatpush1.bf16.msra.mxu0 0
      %469 = vmatprep.subr.bf16.mxu0 0
      %470 = vmatpush1.bf16.msra.mxu0 0
      %471 = vmatprep.subr.bf16.mxu0 0
      %472 = vmatpush1.bf16.msra.mxu0 0
      %473 = vmatprep.subr.bf16.mxu0 0
      %474 = vmatpush1.bf16.msra.mxu0 0
      %475 = vmatprep.subr.bf16.mxu0 0
      %476 = vmatpush1.bf16.msra.mxu0 0
      %477 = vmatprep.subr.bf16.mxu0 0
      %478 = vmatpush1.bf16.msra.mxu0 0
      %479 = vmatprep.subr.bf16.mxu0 0
      %480 = vmatpush1.bf16.msra.mxu0 0
      %481 = vmatprep.subr.bf16.mxu0 0
      %482 = vmatpush1.bf16.msra.mxu0 %v465
      %483 = vmatprep.subr.bf16.mxu0 0
      %484 = vmatpush2.bf16.msra.mxu0 0
      %485 = vmatprep.subr.bf16.mxu0 0
      %486 = vmatpush2.bf16.msra.mxu0 0
      %487 = vmatprep.subr.bf16.mxu0 0
      %488 = vmatpush2.bf16.msra.mxu0 0
      %489 = vmatprep.subr.bf16.mxu0 0
      %490 = vmatpush2.bf16.msra.mxu0 0
      %491 = vmatprep.subr.bf16.mxu0 0
      %492 = vmatpush2.bf16.msra.mxu0 0
      %493 = vmatprep.subr.bf16.mxu0 0
      %494 = vmatpush2.bf16.msra.mxu0 0
      %495 = vmatprep.subr.bf16.mxu0 0
      %496 = vmatpush2.bf16.msra.mxu0 0
      %497 = vmatprep.subr.bf16.mxu0 0
      %498 = vmatpush2.bf16.msra.mxu0 0
      %499 = vmatprep.mubr.bf16.mxu0 0
      %500 = vmatmul.mubr.bf16.gmra.mxu0 %v428
      %v501 = vpop.f32.mrf.mxu0
      %v502 = vadd.f32 %v366, %v501
      %v503 = vpop.f32.mrf.mxu0
      %v504 = vpop.f32.mrf.mxu0
      %v505 = vadd.f32 %v366, %v504
      %v506 = vpop.f32.mrf.mxu0
      %507 = vmatprep.mubr.bf16.mxu0 0
      %508 = vmatmul.mubr.bf16.gmra.mxu0 %v431
      %v509 = vpop.f32.mrf.mxu0
      %v510 = vadd.f32 %v366, %v509
      %v511 = vpop.f32.mrf.mxu0
      %v512 = vpop.f32.mrf.mxu0
      %v513 = vadd.f32 %v366, %v512
      %v514 = vpop.f32.mrf.mxu0
      %515 = vmatprep.mubr.bf16.mxu0 0
      %516 = vmatmul.mubr.bf16.gmra.mxu0 %v434
      %v517 = vpop.f32.mrf.mxu0
      %v518 = vadd.f32 %v366, %v517
      %v519 = vpop.f32.mrf.mxu0
      %v520 = vpop.f32.mrf.mxu0
      %v521 = vadd.f32 %v366, %v520
      %v522 = vpop.f32.mrf.mxu0
      %523 = vmatprep.mubr.bf16.mxu0 0
      %524 = vmatmul.mubr.bf16.gmra.mxu0 %v437
      %v525 = vpop.f32.mrf.mxu0
      %v526 = vadd.f32 %v366, %v525
      %v527 = vpop.f32.mrf.mxu0
      %v528 = vpop.f32.mrf.mxu0
      %v529 = vadd.f32 %v366, %v528
      %v530 = vpop.f32.mrf.mxu0
      %531 = vmatprep.mubr.bf16.mxu0 0
      %532 = vmatmul.mubr.bf16.gmra.mxu0 %v440
      %v533 = vpop.f32.mrf.mxu0
      %v534 = vadd.f32 %v366, %v533
      %v535 = vpop.f32.mrf.mxu0
      %v536 = vpop.f32.mrf.mxu0
      %v537 = vadd.f32 %v366, %v536
      %v538 = vpop.f32.mrf.mxu0
      %539 = vmatprep.mubr.bf16.mxu0 0
      %540 = vmatmul.mubr.bf16.gmra.mxu0 %v443
      %v541 = vpop.f32.mrf.mxu0
      %v542 = vadd.f32 %v366, %v541
      %v543 = vpop.f32.mrf.mxu0
      %v544 = vpop.f32.mrf.mxu0
      %v545 = vadd.f32 %v366, %v544
      %v546 = vpop.f32.mrf.mxu0
      %547 = vmatprep.mubr.bf16.mxu0 0
      %548 = vmatmul.mubr.bf16.gmra.mxu0 %v446
      %v549 = vpop.f32.mrf.mxu0
      %v550 = vadd.f32 %v366, %v549
      %v551 = vpop.f32.mrf.mxu0
      %v552 = vpop.f32.mrf.mxu0
      %v553 = vadd.f32 %v366, %v552
      %v554 = vpop.f32.mrf.mxu0
      %555 = vmatprep.mubr.bf16.mxu0 0
      %556 = vmatmul.mubr.bf16.gmra.mxu0 %v449
      %v557 = vpop.f32.mrf.mxu0
      %v558 = vadd.f32 %v366, %v557
      %v559 = vpop.f32.mrf.mxu0
      %v560 = vpop.f32.mrf.mxu0
      %v561 = vadd.f32 %v366, %v560
      %v562 = vpop.f32.mrf.mxu0
      %563 = vmatprep.mubr.bf16.mxu0 0
      %564 = vmatmul.mubr.bf16.gmra.mxu0 %v452
      %v565 = vpop.f32.mrf.mxu0
      %v566 = vadd.f32 %v366, %v565
      %v567 = vpop.f32.mrf.mxu0
      %v568 = vpop.f32.mrf.mxu0
      %v569 = vadd.f32 %v366, %v568
      %v570 = vpop.f32.mrf.mxu0
      %571 = vmatprep.mubr.bf16.mxu0 0
      %572 = vmatmul.mubr.bf16.gmra.mxu0 %v455
      %v573 = vpop.f32.mrf.mxu0
      %v574 = vadd.f32 %v366, %v573
      %v575 = vpop.f32.mrf.mxu0
      %v576 = vpop.f32.mrf.mxu0
      %v577 = vadd.f32 %v366, %v576
      %v578 = vpop.f32.mrf.mxu0
      %579 = vmatprep.mubr.bf16.mxu0 0
      %580 = vmatmul.mubr.bf16.gmra.mxu0 %v458
      %v581 = vpop.f32.mrf.mxu0
      %v582 = vadd.f32 %v366, %v581
      %v583 = vpop.f32.mrf.mxu0
      %v584 = vpop.f32.mrf.mxu0
      %v585 = vadd.f32 %v366, %v584
      %v586 = vpop.f32.mrf.mxu0
      %587 = vmatprep.mubr.bf16.mxu0 0
      %588 = vmatmul.mubr.bf16.gmra.mxu0 %v461
      %v589 = vpop.f32.mrf.mxu0
      %v590 = vadd.f32 %v366, %v589
      %v591 = vpop.f32.mrf.mxu0
      %v592 = vpop.f32.mrf.mxu0
      %v593 = vpop.f32.mrf.mxu0
      %594 = vdwg.mxu0
      %v595 = vmax.f32 %v502, 0.0
      %v596 = vmax.f32 %v505, 0.0
      %v597 = vmax.f32 %v510, 0.0
      %v598 = vmax.f32 %v513, 0.0
      %v599 = vmax.f32 %v518, 0.0
      %v600 = vmax.f32 %v521, 0.0
      %v601 = vmax.f32 %v526, 0.0
      %v602 = vmax.f32 %v529, 0.0
      %v603 = vmax.f32 %v534, 0.0
      %v604 = vmax.f32 %v537, 0.0
      %v605 = vmax.f32 %v542, 0.0
      %v606 = vmax.f32 %v545, 0.0
      %v607 = vmax.f32 %v550, 0.0
      %v608 = vmax.f32 %v553, 0.0
      %v609 = vmax.f32 %v558, 0.0
      %v610 = vmax.f32 %v561, 0.0
      %v611 = vmax.f32 %v566, 0.0
      %v612 = vmax.f32 %v569, 0.0
      %v613 = vmax.f32 %v574, 0.0
      %v614 = vmax.f32 %v577, 0.0
      %v615 = vmax.f32 %v582, 0.0
      %v616 = vmax.f32 %v585, 0.0
      %v617 = vmax.f32 %v590, 0.0
      %v618 = vmin.f32 %v595, 6.0
      %v619 = vmin.f32 %v596, 6.0
      %v620 = vmin.f32 %v597, 6.0
      %v621 = vmin.f32 %v598, 6.0
      %v622 = vmin.f32 %v599, 6.0
      %v623 = vmin.f32 %v600, 6.0
      %v624 = vmin.f32 %v601, 6.0
      %v625 = vmin.f32 %v602, 6.0
      %v626 = vmin.f32 %v603, 6.0
      %v627 = vmin.f32 %v604, 6.0
      %v628 = vmin.f32 %v605, 6.0
      %v629 = vmin.f32 %v606, 6.0
      %v630 = vmin.f32 %v607, 6.0
      %v631 = vmin.f32 %v608, 6.0
      %v632 = vmin.f32 %v609, 6.0
      %v633 = vmin.f32 %v610, 6.0
      %v634 = vmin.f32 %v611, 6.0
      %v635 = vmin.f32 %v612, 6.0
      %v636 = vmin.f32 %v613, 6.0
      %v637 = vmin.f32 %v614, 6.0
      %v638 = vmin.f32 %v615, 6.0
      %v639 = vmin.f32 %v616, 6.0
      %v640 = vmin.f32 %v617, 6.0
      %s641 = scalar_lea.vmem %s1, %s332
      %v642 = vld [vmem:[%s641] sm:$0xff]
      %v643 = vld [vmem:[%s641 + $0x8] sm:$0xff]
      %v644 = vld [vmem:[%s641 + $0x10] sm:$0xff]
      %v645 = vld [vmem:[%s641 + $0x18] sm:$0xff]
      %v646 = vld [vmem:[%s641 + $0x20] sm:$0xff]
      %v647 = vld [vmem:[%s641 + $0x28] sm:$0xff]
      %v648 = vld [vmem:[%s641 + $0x30] sm:$0xff]
      %v649 = vld [vmem:[%s641 + $0x38] sm:$0xff]
      %v650 = vld [vmem:[%s641 + $0x40] sm:$0xff]
      %v651 = vld [vmem:[%s641 + $0x48] sm:$0xff]
      %v652 = vld [vmem:[%s641 + $0x50] sm:$0xff]
      %v653 = vld [vmem:[%s641 + $0x58] sm:$0xff]
      %v654 = vld [vmem:[%s641 + $0x60] sm:$0xff]
      %v655 = vld [vmem:[%s641 + $0x68] sm:$0xff]
      %v656 = vld [vmem:[%s641 + $0x70] sm:$0xff]
      %v657 = vld [vmem:[%s641 + $0x78] sm:$0xff]
      %v658 = vld [vmem:[%s641 + $0x80] sm:$0xff]
      %v659 = vld [vmem:[%s641 + $0x88] sm:$0xff]
      %v660 = vld [vmem:[%s641 + $0x90] sm:$0xff]
      %v661 = vld [vmem:[%s641 + $0x98] sm:$0xff]
      %v662 = vld [vmem:[%s641 + $0xa0] sm:$0xff]
      %v663 = vld [vmem:[%s641 + $0xa8] sm:$0xff]
      %v664 = vld [vmem:[%s641 + $0xb0] sm:$0xff]
      %666 = vset.pattern.permute.xlu0 0
      %667 = vperm.xlu0 %666, %v642
      %v668 = vpop.permute.xlu0 %667
      %671 = vset.pattern.permute.xlu0 0
      %672 = vperm.xlu0 %671, %v643
      %v673 = vpop.permute.xlu0 %672
      %676 = vset.pattern.permute.xlu0 0
      %677 = vperm.xlu0 %676, %v644
      %v678 = vpop.permute.xlu0 %677
      %681 = vset.pattern.permute.xlu0 0
      %682 = vperm.xlu0 %681, %v645
      %v683 = vpop.permute.xlu0 %682
      %686 = vset.pattern.permute.xlu0 0
      %687 = vperm.xlu0 %686, %v646
      %v688 = vpop.permute.xlu0 %687
      %691 = vset.pattern.permute.xlu0 0
      %692 = vperm.xlu0 %691, %v647
      %v693 = vpop.permute.xlu0 %692
      %696 = vset.pattern.permute.xlu0 0
      %697 = vperm.xlu0 %696, %v648
      %v698 = vpop.permute.xlu0 %697
      %701 = vset.pattern.permute.xlu0 0
      %702 = vperm.xlu0 %701, %v649
      %v703 = vpop.permute.xlu0 %702
      %706 = vset.pattern.permute.xlu0 0
      %707 = vperm.xlu0 %706, %v650
      %v708 = vpop.permute.xlu0 %707
      %711 = vset.pattern.permute.xlu0 0
      %712 = vperm.xlu0 %711, %v651
      %v713 = vpop.permute.xlu0 %712
      %716 = vset.pattern.permute.xlu0 0
      %717 = vperm.xlu0 %716, %v652
      %v718 = vpop.permute.xlu0 %717
      %721 = vset.pattern.permute.xlu0 0
      %722 = vperm.xlu0 %721, %v653
      %v723 = vpop.permute.xlu0 %722
      %726 = vset.pattern.permute.xlu0 0
      %727 = vperm.xlu0 %726, %v654
      %v728 = vpop.permute.xlu0 %727
      %731 = vset.pattern.permute.xlu0 0
      %732 = vperm.xlu0 %731, %v655
      %v733 = vpop.permute.xlu0 %732
      %736 = vset.pattern.permute.xlu0 0
      %737 = vperm.xlu0 %736, %v656
      %v738 = vpop.permute.xlu0 %737
      %741 = vset.pattern.permute.xlu0 0
      %742 = vperm.xlu0 %741, %v657
      %v743 = vpop.permute.xlu0 %742
      %746 = vset.pattern.permute.xlu0 0
      %747 = vperm.xlu0 %746, %v658
      %v748 = vpop.permute.xlu0 %747
      %751 = vset.pattern.permute.xlu0 0
      %752 = vperm.xlu0 %751, %v659
      %v753 = vpop.permute.xlu0 %752
      %756 = vset.pattern.permute.xlu0 0
      %757 = vperm.xlu0 %756, %v660
      %v758 = vpop.permute.xlu0 %757
      %761 = vset.pattern.permute.xlu0 0
      %762 = vperm.xlu0 %761, %v661
      %v763 = vpop.permute.xlu0 %762
      %766 = vset.pattern.permute.xlu0 0
      %767 = vperm.xlu0 %766, %v662
      %v768 = vpop.permute.xlu0 %767
      %771 = vset.pattern.permute.xlu0 0
      %772 = vperm.xlu0 %771, %v663
      %v773 = vpop.permute.xlu0 %772
      %776 = vset.pattern.permute.xlu0 0
      %777 = vperm.xlu0 %776, %v664
      %v778 = vpop.permute.xlu0 %777
      %v780 = vmul.f32 %v618, %v668
      %v781 = vmul.f32 %v619, %v673
      %v782 = vmul.f32 %v620, %v678
      %v783 = vmul.f32 %v621, %v683
      %v784 = vmul.f32 %v622, %v688
      %v785 = vmul.f32 %v623, %v693
      %v786 = vmul.f32 %v624, %v698
      %v787 = vmul.f32 %v625, %v703
      %v788 = vmul.f32 %v626, %v708
      %v789 = vmul.f32 %v627, %v713
      %v790 = vmul.f32 %v628, %v718
      %v791 = vmul.f32 %v629, %v723
      %v792 = vmul.f32 %v630, %v728
      %v793 = vmul.f32 %v631, %v733
      %v794 = vmul.f32 %v632, %v738
      %v795 = vmul.f32 %v633, %v743
      %v796 = vmul.f32 %v634, %v748
      %v797 = vmul.f32 %v635, %v753
      %v798 = vmul.f32 %v636, %v758
      %v799 = vmul.f32 %v637, %v763
      %v800 = vmul.f32 %v638, %v768
      %v801 = vmul.f32 %v639, %v773
      %v802 = vmul.f32 %v640, %v778
      %vm803 = vcmask 195584
      %804 = vst.msk [vmem:[#allocation2] sm:$0xff] %vm803, %v780
      %805 = vst.msk [vmem:[#allocation2 + $0x8] sm:$0xff] %vm803, %v781
      %806 = vst.msk [vmem:[#allocation2 + $0x10] sm:$0xff] %vm803, %v782
      %807 = vst.msk [vmem:[#allocation2 + $0x18] sm:$0xff] %vm803, %v783
      %808 = vst.msk [vmem:[#allocation2 + $0x20] sm:$0xff] %vm803, %v784
      %809 = vst.msk [vmem:[#allocation2 + $0x28] sm:$0xff] %vm803, %v785
      %810 = vst.msk [vmem:[#allocation2 + $0x30] sm:$0xff] %vm803, %v786
      %811 = vst.msk [vmem:[#allocation2 + $0x38] sm:$0xff] %vm803, %v787
      %812 = vst.msk [vmem:[#allocation2 + $0x40] sm:$0xff] %vm803, %v788
      %813 = vst.msk [vmem:[#allocation2 + $0x48] sm:$0xff] %vm803, %v789
      %814 = vst.msk [vmem:[#allocation2 + $0x50] sm:$0xff] %vm803, %v790
      %815 = vst.msk [vmem:[#allocation2 + $0x58] sm:$0xff] %vm803, %v791
      %816 = vst.msk [vmem:[#allocation2 + $0x60] sm:$0xff] %vm803, %v792
      %817 = vst.msk [vmem:[#allocation2 + $0x68] sm:$0xff] %vm803, %v793
      %818 = vst.msk [vmem:[#allocation2 + $0x70] sm:$0xff] %vm803, %v794
      %819 = vst.msk [vmem:[#allocation2 + $0x78] sm:$0xff] %vm803, %v795
      %820 = vst.msk [vmem:[#allocation2 + $0x80] sm:$0xff] %vm803, %v796
      %821 = vst.msk [vmem:[#allocation2 + $0x88] sm:$0xff] %vm803, %v797
      %822 = vst.msk [vmem:[#allocation2 + $0x90] sm:$0xff] %vm803, %v798
      %823 = vst.msk [vmem:[#allocation2 + $0x98] sm:$0xff] %vm803, %v799
      %824 = vst.msk [vmem:[#allocation2 + $0xa0] sm:$0xff] %vm803, %v800
      %825 = vst.msk [vmem:[#allocation2 + $0xa8] sm:$0xff] %vm803, %v801
      %826 = vst.msk [vmem:[#allocation2 + $0xb0] sm:$0xff] %vm803, %v802
      %v827 = vld [vmem:[#allocation2] sm:$0xff]
      %v828 = vld [vmem:[#allocation2 + $0x8] sm:$0xff]
      %v829 = vld [vmem:[%s4] sm:$0x1]
      %v830 = vlaneseq
      %v831 = vshrl.u32 %v830, 7
      %v832 = vsub.s32 0, %v831
      %v833 = vrot.slane %v829, %v832
      %v834 = vmul.f32 %v827, %v833
      %v835 = vmul.f32 %v828, %v833
      %v836 = vadd.f32 %v834, 0.0
      %v837 = vadd.f32 %v835, 0.0
      %v838 = vld [vmem:[#allocation2 + $0x1] sm:$0xff]
      %v839 = vld [vmem:[#allocation2 + $0x9] sm:$0xff]
      %v840 = vld [vmem:[%s4 + $0x1] sm:$0x1]
      %v841 = vlaneseq
      %v842 = vshrl.u32 %v841, 7
      %v843 = vsub.s32 0, %v842
      %v844 = vrot.slane %v840, %v843
      %v845 = vmul.f32 %v838, %v844
      %v846 = vmul.f32 %v839, %v844
      %v847 = vadd.f32 %v836, %v845
      %v848 = vadd.f32 %v837, %v846
      %v849 = vld [vmem:[#allocation2 + $0x2] sm:$0xff]
      %v850 = vld [vmem:[#allocation2 + $0xa] sm:$0xff]
      %v851 = vld [vmem:[%s4 + $0x2] sm:$0x1]
      %v852 = vlaneseq
      %v853 = vshrl.u32 %v852, 7
      %v854 = vsub.s32 0, %v853
      %v855 = vrot.slane %v851, %v854
      %v856 = vmul.f32 %v849, %v855
      %v857 = vmul.f32 %v850, %v855
      %v858 = vadd.f32 %v847, %v856
      %v859 = vadd.f32 %v848, %v857
      %v860 = vld [vmem:[#allocation2 + $0x12] sm:$0xff]
      %v861 = vld [vmem:[#allocation2 + $0x1a] sm:$0xff]
      %s862 = scalar_lea.vmem %s4, 4
      %v863 = vld [vmem:[%s862] sm:$0x1]
      %v864 = vlaneseq
      %v865 = vshrl.u32 %v864, 7
      %v866 = vsub.s32 0, %v865
      %v867 = vrot.slane %v863, %v866
      %v868 = vmul.f32 %v860, %v867
      %v869 = vmul.f32 %v861, %v867
      %v870 = vadd.f32 %v858, %v868
      %v871 = vadd.f32 %v859, %v869
      %v872 = vld [vmem:[#allocation2 + $0x13] sm:$0xff]
      %v873 = vld [vmem:[#allocation2 + $0x1b] sm:$0xff]
      %v874 = vld [vmem:[%s862 + $0x1] sm:$0x1]
      %v875 = vlaneseq
      %v876 = vshrl.u32 %v875, 7
      %v877 = vsub.s32 0, %v876
      %v878 = vrot.slane %v874, %v877
      %v879 = vmul.f32 %v872, %v878
      %v880 = vmul.f32 %v873, %v878
      %v881 = vadd.f32 %v870, %v879
      %v882 = vadd.f32 %v871, %v880
      %v883 = vld [vmem:[#allocation2 + $0x14] sm:$0xff]
      %v884 = vld [vmem:[#allocation2 + $0x1c] sm:$0xff]
      %v885 = vld [vmem:[%s862 + $0x2] sm:$0x1]
      %v886 = vlaneseq
      %v887 = vshrl.u32 %v886, 7
      %v888 = vsub.s32 0, %v887
      %v889 = vrot.slane %v885, %v888
      %v890 = vmul.f32 %v883, %v889
      %v891 = vmul.f32 %v884, %v889
      %v892 = vadd.f32 %v881, %v890
      %v893 = vadd.f32 %v882, %v891
      %v894 = vld [vmem:[#allocation2 + $0x24] sm:$0xff]
      %v895 = vld [vmem:[#allocation2 + $0x2c] sm:$0xff]
      %s896 = scalar_lea.vmem %s4, 8
      %v897 = vld [vmem:[%s896] sm:$0x1]
      %v898 = vlaneseq
      %v899 = vshrl.u32 %v898, 7
      %v900 = vsub.s32 0, %v899
      %v901 = vrot.slane %v897, %v900
      %v902 = vmul.f32 %v894, %v901
      %v903 = vmul.f32 %v895, %v901
      %v904 = vadd.f32 %v892, %v902
      %v905 = vadd.f32 %v893, %v903
      %v906 = vld [vmem:[#allocation2 + $0x25] sm:$0xff]
      %v907 = vld [vmem:[#allocation2 + $0x2d] sm:$0xff]
      %v908 = vld [vmem:[%s896 + $0x1] sm:$0x1]
      %v909 = vlaneseq
      %v910 = vshrl.u32 %v909, 7
      %v911 = vsub.s32 0, %v910
      %v912 = vrot.slane %v908, %v911
      %v913 = vmul.f32 %v906, %v912
      %v914 = vmul.f32 %v907, %v912
      %v915 = vadd.f32 %v904, %v913
      %v916 = vadd.f32 %v905, %v914
      %v917 = vld [vmem:[#allocation2 + $0x26] sm:$0xff]
      %v918 = vld [vmem:[#allocation2 + $0x2e] sm:$0xff]
      %v919 = vld [vmem:[%s896 + $0x2] sm:$0x1]
      %v920 = vlaneseq
      %v921 = vshrl.u32 %v920, 7
      %v922 = vsub.s32 0, %v921
      %v923 = vrot.slane %v919, %v922
      %v924 = vmul.f32 %v917, %v923
      %v925 = vmul.f32 %v918, %v923
      %v926 = vadd.f32 %v915, %v924
      %v927 = vadd.f32 %v916, %v925
      %v928 = vld [vmem:[%s5] sm:$0x1]
      %v930 = vlaneseq
      %v931 = vshrl.u32 %v930, 7
      %v932 = vsub.s32 0, %v931
      %v933 = vrot.slane %v928, %v932
      %v935 = vadd.f32 %v926, %v933
      %v936 = vadd.f32 %v927, %v933
      %v937 = vmax.f32 %v935, 0.0
      %v938 = vmax.f32 %v936, 0.0
      %v939 = vmin.f32 %v937, 6.0
      %v940 = vmin.f32 %v938, 6.0
      %941 = vst.msk [vmem:[#allocation3] sm:$0xff] %vm803, %v939
      %942 = vst.msk [vmem:[#allocation3 + $0x8] sm:$0xff] %vm803, %v940
      %v943 = vld [vmem:[#allocation2 + $0x12] sm:$0xff]
      %v944 = vld [vmem:[#allocation2 + $0x1a] sm:$0xff]
      %v945 = vld [vmem:[%s4] sm:$0x1]
      %v946 = vlaneseq
      %v947 = vshrl.u32 %v946, 7
      %v948 = vsub.s32 0, %v947
      %v949 = vrot.slane %v945, %v948
      %v950 = vmul.f32 %v943, %v949
      %v951 = vmul.f32 %v944, %v949
      %v952 = vadd.f32 %v950, 0.0
      %v953 = vadd.f32 %v951, 0.0
      %v954 = vld [vmem:[#allocation2 + $0x13] sm:$0xff]
      %v955 = vld [vmem:[#allocation2 + $0x1b] sm:$0xff]
      %v956 = vld [vmem:[%s4 + $0x1] sm:$0x1]
      %v957 = vlaneseq
      %v958 = vshrl.u32 %v957, 7
      %v959 = vsub.s32 0, %v958
      %v960 = vrot.slane %v956, %v959
      %v961 = vmul.f32 %v954, %v960
      %v962 = vmul.f32 %v955, %v960
      %v963 = vadd.f32 %v952, %v961
      %v964 = vadd.f32 %v953, %v962
      %v965 = vld [vmem:[#allocation2 + $0x14] sm:$0xff]
      %v966 = vld [vmem:[#allocation2 + $0x1c] sm:$0xff]
      %v967 = vld [vmem:[%s4 + $0x2] sm:$0x1]
      %v968 = vlaneseq
      %v969 = vshrl.u32 %v968, 7
      %v970 = vsub.s32 0, %v969
      %v971 = vrot.slane %v967, %v970
      %v972 = vmul.f32 %v965, %v971
      %v973 = vmul.f32 %v966, %v971
      %v974 = vadd.f32 %v963, %v972
      %v975 = vadd.f32 %v964, %v973
      %v976 = vld [vmem:[#allocation2 + $0x24] sm:$0xff]
      %v977 = vld [vmem:[#allocation2 + $0x2c] sm:$0xff]
      %v978 = vld [vmem:[%s862] sm:$0x1]
      %v979 = vlaneseq
      %v980 = vshrl.u32 %v979, 7
      %v981 = vsub.s32 0, %v980
      %v982 = vrot.slane %v978, %v981
      %v983 = vmul.f32 %v976, %v982
      %v984 = vmul.f32 %v977, %v982
      %v985 = vadd.f32 %v974, %v983
      %v986 = vadd.f32 %v975, %v984
      %v987 = vld [vmem:[#allocation2 + $0x25] sm:$0xff]
      %v988 = vld [vmem:[#allocation2 + $0x2d] sm:$0xff]
      %v989 = vld [vmem:[%s862 + $0x1] sm:$0x1]
      %v990 = vlaneseq
      %v991 = vshrl.u32 %v990, 7
      %v992 = vsub.s32 0, %v991
      %v993 = vrot.slane %v989, %v992
      %v994 = vmul.f32 %v987, %v993
      %v995 = vmul.f32 %v988, %v993
      %v996 = vadd.f32 %v985, %v994
      %v997 = vadd.f32 %v986, %v995
      %v998 = vld [vmem:[#allocation2 + $0x26] sm:$0xff]
      %v999 = vld [vmem:[#allocation2 + $0x2e] sm:$0xff]
      %v1000 = vld [vmem:[%s862 + $0x2] sm:$0x1]
      %v1001 = vlaneseq
      %v1002 = vshrl.u32 %v1001, 7
      %v1003 = vsub.s32 0, %v1002
      %v1004 = vrot.slane %v1000, %v1003
      %v1005 = vmul.f32 %v998, %v1004
      %v1006 = vmul.f32 %v999, %v1004
      %v1007 = vadd.f32 %v996, %v1005
      %v1008 = vadd.f32 %v997, %v1006
      %v1009 = vld [vmem:[#allocation2 + $0x36] sm:$0xff]
      %v1010 = vld [vmem:[#allocation2 + $0x3e] sm:$0xff]
      %v1011 = vld [vmem:[%s896] sm:$0x1]
      %v1012 = vlaneseq
      %v1013 = vshrl.u32 %v1012, 7
      %v1014 = vsub.s32 0, %v1013
      %v1015 = vrot.slane %v1011, %v1014
      %v1016 = vmul.f32 %v1009, %v1015
      %v1017 = vmul.f32 %v1010, %v1015
      %v1018 = vadd.f32 %v1007, %v1016
      %v1019 = vadd.f32 %v1008, %v1017
      %v1020 = vld [vmem:[#allocation2 + $0x37] sm:$0xff]
      %v1021 = vld [vmem:[#allocation2 + $0x3f] sm:$0xff]
      %v1022 = vld [vmem:[%s896 + $0x1] sm:$0x1]
      %v1023 = vlaneseq
      %v1024 = vshrl.u32 %v1023, 7
      %v1025 = vsub.s32 0, %v1024
      %v1026 = vrot.slane %v1022, %v1025
      %v1027 = vmul.f32 %v1020, %v1026
      %v1028 = vmul.f32 %v1021, %v1026
      %v1029 = vadd.f32 %v1018, %v1027
      %v1030 = vadd.f32 %v1019, %v1028
      %v1031 = vld [vmem:[#allocation2 + $0x38] sm:$0xff]
      %v1032 = vld [vmem:[#allocation2 + $0x40] sm:$0xff]
      %v1033 = vld [vmem:[%s896 + $0x2] sm:$0x1]
      %v1034 = vlaneseq
      %v1035 = vshrl.u32 %v1034, 7
      %v1036 = vsub.s32 0, %v1035
      %v1037 = vrot.slane %v1033, %v1036
      %v1038 = vmul.f32 %v1031, %v1037
      %v1039 = vmul.f32 %v1032, %v1037
      %v1040 = vadd.f32 %v1029, %v1038
      %v1041 = vadd.f32 %v1030, %v1039
      %v1042 = vld [vmem:[%s5] sm:$0x1]
      %v1044 = vlaneseq
      %v1045 = vshrl.u32 %v1044, 7
      %v1046 = vsub.s32 0, %v1045
      %v1047 = vrot.slane %v1042, %v1046
      %v1049 = vadd.f32 %v1040, %v1047
      %v1050 = vadd.f32 %v1041, %v1047
      %v1051 = vmax.f32 %v1049, 0.0
      %v1052 = vmax.f32 %v1050, 0.0
      %v1053 = vmin.f32 %v1051, 6.0
      %v1054 = vmin.f32 %v1052, 6.0
      %1055 = vst.msk [vmem:[#allocation3 + $0x10] sm:$0xff] %vm803, %v1053
      %1056 = vst.msk [vmem:[#allocation3 + $0x18] sm:$0xff] %vm803, %v1054
      %v1057 = vld [vmem:[#allocation2 + $0x24] sm:$0xff]
      %v1058 = vld [vmem:[#allocation2 + $0x2c] sm:$0xff]
      %v1059 = vld [vmem:[%s4] sm:$0x1]
      %v1060 = vlaneseq
      %v1061 = vshrl.u32 %v1060, 7
      %v1062 = vsub.s32 0, %v1061
      %v1063 = vrot.slane %v1059, %v1062
      %v1064 = vmul.f32 %v1057, %v1063
      %v1065 = vmul.f32 %v1058, %v1063
      %v1066 = vadd.f32 %v1064, 0.0
      %v1067 = vadd.f32 %v1065, 0.0
      %v1068 = vld [vmem:[#allocation2 + $0x25] sm:$0xff]
      %v1069 = vld [vmem:[#allocation2 + $0x2d] sm:$0xff]
      %v1070 = vld [vmem:[%s4 + $0x1] sm:$0x1]
      %v1071 = vlaneseq
      %v1072 = vshrl.u32 %v1071, 7
      %v1073 = vsub.s32 0, %v1072
      %v1074 = vrot.slane %v1070, %v1073
      %v1075 = vmul.f32 %v1068, %v1074
      %v1076 = vmul.f32 %v1069, %v1074
      %v1077 = vadd.f32 %v1066, %v1075
      %v1078 = vadd.f32 %v1067, %v1076
      %v1079 = vld [vmem:[#allocation2 + $0x26] sm:$0xff]
      %v1080 = vld [vmem:[#allocation2 + $0x2e] sm:$0xff]
      %v1081 = vld [vmem:[%s4 + $0x2] sm:$0x1]
      %v1082 = vlaneseq
      %v1083 = vshrl.u32 %v1082, 7
      %v1084 = vsub.s32 0, %v1083
      %v1085 = vrot.slane %v1081, %v1084
      %v1086 = vmul.f32 %v1079, %v1085
      %v1087 = vmul.f32 %v1080, %v1085
      %v1088 = vadd.f32 %v1077, %v1086
      %v1089 = vadd.f32 %v1078, %v1087
      %v1090 = vld [vmem:[#allocation2 + $0x36] sm:$0xff]
      %v1091 = vld [vmem:[#allocation2 + $0x3e] sm:$0xff]
      %v1092 = vld [vmem:[%s862] sm:$0x1]
      %v1093 = vlaneseq
      %v1094 = vshrl.u32 %v1093, 7
      %v1095 = vsub.s32 0, %v1094
      %v1096 = vrot.slane %v1092, %v1095
      %v1097 = vmul.f32 %v1090, %v1096
      %v1098 = vmul.f32 %v1091, %v1096
      %v1099 = vadd.f32 %v1088, %v1097
      %v1100 = vadd.f32 %v1089, %v1098
      %v1101 = vld [vmem:[#allocation2 + $0x37] sm:$0xff]
      %v1102 = vld [vmem:[#allocation2 + $0x3f] sm:$0xff]
      %v1103 = vld [vmem:[%s862 + $0x1] sm:$0x1]
      %v1104 = vlaneseq
      %v1105 = vshrl.u32 %v1104, 7
      %v1106 = vsub.s32 0, %v1105
      %v1107 = vrot.slane %v1103, %v1106
      %v1108 = vmul.f32 %v1101, %v1107
      %v1109 = vmul.f32 %v1102, %v1107
      %v1110 = vadd.f32 %v1099, %v1108
      %v1111 = vadd.f32 %v1100, %v1109
      %v1112 = vld [vmem:[#allocation2 + $0x38] sm:$0xff]
      %v1113 = vld [vmem:[#allocation2 + $0x40] sm:$0xff]
      %v1114 = vld [vmem:[%s862 + $0x2] sm:$0x1]
      %v1115 = vlaneseq
      %v1116 = vshrl.u32 %v1115, 7
      %v1117 = vsub.s32 0, %v1116
      %v1118 = vrot.slane %v1114, %v1117
      %v1119 = vmul.f32 %v1112, %v1118
      %v1120 = vmul.f32 %v1113, %v1118
      %v1121 = vadd.f32 %v1110, %v1119
      %v1122 = vadd.f32 %v1111, %v1120
      %v1123 = vld [vmem:[#allocation2 + $0x48] sm:$0xff]
      %v1124 = vld [vmem:[#allocation2 + $0x50] sm:$0xff]
      %v1125 = vld [vmem:[%s896] sm:$0x1]
      %v1126 = vlaneseq
      %v1127 = vshrl.u32 %v1126, 7
      %v1128 = vsub.s32 0, %v1127
      %v1129 = vrot.slane %v1125, %v1128
      %v1130 = vmul.f32 %v1123, %v1129
      %v1131 = vmul.f32 %v1124, %v1129
      %v1132 = vadd.f32 %v1121, %v1130
      %v1133 = vadd.f32 %v1122, %v1131
      %v1134 = vld [vmem:[#allocation2 + $0x49] sm:$0xff]
      %v1135 = vld [vmem:[#allocation2 + $0x51] sm:$0xff]
      %v1136 = vld [vmem:[%s896 + $0x1] sm:$0x1]
      %v1137 = vlaneseq
      %v1138 = vshrl.u32 %v1137, 7
      %v1139 = vsub.s32 0, %v1138
      %v1140 = vrot.slane %v1136, %v1139
      %v1141 = vmul.f32 %v1134, %v1140
      %v1142 = vmul.f32 %v1135, %v1140
      %v1143 = vadd.f32 %v1132, %v1141
      %v1144 = vadd.f32 %v1133, %v1142
      %v1145 = vld [vmem:[#allocation2 + $0x4a] sm:$0xff]
      %v1146 = vld [vmem:[#allocation2 + $0x52] sm:$0xff]
      %v1147 = vld [vmem:[%s896 + $0x2] sm:$0x1]
      %v1148 = vlaneseq
      %v1149 = vshrl.u32 %v1148, 7
      %v1150 = vsub.s32 0, %v1149
      %v1151 = vrot.slane %v1147, %v1150
      %v1152 = vmul.f32 %v1145, %v1151
      %v1153 = vmul.f32 %v1146, %v1151
      %v1154 = vadd.f32 %v1143, %v1152
      %v1155 = vadd.f32 %v1144, %v1153
      %v1156 = vld [vmem:[%s5] sm:$0x1]
      %v1158 = vlaneseq
      %v1159 = vshrl.u32 %v1158, 7
      %v1160 = vsub.s32 0, %v1159
      %v1161 = vrot.slane %v1156, %v1160
      %v1163 = vadd.f32 %v1154, %v1161
      %v1164 = vadd.f32 %v1155, %v1161
      %v1165 = vmax.f32 %v1163, 0.0
      %v1166 = vmax.f32 %v1164, 0.0
      %v1167 = vmin.f32 %v1165, 6.0
      %v1168 = vmin.f32 %v1166, 6.0
      %1169 = vst.msk [vmem:[#allocation3 + $0x20] sm:$0xff] %vm803, %v1167
      %1170 = vst.msk [vmem:[#allocation3 + $0x28] sm:$0xff] %vm803, %v1168
      %v1171 = vld [vmem:[#allocation2 + $0x36] sm:$0xff]
      %v1172 = vld [vmem:[#allocation2 + $0x3e] sm:$0xff]
      %v1173 = vld [vmem:[%s4] sm:$0x1]
      %v1174 = vlaneseq
      %v1175 = vshrl.u32 %v1174, 7
      %v1176 = vsub.s32 0, %v1175
      %v1177 = vrot.slane %v1173, %v1176
      %v1178 = vmul.f32 %v1171, %v1177
      %v1179 = vmul.f32 %v1172, %v1177
      %v1180 = vadd.f32 %v1178, 0.0
      %v1181 = vadd.f32 %v1179, 0.0
      %v1182 = vld [vmem:[#allocation2 + $0x37] sm:$0xff]
      %v1183 = vld [vmem:[#allocation2 + $0x3f] sm:$0xff]
      %v1184 = vld [vmem:[%s4 + $0x1] sm:$0x1]
      %v1185 = vlaneseq
      %v1186 = vshrl.u32 %v1185, 7
      %v1187 = vsub.s32 0, %v1186
      %v1188 = vrot.slane %v1184, %v1187
      %v1189 = vmul.f32 %v1182, %v1188
      %v1190 = vmul.f32 %v1183, %v1188
      %v1191 = vadd.f32 %v1180, %v1189
      %v1192 = vadd.f32 %v1181, %v1190
      %v1193 = vld [vmem:[#allocation2 + $0x38] sm:$0xff]
      %v1194 = vld [vmem:[#allocation2 + $0x40] sm:$0xff]
      %v1195 = vld [vmem:[%s4 + $0x2] sm:$0x1]
      %v1196 = vlaneseq
      %v1197 = vshrl.u32 %v1196, 7
      %v1198 = vsub.s32 0, %v1197
      %v1199 = vrot.slane %v1195, %v1198
      %v1200 = vmul.f32 %v1193, %v1199
      %v1201 = vmul.f32 %v1194, %v1199
      %v1202 = vadd.f32 %v1191, %v1200
      %v1203 = vadd.f32 %v1192, %v1201
      %v1204 = vld [vmem:[#allocation2 + $0x48] sm:$0xff]
      %v1205 = vld [vmem:[#allocation2 + $0x50] sm:$0xff]
      %v1206 = vld [vmem:[%s862] sm:$0x1]
      %v1207 = vlaneseq
      %v1208 = vshrl.u32 %v1207, 7
      %v1209 = vsub.s32 0, %v1208
      %v1210 = vrot.slane %v1206, %v1209
      %v1211 = vmul.f32 %v1204, %v1210
      %v1212 = vmul.f32 %v1205, %v1210
      %v1213 = vadd.f32 %v1202, %v1211
      %v1214 = vadd.f32 %v1203, %v1212
      %v1215 = vld [vmem:[#allocation2 + $0x49] sm:$0xff]
      %v1216 = vld [vmem:[#allocation2 + $0x51] sm:$0xff]
      %v1217 = vld [vmem:[%s862 + $0x1] sm:$0x1]
      %v1218 = vlaneseq
      %v1219 = vshrl.u32 %v1218, 7
      %v1220 = vsub.s32 0, %v1219
      %v1221 = vrot.slane %v1217, %v1220
      %v1222 = vmul.f32 %v1215, %v1221
      %v1223 = vmul.f32 %v1216, %v1221
      %v1224 = vadd.f32 %v1213, %v1222
      %v1225 = vadd.f32 %v1214, %v1223
      %v1226 = vld [vmem:[#allocation2 + $0x4a] sm:$0xff]
      %v1227 = vld [vmem:[#allocation2 + $0x52] sm:$0xff]
      %v1228 = vld [vmem:[%s862 + $0x2] sm:$0x1]
      %v1229 = vlaneseq
      %v1230 = vshrl.u32 %v1229, 7
      %v1231 = vsub.s32 0, %v1230
      %v1232 = vrot.slane %v1228, %v1231
      %v1233 = vmul.f32 %v1226, %v1232
      %v1234 = vmul.f32 %v1227, %v1232
      %v1235 = vadd.f32 %v1224, %v1233
      %v1236 = vadd.f32 %v1225, %v1234
      %v1237 = vld [vmem:[#allocation2 + $0x5a] sm:$0xff]
      %v1238 = vld [vmem:[#allocation2 + $0x62] sm:$0xff]
      %v1239 = vld [vmem:[%s896] sm:$0x1]
      %v1240 = vlaneseq
      %v1241 = vshrl.u32 %v1240, 7
      %v1242 = vsub.s32 0, %v1241
      %v1243 = vrot.slane %v1239, %v1242
      %v1244 = vmul.f32 %v1237, %v1243
      %v1245 = vmul.f32 %v1238, %v1243
      %v1246 = vadd.f32 %v1235, %v1244
      %v1247 = vadd.f32 %v1236, %v1245
      %v1248 = vld [vmem:[#allocation2 + $0x5b] sm:$0xff]
      %v1249 = vld [vmem:[#allocation2 + $0x63] sm:$0xff]
      %v1250 = vld [vmem:[%s896 + $0x1] sm:$0x1]
      %v1251 = vlaneseq
      %v1252 = vshrl.u32 %v1251, 7
      %v1253 = vsub.s32 0, %v1252
      %v1254 = vrot.slane %v1250, %v1253
      %v1255 = vmul.f32 %v1248, %v1254
      %v1256 = vmul.f32 %v1249, %v1254
      %v1257 = vadd.f32 %v1246, %v1255
      %v1258 = vadd.f32 %v1247, %v1256
      %v1259 = vld [vmem:[#allocation2 + $0x5c] sm:$0xff]
      %v1260 = vld [vmem:[#allocation2 + $0x64] sm:$0xff]
      %v1261 = vld [vmem:[%s896 + $0x2] sm:$0x1]
      %v1262 = vlaneseq
      %v1263 = vshrl.u32 %v1262, 7
      %v1264 = vsub.s32 0, %v1263
      %v1265 = vrot.slane %v1261, %v1264
      %v1266 = vmul.f32 %v1259, %v1265
      %v1267 = vmul.f32 %v1260, %v1265
      %v1268 = vadd.f32 %v1257, %v1266
      %v1269 = vadd.f32 %v1258, %v1267
      %v1270 = vld [vmem:[%s5] sm:$0x1]
      %v1272 = vlaneseq
      %v1273 = vshrl.u32 %v1272, 7
      %v1274 = vsub.s32 0, %v1273
      %v1275 = vrot.slane %v1270, %v1274
      %v1277 = vadd.f32 %v1268, %v1275
      %v1278 = vadd.f32 %v1269, %v1275
      %v1279 = vmax.f32 %v1277, 0.0
      %v1280 = vmax.f32 %v1278, 0.0
      %v1281 = vmin.f32 %v1279, 6.0
      %v1282 = vmin.f32 %v1280, 6.0
      %1283 = vst.msk [vmem:[#allocation3 + $0x30] sm:$0xff] %vm803, %v1281
      %1284 = vst.msk [vmem:[#allocation3 + $0x38] sm:$0xff] %vm803, %v1282
      %v1285 = vld [vmem:[#allocation2 + $0x48] sm:$0xff]
      %v1286 = vld [vmem:[#allocation2 + $0x50] sm:$0xff]
      %v1287 = vld [vmem:[%s4] sm:$0x1]
      %v1288 = vlaneseq
      %v1289 = vshrl.u32 %v1288, 7
      %v1290 = vsub.s32 0, %v1289
      %v1291 = vrot.slane %v1287, %v1290
      %v1292 = vmul.f32 %v1285, %v1291
      %v1293 = vmul.f32 %v1286, %v1291
      %v1294 = vadd.f32 %v1292, 0.0
      %v1295 = vadd.f32 %v1293, 0.0
      %v1296 = vld [vmem:[#allocation2 + $0x49] sm:$0xff]
      %v1297 = vld [vmem:[#allocation2 + $0x51] sm:$0xff]
      %v1298 = vld [vmem:[%s4 + $0x1] sm:$0x1]
      %v1299 = vlaneseq
      %v1300 = vshrl.u32 %v1299, 7
      %v1301 = vsub.s32 0, %v1300
      %v1302 = vrot.slane %v1298, %v1301
      %v1303 = vmul.f32 %v1296, %v1302
      %v1304 = vmul.f32 %v1297, %v1302
      %v1305 = vadd.f32 %v1294, %v1303
      %v1306 = vadd.f32 %v1295, %v1304
      %v1307 = vld [vmem:[#allocation2 + $0x4a] sm:$0xff]
      %v1308 = vld [vmem:[#allocation2 + $0x52] sm:$0xff]
      %v1309 = vld [vmem:[%s4 + $0x2] sm:$0x1]
      %v1310 = vlaneseq
      %v1311 = vshrl.u32 %v1310, 7
      %v1312 = vsub.s32 0, %v1311
      %v1313 = vrot.slane %v1309, %v1312
      %v1314 = vmul.f32 %v1307, %v1313
      %v1315 = vmul.f32 %v1308, %v1313
      %v1316 = vadd.f32 %v1305, %v1314
      %v1317 = vadd.f32 %v1306, %v1315
      %v1318 = vld [vmem:[#allocation2 + $0x5a] sm:$0xff]
      %v1319 = vld [vmem:[#allocation2 + $0x62] sm:$0xff]
      %v1320 = vld [vmem:[%s862] sm:$0x1]
      %v1321 = vlaneseq
      %v1322 = vshrl.u32 %v1321, 7
      %v1323 = vsub.s32 0, %v1322
      %v1324 = vrot.slane %v1320, %v1323
      %v1325 = vmul.f32 %v1318, %v1324
      %v1326 = vmul.f32 %v1319, %v1324
      %v1327 = vadd.f32 %v1316, %v1325
      %v1328 = vadd.f32 %v1317, %v1326
      %v1329 = vld [vmem:[#allocation2 + $0x5b] sm:$0xff]
      %v1330 = vld [vmem:[#allocation2 + $0x63] sm:$0xff]
      %v1331 = vld [vmem:[%s862 + $0x1] sm:$0x1]
      %v1332 = vlaneseq
      %v1333 = vshrl.u32 %v1332, 7
      %v1334 = vsub.s32 0, %v1333
      %v1335 = vrot.slane %v1331, %v1334
      %v1336 = vmul.f32 %v1329, %v1335
      %v1337 = vmul.f32 %v1330, %v1335
      %v1338 = vadd.f32 %v1327, %v1336
      %v1339 = vadd.f32 %v1328, %v1337
      %v1340 = vld [vmem:[#allocation2 + $0x5c] sm:$0xff]
      %v1341 = vld [vmem:[#allocation2 + $0x64] sm:$0xff]
      %v1342 = vld [vmem:[%s862 + $0x2] sm:$0x1]
      %v1343 = vlaneseq
      %v1344 = vshrl.u32 %v1343, 7
      %v1345 = vsub.s32 0, %v1344
      %v1346 = vrot.slane %v1342, %v1345
      %v1347 = vmul.f32 %v1340, %v1346
      %v1348 = vmul.f32 %v1341, %v1346
      %v1349 = vadd.f32 %v1338, %v1347
      %v1350 = vadd.f32 %v1339, %v1348
      %v1351 = vld [vmem:[#allocation2 + $0x6c] sm:$0xff]
      %v1352 = vld [vmem:[#allocation2 + $0x74] sm:$0xff]
      %v1353 = vld [vmem:[%s896] sm:$0x1]
      %v1354 = vlaneseq
      %v1355 = vshrl.u32 %v1354, 7
      %v1356 = vsub.s32 0, %v1355
      %v1357 = vrot.slane %v1353, %v1356
      %v1358 = vmul.f32 %v1351, %v1357
      %v1359 = vmul.f32 %v1352, %v1357
      %v1360 = vadd.f32 %v1349, %v1358
      %v1361 = vadd.f32 %v1350, %v1359
      %v1362 = vld [vmem:[#allocation2 + $0x6d] sm:$0xff]
      %v1363 = vld [vmem:[#allocation2 + $0x75] sm:$0xff]
      %v1364 = vld [vmem:[%s896 + $0x1] sm:$0x1]
      %v1365 = vlaneseq
      %v1366 = vshrl.u32 %v1365, 7
      %v1367 = vsub.s32 0, %v1366
      %v1368 = vrot.slane %v1364, %v1367
      %v1369 = vmul.f32 %v1362, %v1368
      %v1370 = vmul.f32 %v1363, %v1368
      %v1371 = vadd.f32 %v1360, %v1369
      %v1372 = vadd.f32 %v1361, %v1370
      %v1373 = vld [vmem:[#allocation2 + $0x6e] sm:$0xff]
      %v1374 = vld [vmem:[#allocation2 + $0x76] sm:$0xff]
      %v1375 = vld [vmem:[%s896 + $0x2] sm:$0x1]
      %v1376 = vlaneseq
      %v1377 = vshrl.u32 %v1376, 7
      %v1378 = vsub.s32 0, %v1377
      %v1379 = vrot.slane %v1375, %v1378
      %v1380 = vmul.f32 %v1373, %v1379
      %v1381 = vmul.f32 %v1374, %v1379
      %v1382 = vadd.f32 %v1371, %v1380
      %v1383 = vadd.f32 %v1372, %v1381
      %v1384 = vld [vmem:[%s5] sm:$0x1]
      %v1386 = vlaneseq
      %v1387 = vshrl.u32 %v1386, 7
      %v1388 = vsub.s32 0, %v1387
      %v1389 = vrot.slane %v1384, %v1388
      %v1391 = vadd.f32 %v1382, %v1389
      %v1392 = vadd.f32 %v1383, %v1389
      %v1393 = vmax.f32 %v1391, 0.0
      %v1394 = vmax.f32 %v1392, 0.0
      %v1395 = vmin.f32 %v1393, 6.0
      %v1396 = vmin.f32 %v1394, 6.0
      %1397 = vst.msk [vmem:[#allocation3 + $0x40] sm:$0xff] %vm803, %v1395
      %1398 = vst.msk [vmem:[#allocation3 + $0x48] sm:$0xff] %vm803, %v1396
      %v1399 = vld [vmem:[#allocation2 + $0x5a] sm:$0xff]
      %v1400 = vld [vmem:[#allocation2 + $0x62] sm:$0xff]
      %v1401 = vld [vmem:[%s4] sm:$0x1]
      %v1402 = vlaneseq
      %v1403 = vshrl.u32 %v1402, 7
      %v1404 = vsub.s32 0, %v1403
      %v1405 = vrot.slane %v1401, %v1404
      %v1406 = vmul.f32 %v1399, %v1405
      %v1407 = vmul.f32 %v1400, %v1405
      %v1408 = vadd.f32 %v1406, 0.0
      %v1409 = vadd.f32 %v1407, 0.0
      %v1410 = vld [vmem:[#allocation2 + $0x5b] sm:$0xff]
      %v1411 = vld [vmem:[#allocation2 + $0x63] sm:$0xff]
      %v1412 = vld [vmem:[%s4 + $0x1] sm:$0x1]
      %v1413 = vlaneseq
      %v1414 = vshrl.u32 %v1413, 7
      %v1415 = vsub.s32 0, %v1414
      %v1416 = vrot.slane %v1412, %v1415
      %v1417 = vmul.f32 %v1410, %v1416
      %v1418 = vmul.f32 %v1411, %v1416
      %v1419 = vadd.f32 %v1408, %v1417
      %v1420 = vadd.f32 %v1409, %v1418
      %v1421 = vld [vmem:[#allocation2 + $0x5c] sm:$0xff]
      %v1422 = vld [vmem:[#allocation2 + $0x64] sm:$0xff]
      %v1423 = vld [vmem:[%s4 + $0x2] sm:$0x1]
      %v1424 = vlaneseq
      %v1425 = vshrl.u32 %v1424, 7
      %v1426 = vsub.s32 0, %v1425
      %v1427 = vrot.slane %v1423, %v1426
      %v1428 = vmul.f32 %v1421, %v1427
      %v1429 = vmul.f32 %v1422, %v1427
      %v1430 = vadd.f32 %v1419, %v1428
      %v1431 = vadd.f32 %v1420, %v1429
      %v1432 = vld [vmem:[#allocation2 + $0x6c] sm:$0xff]
      %v1433 = vld [vmem:[#allocation2 + $0x74] sm:$0xff]
      %v1434 = vld [vmem:[%s862] sm:$0x1]
      %v1435 = vlaneseq
      %v1436 = vshrl.u32 %v1435, 7
      %v1437 = vsub.s32 0, %v1436
      %v1438 = vrot.slane %v1434, %v1437
      %v1439 = vmul.f32 %v1432, %v1438
      %v1440 = vmul.f32 %v1433, %v1438
      %v1441 = vadd.f32 %v1430, %v1439
      %v1442 = vadd.f32 %v1431, %v1440
      %v1443 = vld [vmem:[#allocation2 + $0x6d] sm:$0xff]
      %v1444 = vld [vmem:[#allocation2 + $0x75] sm:$0xff]
      %v1445 = vld [vmem:[%s862 + $0x1] sm:$0x1]
      %v1446 = vlaneseq
      %v1447 = vshrl.u32 %v1446, 7
      %v1448 = vsub.s32 0, %v1447
      %v1449 = vrot.slane %v1445, %v1448
      %v1450 = vmul.f32 %v1443, %v1449
      %v1451 = vmul.f32 %v1444, %v1449
      %v1452 = vadd.f32 %v1441, %v1450
      %v1453 = vadd.f32 %v1442, %v1451
      %v1454 = vld [vmem:[#allocation2 + $0x6e] sm:$0xff]
      %v1455 = vld [vmem:[#allocation2 + $0x76] sm:$0xff]
      %v1456 = vld [vmem:[%s862 + $0x2] sm:$0x1]
      %v1457 = vlaneseq
      %v1458 = vshrl.u32 %v1457, 7
      %v1459 = vsub.s32 0, %v1458
      %v1460 = vrot.slane %v1456, %v1459
      %v1461 = vmul.f32 %v1454, %v1460
      %v1462 = vmul.f32 %v1455, %v1460
      %v1463 = vadd.f32 %v1452, %v1461
      %v1464 = vadd.f32 %v1453, %v1462
      %v1465 = vld [vmem:[#allocation2 + $0x7e] sm:$0xff]
      %v1466 = vld [vmem:[#allocation2 + $0x86] sm:$0xff]
      %v1467 = vld [vmem:[%s896] sm:$0x1]
      %v1468 = vlaneseq
      %v1469 = vshrl.u32 %v1468, 7
      %v1470 = vsub.s32 0, %v1469
      %v1471 = vrot.slane %v1467, %v1470
      %v1472 = vmul.f32 %v1465, %v1471
      %v1473 = vmul.f32 %v1466, %v1471
      %v1474 = vadd.f32 %v1463, %v1472
      %v1475 = vadd.f32 %v1464, %v1473
      %v1476 = vld [vmem:[#allocation2 + $0x7f] sm:$0xff]
      %v1477 = vld [vmem:[#allocation2 + $0x87] sm:$0xff]
      %v1478 = vld [vmem:[%s896 + $0x1] sm:$0x1]
      %v1479 = vlaneseq
      %v1480 = vshrl.u32 %v1479, 7
      %v1481 = vsub.s32 0, %v1480
      %v1482 = vrot.slane %v1478, %v1481
      %v1483 = vmul.f32 %v1476, %v1482
      %v1484 = vmul.f32 %v1477, %v1482
      %v1485 = vadd.f32 %v1474, %v1483
      %v1486 = vadd.f32 %v1475, %v1484
      %v1487 = vld [vmem:[#allocation2 + $0x80] sm:$0xff]
      %v1488 = vld [vmem:[#allocation2 + $0x88] sm:$0xff]
      %v1489 = vld [vmem:[%s896 + $0x2] sm:$0x1]
      %v1490 = vlaneseq
      %v1491 = vshrl.u32 %v1490, 7
      %v1492 = vsub.s32 0, %v1491
      %v1493 = vrot.slane %v1489, %v1492
      %v1494 = vmul.f32 %v1487, %v1493
      %v1495 = vmul.f32 %v1488, %v1493
      %v1496 = vadd.f32 %v1485, %v1494
      %v1497 = vadd.f32 %v1486, %v1495
      %v1498 = vld [vmem:[%s5] sm:$0x1]
      %v1500 = vlaneseq
      %v1501 = vshrl.u32 %v1500, 7
      %v1502 = vsub.s32 0, %v1501
      %v1503 = vrot.slane %v1498, %v1502
      %v1505 = vadd.f32 %v1496, %v1503
      %v1506 = vadd.f32 %v1497, %v1503
      %v1507 = vmax.f32 %v1505, 0.0
      %v1508 = vmax.f32 %v1506, 0.0
      %v1509 = vmin.f32 %v1507, 6.0
      %v1510 = vmin.f32 %v1508, 6.0
      %1511 = vst.msk [vmem:[#allocation3 + $0x50] sm:$0xff] %vm803, %v1509
      %1512 = vst.msk [vmem:[#allocation3 + $0x58] sm:$0xff] %vm803, %v1510
      %v1513 = vld [vmem:[#allocation2 + $0x6c] sm:$0xff]
      %v1514 = vld [vmem:[#allocation2 + $0x74] sm:$0xff]
      %v1515 = vld [vmem:[%s4] sm:$0x1]
      %v1516 = vlaneseq
      %v1517 = vshrl.u32 %v1516, 7
      %v1518 = vsub.s32 0, %v1517
      %v1519 = vrot.slane %v1515, %v1518
      %v1520 = vmul.f32 %v1513, %v1519
      %v1521 = vmul.f32 %v1514, %v1519
      %v1522 = vadd.f32 %v1520, 0.0
      %v1523 = vadd.f32 %v1521, 0.0
      %v1524 = vld [vmem:[#allocation2 + $0x6d] sm:$0xff]
      %v1525 = vld [vmem:[#allocation2 + $0x75] sm:$0xff]
      %v1526 = vld [vmem:[%s4 + $0x1] sm:$0x1]
      %v1527 = vlaneseq
      %v1528 = vshrl.u32 %v1527, 7
      %v1529 = vsub.s32 0, %v1528
      %v1530 = vrot.slane %v1526, %v1529
      %v1531 = vmul.f32 %v1524, %v1530
      %v1532 = vmul.f32 %v1525, %v1530
      %v1533 = vadd.f32 %v1522, %v1531
      %v1534 = vadd.f32 %v1523, %v1532
      %v1535 = vld [vmem:[#allocation2 + $0x6e] sm:$0xff]
      %v1536 = vld [vmem:[#allocation2 + $0x76] sm:$0xff]
      %v1537 = vld [vmem:[%s4 + $0x2] sm:$0x1]
      %v1538 = vlaneseq
      %v1539 = vshrl.u32 %v1538, 7
      %v1540 = vsub.s32 0, %v1539
      %v1541 = vrot.slane %v1537, %v1540
      %v1542 = vmul.f32 %v1535, %v1541
      %v1543 = vmul.f32 %v1536, %v1541
      %v1544 = vadd.f32 %v1533, %v1542
      %v1545 = vadd.f32 %v1534, %v1543
      %v1546 = vld [vmem:[#allocation2 + $0x7e] sm:$0xff]
      %v1547 = vld [vmem:[#allocation2 + $0x86] sm:$0xff]
      %v1548 = vld [vmem:[%s862] sm:$0x1]
      %v1549 = vlaneseq
      %v1550 = vshrl.u32 %v1549, 7
      %v1551 = vsub.s32 0, %v1550
      %v1552 = vrot.slane %v1548, %v1551
      %v1553 = vmul.f32 %v1546, %v1552
      %v1554 = vmul.f32 %v1547, %v1552
      %v1555 = vadd.f32 %v1544, %v1553
      %v1556 = vadd.f32 %v1545, %v1554
      %v1557 = vld [vmem:[#allocation2 + $0x7f] sm:$0xff]
      %v1558 = vld [vmem:[#allocation2 + $0x87] sm:$0xff]
      %v1559 = vld [vmem:[%s862 + $0x1] sm:$0x1]
      %v1560 = vlaneseq
      %v1561 = vshrl.u32 %v1560, 7
      %v1562 = vsub.s32 0, %v1561
      %v1563 = vrot.slane %v1559, %v1562
      %v1564 = vmul.f32 %v1557, %v1563
      %v1565 = vmul.f32 %v1558, %v1563
      %v1566 = vadd.f32 %v1555, %v1564
      %v1567 = vadd.f32 %v1556, %v1565
      %v1568 = vld [vmem:[#allocation2 + $0x80] sm:$0xff]
      %v1569 = vld [vmem:[#allocation2 + $0x88] sm:$0xff]
      %v1570 = vld [vmem:[%s862 + $0x2] sm:$0x1]
      %v1571 = vlaneseq
      %v1572 = vshrl.u32 %v1571, 7
      %v1573 = vsub.s32 0, %v1572
      %v1574 = vrot.slane %v1570, %v1573
      %v1575 = vmul.f32 %v1568, %v1574
      %v1576 = vmul.f32 %v1569, %v1574
      %v1577 = vadd.f32 %v1566, %v1575
      %v1578 = vadd.f32 %v1567, %v1576
      %v1579 = vld [vmem:[#allocation2 + $0x90] sm:$0xff]
      %v1580 = vld [vmem:[#allocation2 + $0x98] sm:$0xff]
      %v1581 = vld [vmem:[%s896] sm:$0x1]
      %v1582 = vlaneseq
      %v1583 = vshrl.u32 %v1582, 7
      %v1584 = vsub.s32 0, %v1583
      %v1585 = vrot.slane %v1581, %v1584
      %v1586 = vmul.f32 %v1579, %v1585
      %v1587 = vmul.f32 %v1580, %v1585
      %v1588 = vadd.f32 %v1577, %v1586
      %v1589 = vadd.f32 %v1578, %v1587
      %v1590 = vld [vmem:[#allocation2 + $0x91] sm:$0xff]
      %v1591 = vld [vmem:[#allocation2 + $0x99] sm:$0xff]
      %v1592 = vld [vmem:[%s896 + $0x1] sm:$0x1]
      %v1593 = vlaneseq
      %v1594 = vshrl.u32 %v1593, 7
      %v1595 = vsub.s32 0, %v1594
      %v1596 = vrot.slane %v1592, %v1595
      %v1597 = vmul.f32 %v1590, %v1596
      %v1598 = vmul.f32 %v1591, %v1596
      %v1599 = vadd.f32 %v1588, %v1597
      %v1600 = vadd.f32 %v1589, %v1598
      %v1601 = vld [vmem:[#allocation2 + $0x92] sm:$0xff]
      %v1602 = vld [vmem:[#allocation2 + $0x9a] sm:$0xff]
      %v1603 = vld [vmem:[%s896 + $0x2] sm:$0x1]
      %v1604 = vlaneseq
      %v1605 = vshrl.u32 %v1604, 7
      %v1606 = vsub.s32 0, %v1605
      %v1607 = vrot.slane %v1603, %v1606
      %v1608 = vmul.f32 %v1601, %v1607
      %v1609 = vmul.f32 %v1602, %v1607
      %v1610 = vadd.f32 %v1599, %v1608
      %v1611 = vadd.f32 %v1600, %v1609
      %v1612 = vld [vmem:[%s5] sm:$0x1]
      %v1614 = vlaneseq
      %v1615 = vshrl.u32 %v1614, 7
      %v1616 = vsub.s32 0, %v1615
      %v1617 = vrot.slane %v1612, %v1616
      %v1619 = vadd.f32 %v1610, %v1617
      %v1620 = vadd.f32 %v1611, %v1617
      %v1621 = vmax.f32 %v1619, 0.0
      %v1622 = vmax.f32 %v1620, 0.0
      %v1623 = vmin.f32 %v1621, 6.0
      %v1624 = vmin.f32 %v1622, 6.0
      %1625 = vst.msk [vmem:[#allocation3 + $0x60] sm:$0xff] %vm803, %v1623
      %1626 = vst.msk [vmem:[#allocation3 + $0x68] sm:$0xff] %vm803, %v1624
      %v1627 = vld [vmem:[#allocation2 + $0x7e] sm:$0xff]
      %v1628 = vld [vmem:[#allocation2 + $0x86] sm:$0xff]
      %v1629 = vld [vmem:[%s4] sm:$0x1]
      %v1630 = vlaneseq
      %v1631 = vshrl.u32 %v1630, 7
      %v1632 = vsub.s32 0, %v1631
      %v1633 = vrot.slane %v1629, %v1632
      %v1634 = vmul.f32 %v1627, %v1633
      %v1635 = vmul.f32 %v1628, %v1633
      %v1636 = vadd.f32 %v1634, 0.0
      %v1637 = vadd.f32 %v1635, 0.0
      %v1638 = vld [vmem:[#allocation2 + $0x7f] sm:$0xff]
      %v1639 = vld [vmem:[#allocation2 + $0x87] sm:$0xff]
      %v1640 = vld [vmem:[%s4 + $0x1] sm:$0x1]
      %v1641 = vlaneseq
      %v1642 = vshrl.u32 %v1641, 7
      %v1643 = vsub.s32 0, %v1642
      %v1644 = vrot.slane %v1640, %v1643
      %v1645 = vmul.f32 %v1638, %v1644
      %v1646 = vmul.f32 %v1639, %v1644
      %v1647 = vadd.f32 %v1636, %v1645
      %v1648 = vadd.f32 %v1637, %v1646
      %v1649 = vld [vmem:[#allocation2 + $0x80] sm:$0xff]
      %v1650 = vld [vmem:[#allocation2 + $0x88] sm:$0xff]
      %v1651 = vld [vmem:[%s4 + $0x2] sm:$0x1]
      %v1652 = vlaneseq
      %v1653 = vshrl.u32 %v1652, 7
      %v1654 = vsub.s32 0, %v1653
      %v1655 = vrot.slane %v1651, %v1654
      %v1656 = vmul.f32 %v1649, %v1655
      %v1657 = vmul.f32 %v1650, %v1655
      %v1658 = vadd.f32 %v1647, %v1656
      %v1659 = vadd.f32 %v1648, %v1657
      %v1660 = vld [vmem:[#allocation2 + $0x90] sm:$0xff]
      %v1661 = vld [vmem:[#allocation2 + $0x98] sm:$0xff]
      %v1662 = vld [vmem:[%s862] sm:$0x1]
      %v1663 = vlaneseq
      %v1664 = vshrl.u32 %v1663, 7
      %v1665 = vsub.s32 0, %v1664
      %v1666 = vrot.slane %v1662, %v1665
      %v1667 = vmul.f32 %v1660, %v1666
      %v1668 = vmul.f32 %v1661, %v1666
      %v1669 = vadd.f32 %v1658, %v1667
      %v1670 = vadd.f32 %v1659, %v1668
      %v1671 = vld [vmem:[#allocation2 + $0x91] sm:$0xff]
      %v1672 = vld [vmem:[#allocation2 + $0x99] sm:$0xff]
      %v1673 = vld [vmem:[%s862 + $0x1] sm:$0x1]
      %v1674 = vlaneseq
      %v1675 = vshrl.u32 %v1674, 7
      %v1676 = vsub.s32 0, %v1675
      %v1677 = vrot.slane %v1673, %v1676
      %v1678 = vmul.f32 %v1671, %v1677
      %v1679 = vmul.f32 %v1672, %v1677
      %v1680 = vadd.f32 %v1669, %v1678
      %v1681 = vadd.f32 %v1670, %v1679
      %v1682 = vld [vmem:[#allocation2 + $0x92] sm:$0xff]
      %v1683 = vld [vmem:[#allocation2 + $0x9a] sm:$0xff]
      %v1684 = vld [vmem:[%s862 + $0x2] sm:$0x1]
      %v1685 = vlaneseq
      %v1686 = vshrl.u32 %v1685, 7
      %v1687 = vsub.s32 0, %v1686
      %v1688 = vrot.slane %v1684, %v1687
      %v1689 = vmul.f32 %v1682, %v1688
      %v1690 = vmul.f32 %v1683, %v1688
      %v1691 = vadd.f32 %v1680, %v1689
      %v1692 = vadd.f32 %v1681, %v1690
      %v1693 = vld [vmem:[#allocation2 + $0xa2] sm:$0xff]
      %v1694 = vld [vmem:[#allocation2 + $0xaa] sm:$0xff]
      %v1695 = vld [vmem:[%s896] sm:$0x1]
      %v1696 = vlaneseq
      %v1697 = vshrl.u32 %v1696, 7
      %v1698 = vsub.s32 0, %v1697
      %v1699 = vrot.slane %v1695, %v1698
      %v1700 = vmul.f32 %v1693, %v1699
      %v1701 = vmul.f32 %v1694, %v1699
      %v1702 = vadd.f32 %v1691, %v1700
      %v1703 = vadd.f32 %v1692, %v1701
      %v1704 = vld [vmem:[#allocation2 + $0xa3] sm:$0xff]
      %v1705 = vld [vmem:[#allocation2 + $0xab] sm:$0xff]
      %v1706 = vld [vmem:[%s896 + $0x1] sm:$0x1]
      %v1707 = vlaneseq
      %v1708 = vshrl.u32 %v1707, 7
      %v1709 = vsub.s32 0, %v1708
      %v1710 = vrot.slane %v1706, %v1709
      %v1711 = vmul.f32 %v1704, %v1710
      %v1712 = vmul.f32 %v1705, %v1710
      %v1713 = vadd.f32 %v1702, %v1711
      %v1714 = vadd.f32 %v1703, %v1712
      %v1715 = vld [vmem:[#allocation2 + $0xa4] sm:$0xff]
      %v1716 = vld [vmem:[#allocation2 + $0xac] sm:$0xff]
      %v1717 = vld [vmem:[%s896 + $0x2] sm:$0x1]
      %v1718 = vlaneseq
      %v1719 = vshrl.u32 %v1718, 7
      %v1720 = vsub.s32 0, %v1719
      %v1721 = vrot.slane %v1717, %v1720
      %v1722 = vmul.f32 %v1715, %v1721
      %v1723 = vmul.f32 %v1716, %v1721
      %v1724 = vadd.f32 %v1713, %v1722
      %v1725 = vadd.f32 %v1714, %v1723
      %v1726 = vld [vmem:[%s5] sm:$0x1]
      %v1728 = vlaneseq
      %v1729 = vshrl.u32 %v1728, 7
      %v1730 = vsub.s32 0, %v1729
      %v1731 = vrot.slane %v1726, %v1730
      %v1733 = vadd.f32 %v1724, %v1731
      %v1734 = vadd.f32 %v1725, %v1731
      %v1735 = vmax.f32 %v1733, 0.0
      %v1736 = vmax.f32 %v1734, 0.0
      %v1737 = vmin.f32 %v1735, 6.0
      %v1738 = vmin.f32 %v1736, 6.0
      %1739 = vst.msk [vmem:[#allocation3 + $0x70] sm:$0xff] %vm803, %v1737
      %1740 = vst.msk [vmem:[#allocation3 + $0x78] sm:$0xff] %vm803, %v1738
      %v1741 = vld [vmem:[#allocation3] sm:$0xff]
      %v1742 = vld [vmem:[#allocation3 + $0x8] sm:$0xff]
      %v1743 = vld [vmem:[#allocation3 + $0x10] sm:$0xff]
      %v1744 = vld [vmem:[#allocation3 + $0x18] sm:$0xff]
      %v1745 = vld [vmem:[#allocation3 + $0x20] sm:$0xff]
      %v1746 = vld [vmem:[#allocation3 + $0x28] sm:$0xff]
      %v1747 = vld [vmem:[#allocation3 + $0x30] sm:$0xff]
      %v1748 = vld [vmem:[#allocation3 + $0x38] sm:$0xff]
      %v1749 = vld [vmem:[#allocation3 + $0x40] sm:$0xff]
      %v1750 = vld [vmem:[#allocation3 + $0x48] sm:$0xff]
      %v1751 = vld [vmem:[#allocation3 + $0x50] sm:$0xff]
      %v1752 = vld [vmem:[#allocation3 + $0x58] sm:$0xff]
      %v1753 = vld [vmem:[#allocation3 + $0x60] sm:$0xff]
      %v1754 = vld [vmem:[#allocation3 + $0x68] sm:$0xff]
      %v1755 = vld [vmem:[#allocation3 + $0x70] sm:$0xff]
      %v1756 = vld [vmem:[#allocation3 + $0x78] sm:$0xff]
      %v1757 = vpack.c.bf16 %v1742, %v1741
      %v1758 = vpack.c.bf16 %v1744, %v1743
      %v1759 = vpack.c.bf16 %v1746, %v1745
      %v1760 = vpack.c.bf16 %v1748, %v1747
      %v1761 = vpack.c.bf16 %v1750, %v1749
      %v1762 = vpack.c.bf16 %v1752, %v1751
      %v1763 = vpack.c.bf16 %v1754, %v1753
      %v1764 = vpack.c.bf16 %v1756, %v1755
      %v1765 = vld [vmem:[%s6] sm:$0xf]
      %v1766 = vld [vmem:[%s6 + $0x4] sm:$0xf]
      %v1767 = vld [vmem:[%s6 + $0x8] sm:$0xf]
      %v1768 = vld [vmem:[%s7] sm:$0x1]
      %v1770 = vlaneseq
      %v1771 = vshrl.u32 %v1770, 7
      %v1772 = vsub.s32 0, %v1771
      %v1773 = vrot.slane %v1768, %v1772
      %v1778 = vunpack.c.l.b16 %v1765
      %v1779 = vunpack.c.l.b16 %v1766
      %v1780 = vunpack.c.l.b16 %v1767
      %v1781 = vpack.c.b16 %v1779, %v1778
      %v1782 = vpack.c.b16 %v1780, %v1780
      %v1785 = vsel %vm803, %v1757, 0
      %v1788 = vsel %vm803, %v1758, 0
      %v1791 = vsel %vm803, %v1759, 0
      %v1794 = vsel %vm803, %v1760, 0
      %v1797 = vsel %vm803, %v1761, 0
      %v1800 = vsel %vm803, %v1762, 0
      %v1803 = vsel %vm803, %v1763, 0
      %v1806 = vsel %vm803, %v1764, 0
      %vm1808 = vcmask 1043456
      %v1810 = vsel %vm1808, %v1782, 0
      %1812 = vmatprep.subr.bf16.mxu0 0
      %1813 = vmatpush1.bf16.msra.mxu0 0
      %1814 = vmatprep.subr.bf16.mxu0 0
      %1815 = vmatpush1.bf16.msra.mxu0 0
      %1816 = vmatprep.subr.bf16.mxu0 0
      %1817 = vmatpush1.bf16.msra.mxu0 0
      %1818 = vmatprep.subr.bf16.mxu0 0
      %1819 = vmatpush1.bf16.msra.mxu0 0
      %1820 = vmatprep.subr.bf16.mxu0 0
      %1821 = vmatpush1.bf16.msra.mxu0 0
      %1822 = vmatprep.subr.bf16.mxu0 0
      %1823 = vmatpush1.bf16.msra.mxu0 0
      %1824 = vmatprep.subr.bf16.mxu0 0
      %1825 = vmatpush1.bf16.msra.mxu0 %v1810
      %1826 = vmatprep.subr.bf16.mxu0 0
      %1827 = vmatpush1.bf16.msra.mxu0 %v1781
      %1828 = vmatprep.subr.bf16.mxu0 0
      %1829 = vmatpush2.bf16.msra.mxu0 0
      %1830 = vmatprep.subr.bf16.mxu0 0
      %1831 = vmatpush2.bf16.msra.mxu0 0
      %1832 = vmatprep.subr.bf16.mxu0 0
      %1833 = vmatpush2.bf16.msra.mxu0 0
      %1834 = vmatprep.subr.bf16.mxu0 0
      %1835 = vmatpush2.bf16.msra.mxu0 0
      %1836 = vmatprep.subr.bf16.mxu0 0
      %1837 = vmatpush2.bf16.msra.mxu0 0
      %1838 = vmatprep.subr.bf16.mxu0 0
      %1839 = vmatpush2.bf16.msra.mxu0 0
      %1840 = vmatprep.subr.bf16.mxu0 0
      %1841 = vmatpush2.bf16.msra.mxu0 0
      %1842 = vmatprep.subr.bf16.mxu0 0
      %1843 = vmatpush2.bf16.msra.mxu0 0
      %1844 = vmatprep.mubr.bf16.mxu0 0
      %1845 = vmatmul.mubr.bf16.gmra.mxu0 %v1785
      %v1846 = vpop.f32.mrf.mxu0
      %v1847 = vadd.f32 %v1773, %v1846
      %v1848 = vpop.f32.mrf.mxu0
      %v1849 = vpop.f32.mrf.mxu0
      %v1850 = vadd.f32 %v1773, %v1849
      %v1851 = vpop.f32.mrf.mxu0
      %1852 = vmatprep.mubr.bf16.mxu0 0
      %1853 = vmatmul.mubr.bf16.gmra.mxu0 %v1788
      %v1854 = vpop.f32.mrf.mxu0
      %v1855 = vadd.f32 %v1773, %v1854
      %v1856 = vpop.f32.mrf.mxu0
      %v1857 = vpop.f32.mrf.mxu0
      %v1858 = vadd.f32 %v1773, %v1857
      %v1859 = vpop.f32.mrf.mxu0
      %1860 = vmatprep.mubr.bf16.mxu0 0
      %1861 = vmatmul.mubr.bf16.gmra.mxu0 %v1791
      %v1862 = vpop.f32.mrf.mxu0
      %v1863 = vadd.f32 %v1773, %v1862
      %v1864 = vpop.f32.mrf.mxu0
      %v1865 = vpop.f32.mrf.mxu0
      %v1866 = vadd.f32 %v1773, %v1865
      %v1867 = vpop.f32.mrf.mxu0
      %1868 = vmatprep.mubr.bf16.mxu0 0
      %1869 = vmatmul.mubr.bf16.gmra.mxu0 %v1794
      %v1870 = vpop.f32.mrf.mxu0
      %v1871 = vadd.f32 %v1773, %v1870
      %v1872 = vpop.f32.mrf.mxu0
      %v1873 = vpop.f32.mrf.mxu0
      %v1874 = vadd.f32 %v1773, %v1873
      %v1875 = vpop.f32.mrf.mxu0
      %1876 = vmatprep.mubr.bf16.mxu0 0
      %1877 = vmatmul.mubr.bf16.gmra.mxu0 %v1797
      %v1878 = vpop.f32.mrf.mxu0
      %v1879 = vadd.f32 %v1773, %v1878
      %v1880 = vpop.f32.mrf.mxu0
      %v1881 = vpop.f32.mrf.mxu0
      %v1882 = vadd.f32 %v1773, %v1881
      %v1883 = vpop.f32.mrf.mxu0
      %1884 = vmatprep.mubr.bf16.mxu0 0
      %1885 = vmatmul.mubr.bf16.gmra.mxu0 %v1800
      %v1886 = vpop.f32.mrf.mxu0
      %v1887 = vadd.f32 %v1773, %v1886
      %v1888 = vpop.f32.mrf.mxu0
      %v1889 = vpop.f32.mrf.mxu0
      %v1890 = vadd.f32 %v1773, %v1889
      %v1891 = vpop.f32.mrf.mxu0
      %1892 = vmatprep.mubr.bf16.mxu0 0
      %1893 = vmatmul.mubr.bf16.gmra.mxu0 %v1803
      %v1894 = vpop.f32.mrf.mxu0
      %v1895 = vadd.f32 %v1773, %v1894
      %v1896 = vpop.f32.mrf.mxu0
      %v1897 = vpop.f32.mrf.mxu0
      %v1898 = vadd.f32 %v1773, %v1897
      %v1899 = vpop.f32.mrf.mxu0
      %1900 = vmatprep.mubr.bf16.mxu0 0
      %1901 = vmatmul.mubr.bf16.gmra.mxu0 %v1806
      %v1902 = vpop.f32.mrf.mxu0
      %v1903 = vadd.f32 %v1773, %v1902
      %v1904 = vpop.f32.mrf.mxu0
      %v1905 = vpop.f32.mrf.mxu0
      %v1906 = vadd.f32 %v1773, %v1905
      %v1907 = vpop.f32.mrf.mxu0
      %1908 = vdwg.mxu0
      %v1909 = vunpack.c.l.bf16 %v339
      %v1910 = vunpack.c.l.bf16 %v340
      %v1911 = vunpack.c.l.bf16 %v341
      %vm1915 = vcmask 1044480
      %v1916 = vrot.slane %v1909, 3
      %v1917 = vrot.slane %v1910, 3
      %v1918 = vsel %vm1915, %v1916, %v1917
      %v1919 = vrot.slane %v1911, 3
      %v1920 = vsel %vm1915, %v1917, %v1919
      %v1923 = vadd.f32 %v1847, %v1918
      %v1924 = vadd.f32 %v1850, %v1920
      %1925 = vst.msk [vmem:[%s329] sm:$0xff] %vm426, %v1923
      %1926 = vst.msk [vmem:[%s329 + $0x8] sm:$0xff] %vm426, %v1924
      %v1927 = vunpack.c.l.bf16 %v342
      %v1928 = vunpack.c.l.bf16 %v343
      %vm1931 = vcmask 1042432
      %v1932 = vrot.slane %v1911, 5
      %v1933 = vrot.slane %v1927, 5
      %v1934 = vsel %vm1931, %v1932, %v1933
      %v1935 = vrot.slane %v1928, 5
      %v1936 = vsel %vm1931, %v1933, %v1935
      %v1939 = vadd.f32 %v1855, %v1934
      %v1940 = vadd.f32 %v1858, %v1936
      %s1941 = scalar_lea.vmem %s329, 16
      %1942 = vst.msk [vmem:[%s1941] sm:$0xff] %vm426, %v1939
      %1943 = vst.msk [vmem:[%s1941 + $0x8] sm:$0xff] %vm426, %v1940
      %v1944 = vunpack.c.l.bf16 %v344
      %v1945 = vunpack.c.l.bf16 %v345
      %vm1948 = vcmask 1040384
      %v1949 = vrot.slane %v1928, 7
      %v1950 = vrot.slane %v1944, 7
      %v1951 = vsel %vm1948, %v1949, %v1950
      %v1952 = vrot.slane %v1945, 7
      %v1953 = vsel %vm1948, %v1950, %v1952
      %v1956 = vadd.f32 %v1863, %v1951
      %v1957 = vadd.f32 %v1866, %v1953
      %s1958 = scalar_lea.vmem %s329, 32
      %1959 = vst.msk [vmem:[%s1958] sm:$0xff] %vm426, %v1956
      %1960 = vst.msk [vmem:[%s1958 + $0x8] sm:$0xff] %vm426, %v1957
      %v1961 = vunpack.c.l.bf16 %v346
      %v1962 = vunpack.c.l.bf16 %v347
      %v1963 = vunpack.c.l.bf16 %v348
      %vm1967 = vcmask 1046528
      %v1968 = vrot.slane %v1961, 1
      %v1969 = vrot.slane %v1962, 1
      %v1970 = vsel %vm1967, %v1968, %v1969
      %v1971 = vrot.slane %v1963, 1
      %v1972 = vsel %vm1967, %v1969, %v1971
      %v1975 = vadd.f32 %v1871, %v1970
      %v1976 = vadd.f32 %v1874, %v1972
      %s1977 = scalar_lea.vmem %s329, 48
      %1978 = vst.msk [vmem:[%s1977] sm:$0xff] %vm426, %v1975
      %1979 = vst.msk [vmem:[%s1977 + $0x8] sm:$0xff] %vm426, %v1976
      %v1980 = vunpack.c.l.bf16 %v349
      %v1981 = vunpack.c.l.bf16 %v350
      %v1984 = vrot.slane %v1963, 3
      %v1985 = vrot.slane %v1980, 3
      %v1986 = vsel %vm1915, %v1984, %v1985
      %v1987 = vrot.slane %v1981, 3
      %v1988 = vsel %vm1915, %v1985, %v1987
      %v1991 = vadd.f32 %v1879, %v1986
      %v1992 = vadd.f32 %v1882, %v1988
      %s1993 = scalar_lea.vmem %s329, 64
      %1994 = vst.msk [vmem:[%s1993] sm:$0xff] %vm426, %v1991
      %1995 = vst.msk [vmem:[%s1993 + $0x8] sm:$0xff] %vm426, %v1992
      %v1996 = vunpack.c.l.bf16 %v351
      %v1997 = vunpack.c.l.bf16 %v352
      %v2000 = vrot.slane %v1981, 5
      %v2001 = vrot.slane %v1996, 5
      %v2002 = vsel %vm1931, %v2000, %v2001
      %v2003 = vrot.slane %v1997, 5
      %v2004 = vsel %vm1931, %v2001, %v2003
      %v2007 = vadd.f32 %v1887, %v2002
      %v2008 = vadd.f32 %v1890, %v2004
      %s2009 = scalar_lea.vmem %s329, 80
      %2010 = vst.msk [vmem:[%s2009] sm:$0xff] %vm426, %v2007
      %2011 = vst.msk [vmem:[%s2009 + $0x8] sm:$0xff] %vm426, %v2008
      %v2012 = vunpack.c.l.bf16 %v353
      %v2013 = vunpack.c.l.bf16 %v354
      %v2016 = vrot.slane %v1997, 7
      %v2017 = vrot.slane %v2012, 7
      %v2018 = vsel %vm1948, %v2016, %v2017
      %v2019 = vrot.slane %v2013, 7
      %v2020 = vsel %vm1948, %v2017, %v2019
      %v2023 = vadd.f32 %v1895, %v2018
      %v2024 = vadd.f32 %v1898, %v2020
      %s2025 = scalar_lea.vmem %s329, 96
      %2026 = vst.msk [vmem:[%s2025] sm:$0xff] %vm426, %v2023
      %2027 = vst.msk [vmem:[%s2025 + $0x8] sm:$0xff] %vm426, %v2024
      %v2028 = vunpack.c.l.bf16 %v355
      %v2029 = vunpack.c.l.bf16 %v356
      %v2030 = vunpack.c.l.bf16 %v357
      %v2034 = vrot.slane %v2028, 1
      %v2035 = vrot.slane %v2029, 1
      %v2036 = vsel %vm1967, %v2034, %v2035
      %v2037 = vrot.slane %v2030, 1
      %v2038 = vsel %vm1967, %v2035, %v2037
      %v2041 = vadd.f32 %v1903, %v2036
      %v2042 = vadd.f32 %v1906, %v2038
      %s2043 = scalar_lea.vmem %s329, 112
      %2044 = vst.msk [vmem:[%s2043] sm:$0xff] %vm426, %v2041
      %2045 = vst.msk [vmem:[%s2043 + $0x8] sm:$0xff] %vm426, %v2042
      %s2046 = smul.u32 8, %s24
      %p2047 = scmp.lt.s32.totalorder %s23, 1
      %s2048 = scalar_select %p2047, %s23, 1
      %p2049 = scmp.lt.s32.totalorder %s2046, 15
      %s2050 = scalar_select %p2049, %s2046, 15
      %s2051 = smul.addr %s2050, 2
      %s2052 = smul.addr %s2048, 32
      %s2053 = sadd.s32 %s2051, %s2052
      %s2054 = smul.addr %s2053, 8
      %s2055 = scalar_lea.vmem %s8, %s2054
      // Predicated region
      $region53: #{tpu_custom_call.1} parent=51 // pred_check
        %p2056 = pneg %p224
      $region54: #{tpu_custom_call.1} parent=51 // pred_check_branch
        %2058 = sbr.rel (%p2056) target = $region56
      $region55: #{tpu_custom_call.1} parent=51 // pred_region
        %s2059 = smul.u32 8, %s24
      $region56: #{tpu_custom_call.1} parent=51 // pred_fallthru
        _
    $region52: #{tpu_custom_call.1} parent=5 // pred_fallthru
      _
    %p2060 = scmp.le.s32.totalorder 2, %s14
    // Predicated region
    $region57: #{tpu_custom_call.1} parent=5 // pred_check
      %p2061 = pneg %p2060
    $region58: #{tpu_custom_call.1} parent=5 // pred_check_branch
      %2063 = sbr.rel (%p2061) target = $region60
    $region59: #{tpu_custom_call.1} parent=5 // pred_region
      %s2064 = ssub.s32 %s14, 2
      // Predicated region
      $region61: #{tpu_custom_call.1} parent=59 // pred_check
        %p2065 = pneg %p230
      $region62: #{tpu_custom_call.1} parent=59 // pred_check_branch
        %2067 = sbr.rel (%p2065) target = $region64
      $region63: #{tpu_custom_call.1} parent=59 // pred_region
        %s2068 = smul.u32 8, %s26
        %p2069 = scmp.lt.s32.totalorder %s25, 1
        %s2070 = scalar_select %p2069, %s25, 1
        %p2071 = scmp.lt.s32.totalorder %s2068, 15
        %s2072 = scalar_select %p2071, %s2068, 15
        %s2073 = smul.addr %s2072, 2
        %s2074 = smul.addr %s2070, 32
        %s2075 = sadd.s32 %s2073, %s2074
        %s2076 = smul.addr %s2075, 8
        %s2077 = scalar_lea.vmem %s8, %s2076
      $region64: #{tpu_custom_call.1} parent=59 // pred_fallthru
        _
    $region60: #{tpu_custom_call.1} parent=5 // pred_fallthru
      _
  $region6: #{tpu_custom_call.1} parent=0 // loop_footer
    %s18 = sadd.s32 1, %s14
  $region7: #{tpu_custom_call.1} parent=0 // loop_footer_branch
    %13 = sbr.rel target = $region3
  $region8: #{tpu_custom_call.1} parent=0 // loop_exit
    _

</llo_original>
